<compile_context>
chip_gen: v5e
topology: v5e:2x2
jax: 0.10.0
libtpu: 0.0.40
codegen_flags: <defaults>
</compile_context>

<pallas_src>
import jax
import jax.numpy as jnp
from jax.experimental import pallas as pl
from jax.experimental.pallas import tpu as pltpu

_HIGHEST = jax.lax.Precision.HIGHEST
_BN_EPS = 1e-5


def _round_up(x, m):
    return ((x + m - 1) // m) * m


# --------------------------------------------------------------------------
# Kernel: fused condition_layer_Hr / condition_layer_Hb / decoder for both
# the `label` and `nm_label` paths.
# --------------------------------------------------------------------------
def _decoder_kernel(latent_ref, label_ref, nm_label_ref,
                    w_hr_ref, b_hr_ref, w_hb_ref, b_hb_ref,
                    w1_ref, b1_ref, w2_ref, b2_ref, w3_ref, b3_ref,
                    w4_ref, b4_ref, w5_ref, b5_ref,
                    m_out_ref, nm_out_ref):
    f32 = jnp.float32
    latent = latent_ref[...].astype(f32)

    # Load weights once per grid step; reused by both (m, nm) paths.
    w_hr, b_hr = w_hr_ref[...], b_hr_ref[...]
    w_hb, b_hb = w_hb_ref[...], b_hb_ref[...]
    w1, b1 = w1_ref[...], b1_ref[...]
    w2, b2 = w2_ref[...], b2_ref[...]
    w3, b3 = w3_ref[...], b3_ref[...]
    w4, b4 = w4_ref[...], b4_ref[...]
    w5, b5 = w5_ref[...], b5_ref[...]

    def relu(x):
        return jnp.maximum(x, 0.0)

    def sigmoid(x):
        return 1.0 / (1.0 + jnp.exp(-x))

    def matmul(x, w):
        return jnp.dot(x, w, preferred_element_type=f32, precision=_HIGHEST)

    def condition(label):
        # condition_layer_Hr: Linear(+folded BN) -> ReLU -> Sigmoid
        hr = sigmoid(relu(matmul(label, w_hr) + b_hr))
        # condition_layer_Hb: Linear(+folded BN) -> ReLU
        hb = relu(matmul(label, w_hb) + b_hb)
        return latent * hr + hb

    def decoder(x):
        h = relu(matmul(x, w1) + b1)
        h = relu(matmul(h, w2) + b2)
        h = relu(matmul(h, w3) + b3)
        h = relu(matmul(h, w4) + b4)
        return matmul(h, w5) + b5        # final Linear: no BN / activation

    m_out_ref[...] = decoder(condition(label_ref[...].astype(f32))).astype(m_out_ref.dtype)
    nm_out_ref[...] = decoder(condition(nm_label_ref[...].astype(f32))).astype(nm_out_ref.dtype)


# --------------------------------------------------------------------------
# Host wrapper
# --------------------------------------------------------------------------
def decoder_forward(latent, label, nm_label, folded_params, *, tile_rows=512):
    """Forward pass equivalent to Decoder.forward(latent, label, nm_label)."""
    (w_hr, b_hr), (w_hb, b_hb), dec_layers = folded_params

    B, latent_dim = latent.shape
    class_num = label.shape[1]
    out_dim = dec_layers[-1][0].shape[1]

    # Batch tile: as large as requested, rounded to sublane multiples; pad the
    # batch (ragged final batch supported — no divisibility assert).
    tb = min(_round_up(tile_rows, 8), _round_up(B, 8))
    Bp = _round_up(B, tb)
    if Bp != B:
        pad = ((0, Bp - B), (0, 0))
        latent = jnp.pad(latent, pad)
        label = jnp.pad(label, pad)
        nm_label = jnp.pad(nm_label, pad)

    grid = (Bp // tb,)

    def row_spec(d):
        return pl.BlockSpec((tb, d), lambda i: (i, 0))

    def full_spec(arr):
        return pl.BlockSpec(arr.shape, lambda i: (0, 0))

    weight_args = [w_hr, b_hr, w_hb, b_hb]
    for w, b in dec_layers:
        weight_args += [w, b]

    in_specs = ([row_spec(latent_dim), row_spec(class_num), row_spec(class_num)]
                + [full_spec(a) for a in weight_args])

    out_shape = (jax.ShapeDtypeStruct((Bp, out_dim), latent.dtype),
                 jax.ShapeDtypeStruct((Bp, out_dim), latent.dtype))
    out_specs = (row_spec(out_dim), row_spec(out_dim))

    m_out, nm_out = pl.pallas_call(
        _decoder_kernel,
        out_shape=out_shape,
        grid_spec=pltpu.PrefetchScalarGridSpec(
            num_scalar_prefetch=0,
            grid=grid,
            in_specs=in_specs,
            out_specs=out_specs,
        ),
        compiler_params=pltpu.CompilerParams(
            dimension_semantics=("parallel",),   # batch axis -> megacore-shardable
        ),
    )(latent, label, nm_label, *weight_args)

    return m_out[:B], nm_out[:B]


# --------------------------------------------------------------------------
# Parameter construction (deterministic) + BN folding + pure-JAX reference
# --------------------------------------------------------------------------
def _make_linear_bn(key, fan_in, fan_out, with_bn=True):
    kw, kb, kg, kbeta, km, kv = jax.random.split(key, 6)
    w = jax.random.normal(kw, (fan_in, fan_out), jnp.float32) / jnp.sqrt(float(fan_in))
    b = 0.1 * jax.random.normal(kb, (fan_out,), jnp.float32)
    if not with_bn:
        return dict(w=w, b=b, bn=None)
    gamma = 1.0 + 0.1 * jax.random.normal(kg, (fan_out,), jnp.float32)
    beta = 0.1 * jax.random.normal(kbeta, (fan_out,), jnp.float32)
    mean = 0.05 * jax.random.normal(km, (fan_out,), jnp.float32)
    var = 0.9 + 0.2 * jax.random.uniform(kv, (fan_out,), jnp.float32)
    return dict(w=w, b=b, bn=(gamma, beta, mean, var))


def _fold_bn(layer, eps=_BN_EPS):
    """Fold eval-mode BatchNorm1d into the preceding Linear: y = x @ W' + b'."""
    w, b = layer["w"], layer["b"]
    if layer["bn"] is None:
        return w, b.reshape(1, -1)
    gamma, beta, mean, var = layer["bn"]
    s = gamma / jnp.sqrt(var + eps)
    return w * s[None, :], ((b - mean) * s + beta).reshape(1, -1)


def _ref_forward(latent, label, nm_label, raw, eps=_BN_EPS):
    def lin_bn(x, layer):
        y = jnp.dot(x, layer["w"], precision=_HIGHEST) + layer["b"]
        if layer["bn"] is not None:
            g, beta, m, v = layer["bn"]
            y = (y - m) / jnp.sqrt(v + eps) * g + beta
        return y

    def condition(lab):
        hr = jax.nn.sigmoid(jax.nn.relu(lin_bn(lab, raw["hr"])))
        hb = jax.nn.relu(lin_bn(lab, raw["hb"]))
        return latent * hr + hb

    def decoder(x):
        for layer in raw["dec"][:-1]:
            x = jax.nn.relu(lin_bn(x, layer))
        return lin_bn(x, raw["dec"][-1])

    return decoder(condition(label)), decoder(condition(nm_label))


# --------------------------------------------------------------------------
if __name__ == "__main__":
    key = jax.random.PRNGKey(0)
    keys = jax.random.split(key, 10)

    # Small shapes consistent with the module:
    class_num = 8          # classNum
    paramF, paramM = 16, 8  # -> decoder output dim 128 (lane-dense)
    out_dim = paramF * paramM
    latent_dim = 16         # condition layers output 16, so latent is 16-d
    batch = 8

    raw_params = {
        "hr": _make_linear_bn(keys[0], class_num, 16),
        "hb": _make_linear_bn(keys[1], class_num, 16),
        "dec": [
            _make_linear_bn(keys[2], 16, 64),
            _make_linear_bn(keys[3], 64, 128),
            _make_linear_bn(keys[4], 128, 128),
            _make_linear_bn(keys[5], 128, 256),
            _make_linear_bn(keys[6], 256, out_dim, with_bn=False),
        ],
    }
    folded_params = (
        _fold_bn(raw_params["hr"]),
        _fold_bn(raw_params["hb"]),
        [_fold_bn(layer) for layer in raw_params["dec"]],
    )

    latent = jax.random.normal(keys[7], (batch, latent_dim), jnp.float32)
    label = jax.random.normal(keys[8], (batch, class_num), jnp.float32)
    nm_label = jax.random.normal(keys[9], (batch, class_num), jnp.float32)

    m_out, nm_out = decoder_forward(latent, label, nm_label, folded_params)
    jax.block_until_ready((m_out, nm_out))

    # Sanity check against a pure-JAX reference of the same forward pass.
    ref_m, ref_nm = _ref_forward(latent, label, nm_label, raw_params)
    assert m_out.shape == (batch, out_dim) and nm_out.shape == (batch, out_dim)
    assert jnp.allclose(m_out, ref_m, rtol=1e-3, atol=1e-3), "m_output mismatch"
    assert jnp.allclose(nm_out, ref_nm, rtol=1e-3, atol=1e-3), "nm_output mismatch"

    print("KERNEL_OK")
</pallas_src>

<mosaic_0001>
module attributes {stable_mosaic.version = 11 : i64} {
  func.func @_decoder_kernel(%arg0: i32, %arg1: memref<8x16xf32, #tpu.memory_space<vmem>>, %arg2: memref<8x8xf32, #tpu.memory_space<vmem>>, %arg3: memref<8x8xf32, #tpu.memory_space<vmem>>, %arg4: memref<8x16xf32, #tpu.memory_space<vmem>>, %arg5: memref<1x16xf32, #tpu.memory_space<vmem>>, %arg6: memref<8x16xf32, #tpu.memory_space<vmem>>, %arg7: memref<1x16xf32, #tpu.memory_space<vmem>>, %arg8: memref<16x64xf32, #tpu.memory_space<vmem>>, %arg9: memref<1x64xf32, #tpu.memory_space<vmem>>, %arg10: memref<64x128xf32, #tpu.memory_space<vmem>>, %arg11: memref<1x128xf32, #tpu.memory_space<vmem>>, %arg12: memref<128x128xf32, #tpu.memory_space<vmem>>, %arg13: memref<1x128xf32, #tpu.memory_space<vmem>>, %arg14: memref<128x256xf32, #tpu.memory_space<vmem>>, %arg15: memref<1x256xf32, #tpu.memory_space<vmem>>, %arg16: memref<256x128xf32, #tpu.memory_space<vmem>>, %arg17: memref<1x128xf32, #tpu.memory_space<vmem>>, %arg18: memref<8x128xf32, #tpu.memory_space<vmem>>, %arg19: memref<8x128xf32, #tpu.memory_space<vmem>>) attributes {dimension_semantics = [#tpu.dimension_semantics<parallel>], iteration_bounds = array<i64: 1>, scalar_prefetch = 0 : i64, scratch_operands = 0 : i64, tpu.core_type = #tpu.core_type<tc>, window_params = [{transform_indices = @transform_0, window_bounds = array<i64: 8, 16>}, {transform_indices = @transform_1, window_bounds = array<i64: 8, 8>}, {transform_indices = @transform_2, window_bounds = array<i64: 8, 8>}, {pipeline_mode = #tpu.pipeline_mode<synchronous>, transform_indices = @transform_3, window_bounds = array<i64: 8, 16>}, {pipeline_mode = #tpu.pipeline_mode<synchronous>, transform_indices = @transform_4, window_bounds = array<i64: 1, 16>}, {pipeline_mode = #tpu.pipeline_mode<synchronous>, transform_indices = @transform_5, window_bounds = array<i64: 8, 16>}, {pipeline_mode = #tpu.pipeline_mode<synchronous>, transform_indices = @transform_6, window_bounds = array<i64: 1, 16>}, {pipeline_mode = #tpu.pipeline_mode<synchronous>, transform_indices = @transform_7, window_bounds = array<i64: 16, 64>}, {pipeline_mode = #tpu.pipeline_mode<synchronous>, transform_indices = @transform_8, window_bounds = array<i64: 1, 64>}, {pipeline_mode = #tpu.pipeline_mode<synchronous>, transform_indices = @transform_9, window_bounds = array<i64: 64, 128>}, {pipeline_mode = #tpu.pipeline_mode<synchronous>, transform_indices = @transform_10, window_bounds = array<i64: 1, 128>}, {pipeline_mode = #tpu.pipeline_mode<synchronous>, transform_indices = @transform_11, window_bounds = array<i64: 128, 128>}, {pipeline_mode = #tpu.pipeline_mode<synchronous>, transform_indices = @transform_12, window_bounds = array<i64: 1, 128>}, {pipeline_mode = #tpu.pipeline_mode<synchronous>, transform_indices = @transform_13, window_bounds = array<i64: 128, 256>}, {pipeline_mode = #tpu.pipeline_mode<synchronous>, transform_indices = @transform_14, window_bounds = array<i64: 1, 256>}, {pipeline_mode = #tpu.pipeline_mode<synchronous>, transform_indices = @transform_15, window_bounds = array<i64: 256, 128>}, {pipeline_mode = #tpu.pipeline_mode<synchronous>, transform_indices = @transform_16, window_bounds = array<i64: 1, 128>}, {transform_indices = @transform_17, window_bounds = array<i64: 8, 128>}, {transform_indices = @transform_18, window_bounds = array<i64: 8, 128>}]} {
    %c0 = arith.constant 0 : index
    %c0_0 = arith.constant 0 : index
    %0 = vector.load %arg1[%c0, %c0_0] : memref<8x16xf32, #tpu.memory_space<vmem>>, vector<8x16xf32>
    %c0_1 = arith.constant 0 : index
    %c0_2 = arith.constant 0 : index
    %1 = vector.load %arg4[%c0_1, %c0_2] : memref<8x16xf32, #tpu.memory_space<vmem>>, vector<8x16xf32>
    %c0_3 = arith.constant 0 : index
    %c0_4 = arith.constant 0 : index
    %2 = vector.load %arg5[%c0_3, %c0_4] : memref<1x16xf32, #tpu.memory_space<vmem>>, vector<1x16xf32>
    %c0_5 = arith.constant 0 : index
    %c0_6 = arith.constant 0 : index
    %3 = vector.load %arg6[%c0_5, %c0_6] : memref<8x16xf32, #tpu.memory_space<vmem>>, vector<8x16xf32>
    %c0_7 = arith.constant 0 : index
    %c0_8 = arith.constant 0 : index
    %4 = vector.load %arg7[%c0_7, %c0_8] : memref<1x16xf32, #tpu.memory_space<vmem>>, vector<1x16xf32>
    %c0_9 = arith.constant 0 : index
    %c0_10 = arith.constant 0 : index
    %5 = vector.load %arg8[%c0_9, %c0_10] : memref<16x64xf32, #tpu.memory_space<vmem>>, vector<16x64xf32>
    %c0_11 = arith.constant 0 : index
    %c0_12 = arith.constant 0 : index
    %6 = vector.load %arg9[%c0_11, %c0_12] : memref<1x64xf32, #tpu.memory_space<vmem>>, vector<1x64xf32>
    %c0_13 = arith.constant 0 : index
    %c0_14 = arith.constant 0 : index
    %7 = vector.load %arg10[%c0_13, %c0_14] : memref<64x128xf32, #tpu.memory_space<vmem>>, vector<64x128xf32>
    %c0_15 = arith.constant 0 : index
    %c0_16 = arith.constant 0 : index
    %8 = vector.load %arg11[%c0_15, %c0_16] : memref<1x128xf32, #tpu.memory_space<vmem>>, vector<1x128xf32>
    %c0_17 = arith.constant 0 : index
    %c0_18 = arith.constant 0 : index
    %9 = vector.load %arg12[%c0_17, %c0_18] : memref<128x128xf32, #tpu.memory_space<vmem>>, vector<128x128xf32>
    %c0_19 = arith.constant 0 : index
    %c0_20 = arith.constant 0 : index
    %10 = vector.load %arg13[%c0_19, %c0_20] : memref<1x128xf32, #tpu.memory_space<vmem>>, vector<1x128xf32>
    %c0_21 = arith.constant 0 : index
    %c0_22 = arith.constant 0 : index
    %11 = vector.load %arg14[%c0_21, %c0_22] : memref<128x256xf32, #tpu.memory_space<vmem>>, vector<128x256xf32>
    %c0_23 = arith.constant 0 : index
    %c0_24 = arith.constant 0 : index
    %12 = vector.load %arg15[%c0_23, %c0_24] : memref<1x256xf32, #tpu.memory_space<vmem>>, vector<1x256xf32>
    %c0_25 = arith.constant 0 : index
    %c0_26 = arith.constant 0 : index
    %13 = vector.load %arg16[%c0_25, %c0_26] : memref<256x128xf32, #tpu.memory_space<vmem>>, vector<256x128xf32>
    %c0_27 = arith.constant 0 : index
    %c0_28 = arith.constant 0 : index
    %14 = vector.load %arg17[%c0_27, %c0_28] : memref<1x128xf32, #tpu.memory_space<vmem>>, vector<1x128xf32>
    %c0_29 = arith.constant 0 : index
    %c0_30 = arith.constant 0 : index
    %15 = vector.load %arg2[%c0_29, %c0_30] : memref<8x8xf32, #tpu.memory_space<vmem>>, vector<8x8xf32>
    %cst = arith.constant dense<0.000000e+00> : vector<8x16xf32>
    %16 = tpu.matmul %15, %1, %cst {dimension_numbers = #tpu.dot_dimension_numbers<[1], [0], [0], [1], [0, 0, 1, 1], [], []>, precision = #tpu.contract_precision<fp32>} : vector<8x8xf32>, vector<8x16xf32>, vector<8x16xf32> -> vector<8x16xf32>
    %17 = vector.broadcast %2 : vector<1x16xf32> to vector<8x16xf32>
    %18 = arith.addf %16, %17 : vector<8x16xf32>
    %cst_31 = arith.constant 0.000000e+00 : f32
    %19 = vector.broadcast %cst_31 : f32 to vector<8x16xf32>
    %20 = arith.maximumf %18, %19 : vector<8x16xf32>
    %cst_32 = arith.constant 0.000000e+00 : f32
    %21 = vector.broadcast %cst_32 : f32 to vector<8x16xf32>
    %22 = arith.subf %21, %20 : vector<8x16xf32>
    %23 = math.exp %22 : vector<8x16xf32>
    %cst_33 = arith.constant 1.000000e+00 : f32
    %24 = vector.broadcast %cst_33 : f32 to vector<8x16xf32>
    %25 = arith.addf %24, %23 : vector<8x16xf32>
    %cst_34 = arith.constant 1.000000e+00 : f32
    %26 = vector.broadcast %cst_34 : f32 to vector<8x16xf32>
    %27 = arith.divf %26, %25 : vector<8x16xf32>
    %cst_35 = arith.constant dense<0.000000e+00> : vector<8x16xf32>
    %28 = tpu.matmul %15, %3, %cst_35 {dimension_numbers = #tpu.dot_dimension_numbers<[1], [0], [0], [1], [0, 0, 1, 1], [], []>, precision = #tpu.contract_precision<fp32>} : vector<8x8xf32>, vector<8x16xf32>, vector<8x16xf32> -> vector<8x16xf32>
    %29 = vector.broadcast %4 : vector<1x16xf32> to vector<8x16xf32>
    %30 = arith.addf %28, %29 : vector<8x16xf32>
    %cst_36 = arith.constant 0.000000e+00 : f32
    %31 = vector.broadcast %cst_36 : f32 to vector<8x16xf32>
    %32 = arith.maximumf %30, %31 : vector<8x16xf32>
    %33 = arith.mulf %0, %27 : vector<8x16xf32>
    %34 = arith.addf %33, %32 : vector<8x16xf32>
    %cst_37 = arith.constant dense<0.000000e+00> : vector<8x64xf32>
    %35 = tpu.matmul %34, %5, %cst_37 {dimension_numbers = #tpu.dot_dimension_numbers<[1], [0], [0], [1], [0, 0, 1, 1], [], []>, precision = #tpu.contract_precision<fp32>} : vector<8x16xf32>, vector<16x64xf32>, vector<8x64xf32> -> vector<8x64xf32>
    %36 = vector.broadcast %6 : vector<1x64xf32> to vector<8x64xf32>
    %37 = arith.addf %35, %36 : vector<8x64xf32>
    %cst_38 = arith.constant 0.000000e+00 : f32
    %38 = vector.broadcast %cst_38 : f32 to vector<8x64xf32>
    %39 = arith.maximumf %37, %38 : vector<8x64xf32>
    %cst_39 = arith.constant dense<0.000000e+00> : vector<8x128xf32>
    %40 = tpu.matmul %39, %7, %cst_39 {dimension_numbers = #tpu.dot_dimension_numbers<[1], [0], [0], [1], [0, 0, 1, 1], [], []>, precision = #tpu.contract_precision<fp32>} : vector<8x64xf32>, vector<64x128xf32>, vector<8x128xf32> -> vector<8x128xf32>
    %41 = vector.broadcast %8 : vector<1x128xf32> to vector<8x128xf32>
    %42 = arith.addf %40, %41 : vector<8x128xf32>
    %cst_40 = arith.constant 0.000000e+00 : f32
    %43 = vector.broadcast %cst_40 : f32 to vector<8x128xf32>
    %44 = arith.maximumf %42, %43 : vector<8x128xf32>
    %cst_41 = arith.constant dense<0.000000e+00> : vector<8x128xf32>
    %45 = tpu.matmul %44, %9, %cst_41 {dimension_numbers = #tpu.dot_dimension_numbers<[1], [0], [0], [1], [0, 0, 1, 1], [], []>, precision = #tpu.contract_precision<fp32>} : vector<8x128xf32>, vector<128x128xf32>, vector<8x128xf32> -> vector<8x128xf32>
    %46 = vector.broadcast %10 : vector<1x128xf32> to vector<8x128xf32>
    %47 = arith.addf %45, %46 : vector<8x128xf32>
    %cst_42 = arith.constant 0.000000e+00 : f32
    %48 = vector.broadcast %cst_42 : f32 to vector<8x128xf32>
    %49 = arith.maximumf %47, %48 : vector<8x128xf32>
    %cst_43 = arith.constant dense<0.000000e+00> : vector<8x256xf32>
    %50 = tpu.matmul %49, %11, %cst_43 {dimension_numbers = #tpu.dot_dimension_numbers<[1], [0], [0], [1], [0, 0, 1, 1], [], []>, precision = #tpu.contract_precision<fp32>} : vector<8x128xf32>, vector<128x256xf32>, vector<8x256xf32> -> vector<8x256xf32>
    %51 = vector.broadcast %12 : vector<1x256xf32> to vector<8x256xf32>
    %52 = arith.addf %50, %51 : vector<8x256xf32>
    %cst_44 = arith.constant 0.000000e+00 : f32
    %53 = vector.broadcast %cst_44 : f32 to vector<8x256xf32>
    %54 = arith.maximumf %52, %53 : vector<8x256xf32>
    %cst_45 = arith.constant dense<0.000000e+00> : vector<8x128xf32>
    %55 = tpu.matmul %54, %13, %cst_45 {dimension_numbers = #tpu.dot_dimension_numbers<[1], [0], [0], [1], [0, 0, 1, 1], [], []>, precision = #tpu.contract_precision<fp32>} : vector<8x256xf32>, vector<256x128xf32>, vector<8x128xf32> -> vector<8x128xf32>
    %56 = vector.broadcast %14 : vector<1x128xf32> to vector<8x128xf32>
    %57 = arith.addf %55, %56 : vector<8x128xf32>
    %c0_46 = arith.constant 0 : index
    %c0_47 = arith.constant 0 : index
    %58 = vector.load %arg18[%c0_46, %c0_47] : memref<8x128xf32, #tpu.memory_space<vmem>>, vector<8x128xf32>
    tpu.vector_store %arg18[%c0_46, %c0_47], %57 {strides = array<i32>} : memref<8x128xf32, #tpu.memory_space<vmem>>, vector<8x128xf32>,
    %c0_48 = arith.constant 0 : index
    %c0_49 = arith.constant 0 : index
    %59 = vector.load %arg3[%c0_48, %c0_49] : memref<8x8xf32, #tpu.memory_space<vmem>>, vector<8x8xf32>
    %cst_50 = arith.constant dense<0.000000e+00> : vector<8x16xf32>
    %60 = tpu.matmul %59, %1, %cst_50 {dimension_numbers = #tpu.dot_dimension_numbers<[1], [0], [0], [1], [0, 0, 1, 1], [], []>, precision = #tpu.contract_precision<fp32>} : vector<8x8xf32>, vector<8x16xf32>, vector<8x16xf32> -> vector<8x16xf32>
    %61 = vector.broadcast %2 : vector<1x16xf32> to vector<8x16xf32>
    %62 = arith.addf %60, %61 : vector<8x16xf32>
    %cst_51 = arith.constant 0.000000e+00 : f32
    %63 = vector.broadcast %cst_51 : f32 to vector<8x16xf32>
    %64 = arith.maximumf %62, %63 : vector<8x16xf32>
    %cst_52 = arith.constant 0.000000e+00 : f32
    %65 = vector.broadcast %cst_52 : f32 to vector<8x16xf32>
    %66 = arith.subf %65, %64 : vector<8x16xf32>
    %67 = math.exp %66 : vector<8x16xf32>
    %cst_53 = arith.constant 1.000000e+00 : f32
    %68 = vector.broadcast %cst_53 : f32 to vector<8x16xf32>
    %69 = arith.addf %68, %67 : vector<8x16xf32>
    %cst_54 = arith.constant 1.000000e+00 : f32
    %70 = vector.broadcast %cst_54 : f32 to vector<8x16xf32>
    %71 = arith.divf %70, %69 : vector<8x16xf32>
    %cst_55 = arith.constant dense<0.000000e+00> : vector<8x16xf32>
    %72 = tpu.matmul %59, %3, %cst_55 {dimension_numbers = #tpu.dot_dimension_numbers<[1], [0], [0], [1], [0, 0, 1, 1], [], []>, precision = #tpu.contract_precision<fp32>} : vector<8x8xf32>, vector<8x16xf32>, vector<8x16xf32> -> vector<8x16xf32>
    %73 = vector.broadcast %4 : vector<1x16xf32> to vector<8x16xf32>
    %74 = arith.addf %72, %73 : vector<8x16xf32>
    %cst_56 = arith.constant 0.000000e+00 : f32
    %75 = vector.broadcast %cst_56 : f32 to vector<8x16xf32>
    %76 = arith.maximumf %74, %75 : vector<8x16xf32>
    %77 = arith.mulf %0, %71 : vector<8x16xf32>
    %78 = arith.addf %77, %76 : vector<8x16xf32>
    %cst_57 = arith.constant dense<0.000000e+00> : vector<8x64xf32>
    %79 = tpu.matmul %78, %5, %cst_57 {dimension_numbers = #tpu.dot_dimension_numbers<[1], [0], [0], [1], [0, 0, 1, 1], [], []>, precision = #tpu.contract_precision<fp32>} : vector<8x16xf32>, vector<16x64xf32>, vector<8x64xf32> -> vector<8x64xf32>
    %80 = vector.broadcast %6 : vector<1x64xf32> to vector<8x64xf32>
    %81 = arith.addf %79, %80 : vector<8x64xf32>
    %cst_58 = arith.constant 0.000000e+00 : f32
    %82 = vector.broadcast %cst_58 : f32 to vector<8x64xf32>
    %83 = arith.maximumf %81, %82 : vector<8x64xf32>
    %cst_59 = arith.constant dense<0.000000e+00> : vector<8x128xf32>
    %84 = tpu.matmul %83, %7, %cst_59 {dimension_numbers = #tpu.dot_dimension_numbers<[1], [0], [0], [1], [0, 0, 1, 1], [], []>, precision = #tpu.contract_precision<fp32>} : vector<8x64xf32>, vector<64x128xf32>, vector<8x128xf32> -> vector<8x128xf32>
    %85 = vector.broadcast %8 : vector<1x128xf32> to vector<8x128xf32>
    %86 = arith.addf %84, %85 : vector<8x128xf32>
    %cst_60 = arith.constant 0.000000e+00 : f32
    %87 = vector.broadcast %cst_60 : f32 to vector<8x128xf32>
    %88 = arith.maximumf %86, %87 : vector<8x128xf32>
    %cst_61 = arith.constant dense<0.000000e+00> : vector<8x128xf32>
    %89 = tpu.matmul %88, %9, %cst_61 {dimension_numbers = #tpu.dot_dimension_numbers<[1], [0], [0], [1], [0, 0, 1, 1], [], []>, precision = #tpu.contract_precision<fp32>} : vector<8x128xf32>, vector<128x128xf32>, vector<8x128xf32> -> vector<8x128xf32>
    %90 = vector.broadcast %10 : vector<1x128xf32> to vector<8x128xf32>
    %91 = arith.addf %89, %90 : vector<8x128xf32>
    %cst_62 = arith.constant 0.000000e+00 : f32
    %92 = vector.broadcast %cst_62 : f32 to vector<8x128xf32>
    %93 = arith.maximumf %91, %92 : vector<8x128xf32>
    %cst_63 = arith.constant dense<0.000000e+00> : vector<8x256xf32>
    %94 = tpu.matmul %93, %11, %cst_63 {dimension_numbers = #tpu.dot_dimension_numbers<[1], [0], [0], [1], [0, 0, 1, 1], [], []>, precision = #tpu.contract_precision<fp32>} : vector<8x128xf32>, vector<128x256xf32>, vector<8x256xf32> -> vector<8x256xf32>
    %95 = vector.broadcast %12 : vector<1x256xf32> to vector<8x256xf32>
    %96 = arith.addf %94, %95 : vector<8x256xf32>
    %cst_64 = arith.constant 0.000000e+00 : f32
    %97 = vector.broadcast %cst_64 : f32 to vector<8x256xf32>
    %98 = arith.maximumf %96, %97 : vector<8x256xf32>
    %cst_65 = arith.constant dense<0.000000e+00> : vector<8x128xf32>
    %99 = tpu.matmul %98, %13, %cst_65 {dimension_numbers = #tpu.dot_dimension_numbers<[1], [0], [0], [1], [0, 0, 1, 1], [], []>, precision = #tpu.contract_precision<fp32>} : vector<8x256xf32>, vector<256x128xf32>, vector<8x128xf32> -> vector<8x128xf32>
    %100 = vector.broadcast %14 : vector<1x128xf32> to vector<8x128xf32>
    %101 = arith.addf %99, %100 : vector<8x128xf32>
    %c0_66 = arith.constant 0 : index
    %c0_67 = arith.constant 0 : index
    %102 = vector.load %arg19[%c0_66, %c0_67] : memref<8x128xf32, #tpu.memory_space<vmem>>, vector<8x128xf32>
    tpu.vector_store %arg19[%c0_66, %c0_67], %101 {strides = array<i32>} : memref<8x128xf32, #tpu.memory_space<vmem>>, vector<8x128xf32>,
    return
  }
  func.func @transform_0(%arg0: i32) -> (i32, i32) {
    %c0_i32 = arith.constant 0 : i32
    %c0_i32_0 = arith.constant 0 : i32
    return %arg0, %c0_i32 : i32, i32
  }
  func.func @transform_1(%arg0: i32) -> (i32, i32) {
    %c0_i32 = arith.constant 0 : i32
    %c0_i32_0 = arith.constant 0 : i32
    return %arg0, %c0_i32 : i32, i32
  }
  func.func @transform_2(%arg0: i32) -> (i32, i32) {
    %c0_i32 = arith.constant 0 : i32
    %c0_i32_0 = arith.constant 0 : i32
    return %arg0, %c0_i32 : i32, i32
  }
  func.func @transform_3(%arg0: i32) -> (i32, i32) {
    %c0_i32 = arith.constant 0 : i32
    %c0_i32_0 = arith.constant 0 : i32
    %c0_i32_1 = arith.constant 0 : i32
    return %c0_i32, %c0_i32_0 : i32, i32
  }
  func.func @transform_4(%arg0: i32) -> (i32, i32) {
    %c0_i32 = arith.constant 0 : i32
    %c0_i32_0 = arith.constant 0 : i32
    %c0_i32_1 = arith.constant 0 : i32
    return %c0_i32, %c0_i32_0 : i32, i32
  }
  func.func @transform_5(%arg0: i32) -> (i32, i32) {
    %c0_i32 = arith.constant 0 : i32
    %c0_i32_0 = arith.constant 0 : i32
    %c0_i32_1 = arith.constant 0 : i32
    return %c0_i32, %c0_i32_0 : i32, i32
  }
  func.func @transform_6(%arg0: i32) -> (i32, i32) {
    %c0_i32 = arith.constant 0 : i32
    %c0_i32_0 = arith.constant 0 : i32
    %c0_i32_1 = arith.constant 0 : i32
    return %c0_i32, %c0_i32_0 : i32, i32
  }
  func.func @transform_7(%arg0: i32) -> (i32, i32) {
    %c0_i32 = arith.constant 0 : i32
    %c0_i32_0 = arith.constant 0 : i32
    %c0_i32_1 = arith.constant 0 : i32
    return %c0_i32, %c0_i32_0 : i32, i32
  }
  func.func @transform_8(%arg0: i32) -> (i32, i32) {
    %c0_i32 = arith.constant 0 : i32
    %c0_i32_0 = arith.constant 0 : i32
    %c0_i32_1 = arith.constant 0 : i32
    return %c0_i32, %c0_i32_0 : i32, i32
  }
  func.func @transform_9(%arg0: i32) -> (i32, i32) {
    %c0_i32 = arith.constant 0 : i32
    %c0_i32_0 = arith.constant 0 : i32
    %c0_i32_1 = arith.constant 0 : i32
    return %c0_i32, %c0_i32_0 : i32, i32
  }
  func.func @transform_10(%arg0: i32) -> (i32, i32) {
    %c0_i32 = arith.constant 0 : i32
    %c0_i32_0 = arith.constant 0 : i32
    %c0_i32_1 = arith.constant 0 : i32
    return %c0_i32, %c0_i32_0 : i32, i32
  }
  func.func @transform_11(%arg0: i32) -> (i32, i32) {
    %c0_i32 = arith.constant 0 : i32
    %c0_i32_0 = arith.constant 0 : i32
    %c0_i32_1 = arith.constant 0 : i32
    return %c0_i32, %c0_i32_0 : i32, i32
  }
  func.func @transform_12(%arg0: i32) -> (i32, i32) {
    %c0_i32 = arith.constant 0 : i32
    %c0_i32_0 = arith.constant 0 : i32
    %c0_i32_1 = arith.constant 0 : i32
    return %c0_i32, %c0_i32_0 : i32, i32
  }
  func.func @transform_13(%arg0: i32) -> (i32, i32) {
    %c0_i32 = arith.constant 0 : i32
    %c0_i32_0 = arith.constant 0 : i32
    %c0_i32_1 = arith.constant 0 : i32
    return %c0_i32, %c0_i32_0 : i32, i32
  }
  func.func @transform_14(%arg0: i32) -> (i32, i32) {
    %c0_i32 = arith.constant 0 : i32
    %c0_i32_0 = arith.constant 0 : i32
    %c0_i32_1 = arith.constant 0 : i32
    return %c0_i32, %c0_i32_0 : i32, i32
  }
  func.func @transform_15(%arg0: i32) -> (i32, i32) {
    %c0_i32 = arith.constant 0 : i32
    %c0_i32_0 = arith.constant 0 : i32
    %c0_i32_1 = arith.constant 0 : i32
    return %c0_i32, %c0_i32_0 : i32, i32
  }
  func.func @transform_16(%arg0: i32) -> (i32, i32) {
    %c0_i32 = arith.constant 0 : i32
    %c0_i32_0 = arith.constant 0 : i32
    %c0_i32_1 = arith.constant 0 : i32
    return %c0_i32, %c0_i32_0 : i32, i32
  }
  func.func @transform_17(%arg0: i32) -> (i32, i32) {
    %c0_i32 = arith.constant 0 : i32
    %c0_i32_0 = arith.constant 0 : i32
    return %arg0, %c0_i32 : i32, i32
  }
  func.func @transform_18(%arg0: i32) -> (i32, i32) {
    %c0_i32 = arith.constant 0 : i32
    %c0_i32_0 = arith.constant 0 : i32
    return %arg0, %c0_i32 : i32, i32
  }
}

</mosaic_0001>

<llo_original>
// kernel: tpu_custom_call.1
$region0: #{tpu_custom_call.1}
  #allocation0 [shape = 'u32[]', space=smem, size = 0x4, offset = 0x4, fixed_abs, tag = 'smem constant byte address 0x4 - core index']
  #allocation1 [shape = 'u32[72,128]{1,0:T(1,128)}', space=vmem, size = 0x9000, scoped, tag = 'internal scratch']
  %s0 = inlined_call_operand.hbm [shape: f32[8,16], index: 0, kind: input, shape index: {}]
  %s1 = inlined_call_operand.hbm [shape: f32[8,8], index: 1, kind: input, shape index: {}]
  %s2 = inlined_call_operand.hbm [shape: f32[8,8], index: 2, kind: input, shape index: {}]
  %s3 = inlined_call_operand.hbm [shape: f32[8,16], index: 3, kind: input, shape index: {}]
  %s4 = inlined_call_operand.vmem [shape: f32[1,16], index: 4, kind: input, shape index: {}]
  %s5 = inlined_call_operand.hbm [shape: f32[8,16], index: 5, kind: input, shape index: {}]
  %s6 = inlined_call_operand.vmem [shape: f32[1,16], index: 6, kind: input, shape index: {}]
  %s7 = inlined_call_operand.hbm [shape: f32[16,64], index: 7, kind: input, shape index: {}]
  %s8 = inlined_call_operand.vmem [shape: f32[1,64], index: 8, kind: input, shape index: {}]
  %s9 = inlined_call_operand.hbm [shape: f32[64,128], index: 9, kind: input, shape index: {}]
  %s10 = inlined_call_operand.vmem [shape: f32[1,128], index: 10, kind: input, shape index: {}]
  %s11 = inlined_call_operand.hbm [shape: f32[128,128], index: 11, kind: input, shape index: {}]
  %s12 = inlined_call_operand.vmem [shape: f32[1,128], index: 12, kind: input, shape index: {}]
  %s13 = inlined_call_operand.hbm [shape: f32[128,256], index: 13, kind: input, shape index: {}]
  %s14 = inlined_call_operand.vmem [shape: f32[1,256], index: 14, kind: input, shape index: {}]
  %s15 = inlined_call_operand.hbm [shape: f32[256,128], index: 15, kind: input, shape index: {}]
  %s16 = inlined_call_operand.vmem [shape: f32[1,128], index: 16, kind: input, shape index: {}]
  %s17 = inlined_call_operand.hbm [shape: f32[8,128], index: 17, kind: output, shape index: {0}]
  %s18 = inlined_call_operand.hbm [shape: f32[8,128], index: 18, kind: output, shape index: {1}]
  %19 = xla_tuple %s17, %s18
  %s20 = sld [smem:[#allocation0]]
  $region126: #{tpu_custom_call.1} parent=0
    _
  %s22 = ssub.s32 1, %s20
  %s23 = scalar_select 0, %s22, %s20
  $region1: #{tpu_custom_call.1} parent=0
    #allocation2 [shape = 'u8[4096]{0}', space=vmem, size = 0x1000, scoped, tag = 'input window, operand 0, single buffered']
    #allocation3 [shape = 's32[1]{0}', space=sflag, size = 0x4, scoped, tag = 'scoped memory for tpu_custom_call.1']
    #allocation4 [shape = 's32[1]{0}', space=sflag, size = 0x4, scoped, tag = 'scoped memory for tpu_custom_call.1']
    #allocation5 [shape = 'u8[4096]{0}', space=vmem, size = 0x1000, scoped, tag = 'input window, operand 1, single buffered']
    #allocation6 [shape = 's32[1]{0}', space=sflag, size = 0x4, scoped, tag = 'scoped memory for tpu_custom_call.1']
    #allocation7 [shape = 'u8[4096]{0}', space=vmem, size = 0x1000, scoped, tag = 'input window, operand 2, single buffered']
    #allocation8 [shape = 'u8[4096]{0}', space=vmem, size = 0x1000, scoped, tag = 'input window, operand 3, single buffered']
    #allocation9 [shape = 's32[1]{0}', space=sflag, size = 0x4, scoped, tag = 'scoped memory for tpu_custom_call.1']
    #allocation10 [shape = 'u8[4096]{0}', space=vmem, size = 0x1000, scoped, tag = 'input window, operand 5, single buffered']
    #allocation11 [shape = 'u8[8192]{0}', space=vmem, size = 0x2000, scoped, tag = 'input window, operand 7, single buffered']
    #allocation12 [shape = 's32[1]{0}', space=sflag, size = 0x4, scoped, tag = 'scoped memory for tpu_custom_call.1']
    #allocation13 [shape = 'u8[32768]{0}', space=vmem, size = 0x8000, scoped, tag = 'input window, operand 9, single buffered']
    #allocation14 [shape = 'u8[65536]{0}', space=vmem, size = 0x10000, scoped, tag = 'input window, operand 11, single buffered']
    #allocation15 [shape = 's32[1]{0}', space=sflag, size = 0x4, scoped, tag = 'scoped memory for tpu_custom_call.1']
    #allocation16 [shape = 'u8[131072]{0}', space=vmem, size = 0x20000, scoped, tag = 'input window, operand 13, single buffered']
    #allocation17 [shape = 'u8[131072]{0}', space=vmem, size = 0x20000, scoped, tag = 'input window, operand 15, single buffered']
    #allocation18 [shape = 's32[1]{0}', space=sflag, size = 0x4, scoped, tag = 'scoped memory for tpu_custom_call.1']
    #allocation19 [shape = 'u8[4096]{0}', space=vmem, size = 0x1000, scoped, tag = 'output window, operand 0, single buffered']
    #allocation20 [shape = 'u8[4096]{0}', space=vmem, size = 0x1000, scoped, tag = 'output window, operand 1, single buffered']
    #allocation21 [shape = 's32[1]{0}', space=sflag, size = 0x4, scoped, tag = 'scoped memory for tpu_custom_call.1']
    %24 = vsyncpa [#allocation3], 0
    %25 = vsyncpa [#allocation6], 0
    %26 = vsyncpa [#allocation9], 0
    %27 = vsyncpa [#allocation12], 0
    %28 = vsyncpa [#allocation15], 0
    %29 = vsyncpa [#allocation18], 0
    %30 = vsyncpa [#allocation4], 0
    %31 = vsyncpa [#allocation21], 0
    // Predicated region
    $region2: #{tpu_custom_call.1} parent=1 // pred_check
      _
    $region3: #{tpu_custom_call.1} parent=1 // pred_check_branch
      %33 = sbr.rel (0) target = $region5
    $region4: #{tpu_custom_call.1} parent=1 // pred_region
      %35 = vsyncadd [#allocation3], 0
      %s37 = sshll.u32 %s0, 4
      %s38 = int_to_ptr.hbm [resolvable:$true] %s37
      %s39 = sshll.u32 [#allocation2], 4
      %s40 = int_to_ptr.vmem [resolvable:$true] %s39
      %42 = dma.hbm_to_vmem [thread:$0]  %s38, 128, %s40, [#allocation3]
    $region5: #{tpu_custom_call.1} parent=1 // pred_fallthru
      _
    // Predicated region
    $region6: #{tpu_custom_call.1} parent=1 // pred_check
      _
    $region7: #{tpu_custom_call.1} parent=1 // pred_check_branch
      %44 = sbr.rel (0) target = $region9
    $region8: #{tpu_custom_call.1} parent=1 // pred_region
      %46 = vsyncadd [#allocation6], 0
      %s48 = sshll.u32 %s1, 4
      %s49 = int_to_ptr.hbm [resolvable:$true] %s48
      %s50 = sshll.u32 [#allocation5], 4
      %s51 = int_to_ptr.vmem [resolvable:$true] %s50
      %53 = dma.hbm_to_vmem [thread:$0]  %s49, 128, %s51, [#allocation6]
    $region9: #{tpu_custom_call.1} parent=1 // pred_fallthru
      _
    // Predicated region
    $region10: #{tpu_custom_call.1} parent=1 // pred_check
      _
    $region11: #{tpu_custom_call.1} parent=1 // pred_check_branch
      %55 = sbr.rel (0) target = $region13
    $region12: #{tpu_custom_call.1} parent=1 // pred_region
      %57 = vsyncadd [#allocation6], 0
      %s59 = sshll.u32 %s2, 4
      %s60 = int_to_ptr.hbm [resolvable:$true] %s59
      %s61 = sshll.u32 [#allocation7], 4
      %s62 = int_to_ptr.vmem [resolvable:$true] %s61
      %64 = dma.hbm_to_vmem [thread:$0]  %s60, 128, %s62, [#allocation6]
    $region13: #{tpu_custom_call.1} parent=1 // pred_fallthru
      _
    // Predicated region
    $region14: #{tpu_custom_call.1} parent=1 // pred_check
      _
    $region15: #{tpu_custom_call.1} parent=1 // pred_check_branch
      %66 = sbr.rel (0) target = $region17
    $region16: #{tpu_custom_call.1} parent=1 // pred_region
      %68 = vsyncadd [#allocation9], 0
      %s70 = sshll.u32 %s3, 4
      %s71 = int_to_ptr.hbm [resolvable:$true] %s70
      %s72 = sshll.u32 [#allocation8], 4
      %s73 = int_to_ptr.vmem [resolvable:$true] %s72
      %75 = dma.hbm_to_vmem [thread:$0]  %s71, 128, %s73, [#allocation9]
    $region17: #{tpu_custom_call.1} parent=1 // pred_fallthru
      _
    // Predicated region
    $region18: #{tpu_custom_call.1} parent=1 // pred_check
      _
    $region19: #{tpu_custom_call.1} parent=1 // pred_check_branch
      %77 = sbr.rel (0) target = $region21
    $region20: #{tpu_custom_call.1} parent=1 // pred_region
      _
    $region21: #{tpu_custom_call.1} parent=1 // pred_fallthru
      _
    // Predicated region
    $region22: #{tpu_custom_call.1} parent=1 // pred_check
      _
    $region23: #{tpu_custom_call.1} parent=1 // pred_check_branch
      %79 = sbr.rel (0) target = $region25
    $region24: #{tpu_custom_call.1} parent=1 // pred_region
      %81 = vsyncadd [#allocation9], 0
      %s83 = sshll.u32 %s5, 4
      %s84 = int_to_ptr.hbm [resolvable:$true] %s83
      %s85 = sshll.u32 [#allocation10], 4
      %s86 = int_to_ptr.vmem [resolvable:$true] %s85
      %88 = dma.hbm_to_vmem [thread:$0]  %s84, 128, %s86, [#allocation9]
    $region25: #{tpu_custom_call.1} parent=1 // pred_fallthru
      _
    // Predicated region
    $region26: #{tpu_custom_call.1} parent=1 // pred_check
      _
    $region27: #{tpu_custom_call.1} parent=1 // pred_check_branch
      %90 = sbr.rel (0) target = $region29
    $region28: #{tpu_custom_call.1} parent=1 // pred_region
      _
    $region29: #{tpu_custom_call.1} parent=1 // pred_fallthru
      _
    // Predicated region
    $region30: #{tpu_custom_call.1} parent=1 // pred_check
      _
    $region31: #{tpu_custom_call.1} parent=1 // pred_check_branch
      %92 = sbr.rel (0) target = $region33
    $region32: #{tpu_custom_call.1} parent=1 // pred_region
      %94 = vsyncadd [#allocation12], 0
      %s95 = sshll.u32 %s7, 4
      %s96 = int_to_ptr.hbm [resolvable:$true] %s95
      %s97 = sshll.u32 [#allocation11], 4
      %s98 = int_to_ptr.vmem [resolvable:$true] %s97
      %103 = dma.hbm_to_vmem [thread:$0]  %s96, 256, %s98, [#allocation12], 128, 128, 8
    $region33: #{tpu_custom_call.1} parent=1 // pred_fallthru
      _
    // Predicated region
    $region34: #{tpu_custom_call.1} parent=1 // pred_check
      _
    $region35: #{tpu_custom_call.1} parent=1 // pred_check_branch
      %105 = sbr.rel (0) target = $region37
    $region36: #{tpu_custom_call.1} parent=1 // pred_region
      _
    $region37: #{tpu_custom_call.1} parent=1 // pred_fallthru
      _
    // Predicated region
    $region38: #{tpu_custom_call.1} parent=1 // pred_check
      _
    $region39: #{tpu_custom_call.1} parent=1 // pred_check_branch
      %107 = sbr.rel (0) target = $region41
    $region40: #{tpu_custom_call.1} parent=1 // pred_region
      %109 = vsyncadd [#allocation12], 0
      %s110 = sshll.u32 %s9, 4
      %s111 = int_to_ptr.hbm [resolvable:$true] %s110
      %s112 = sshll.u32 [#allocation13], 4
      %s113 = int_to_ptr.vmem [resolvable:$true] %s112
      %118 = dma.hbm_to_vmem [thread:$0]  %s111, 1024, %s113, [#allocation12], 128, 128, 8
    $region41: #{tpu_custom_call.1} parent=1 // pred_fallthru
      _
    // Predicated region
    $region42: #{tpu_custom_call.1} parent=1 // pred_check
      _
    $region43: #{tpu_custom_call.1} parent=1 // pred_check_branch
      %120 = sbr.rel (0) target = $region45
    $region44: #{tpu_custom_call.1} parent=1 // pred_region
      _
    $region45: #{tpu_custom_call.1} parent=1 // pred_fallthru
      _
    // Predicated region
    $region46: #{tpu_custom_call.1} parent=1 // pred_check
      _
    $region47: #{tpu_custom_call.1} parent=1 // pred_check_branch
      %122 = sbr.rel (0) target = $region49
    $region48: #{tpu_custom_call.1} parent=1 // pred_region
      %124 = vsyncadd [#allocation15], 0
      %s125 = sshll.u32 %s11, 4
      %s126 = int_to_ptr.hbm [resolvable:$true] %s125
      %s127 = sshll.u32 [#allocation14], 4
      %s128 = int_to_ptr.vmem [resolvable:$true] %s127
      %133 = dma.hbm_to_vmem [thread:$0]  %s126, 2048, %s128, [#allocation15], 128, 128, 8
    $region49: #{tpu_custom_call.1} parent=1 // pred_fallthru
      _
    // Predicated region
    $region50: #{tpu_custom_call.1} parent=1 // pred_check
      _
    $region51: #{tpu_custom_call.1} parent=1 // pred_check_branch
      %135 = sbr.rel (0) target = $region53
    $region52: #{tpu_custom_call.1} parent=1 // pred_region
      _
    $region53: #{tpu_custom_call.1} parent=1 // pred_fallthru
      _
    // Predicated region
    $region54: #{tpu_custom_call.1} parent=1 // pred_check
      _
    $region55: #{tpu_custom_call.1} parent=1 // pred_check_branch
      %137 = sbr.rel (0) target = $region57
    $region56: #{tpu_custom_call.1} parent=1 // pred_region
      %139 = vsyncadd [#allocation15], 0
      %s140 = sshll.u32 %s13, 4
      %s141 = int_to_ptr.hbm [resolvable:$true] %s140
      %s142 = sshll.u32 [#allocation16], 4
      %s143 = int_to_ptr.vmem [resolvable:$true] %s142
      %148 = dma.hbm_to_vmem [thread:$0]  %s141, 4096, %s143, [#allocation15], 256, 256, 16
    $region57: #{tpu_custom_call.1} parent=1 // pred_fallthru
      _
    // Predicated region
    $region58: #{tpu_custom_call.1} parent=1 // pred_check
      _
    $region59: #{tpu_custom_call.1} parent=1 // pred_check_branch
      %150 = sbr.rel (0) target = $region61
    $region60: #{tpu_custom_call.1} parent=1 // pred_region
      _
    $region61: #{tpu_custom_call.1} parent=1 // pred_fallthru
      _
    // Predicated region
    $region62: #{tpu_custom_call.1} parent=1 // pred_check
      _
    $region63: #{tpu_custom_call.1} parent=1 // pred_check_branch
      %152 = sbr.rel (0) target = $region65
    $region64: #{tpu_custom_call.1} parent=1 // pred_region
      %154 = vsyncadd [#allocation18], 0
      %s155 = sshll.u32 %s15, 4
      %s156 = int_to_ptr.hbm [resolvable:$true] %s155
      %s157 = sshll.u32 [#allocation17], 4
      %s158 = int_to_ptr.vmem [resolvable:$true] %s157
      %163 = dma.hbm_to_vmem [thread:$0]  %s156, 4096, %s158, [#allocation18], 128, 128, 8
    $region65: #{tpu_custom_call.1} parent=1 // pred_fallthru
      _
    // Predicated region
    $region66: #{tpu_custom_call.1} parent=1 // pred_check
      _
    $region67: #{tpu_custom_call.1} parent=1 // pred_check_branch
      %165 = sbr.rel (0) target = $region69
    $region68: #{tpu_custom_call.1} parent=1 // pred_region
      _
    $region69: #{tpu_custom_call.1} parent=1 // pred_fallthru
      _
    // Predicated region
    $region70: #{tpu_custom_call.1} parent=1 // pred_check
      _
    $region71: #{tpu_custom_call.1} parent=1 // pred_check_branch
      %167 = sbr.rel (0) target = $region73
    $region72: #{tpu_custom_call.1} parent=1 // pred_region
      %169 = dma.done [#allocation3], 128
    $region73: #{tpu_custom_call.1} parent=1 // pred_fallthru
      _
    // Predicated region
    $region74: #{tpu_custom_call.1} parent=1 // pred_check
      _
    $region75: #{tpu_custom_call.1} parent=1 // pred_check_branch
      %171 = sbr.rel (0) target = $region77
    $region76: #{tpu_custom_call.1} parent=1 // pred_region
      %173 = dma.done [#allocation6], 128
    $region77: #{tpu_custom_call.1} parent=1 // pred_fallthru
      _
    // Predicated region
    $region78: #{tpu_custom_call.1} parent=1 // pred_check
      _
    $region79: #{tpu_custom_call.1} parent=1 // pred_check_branch
      %175 = sbr.rel (0) target = $region81
    $region80: #{tpu_custom_call.1} parent=1 // pred_region
      %177 = dma.done [#allocation6], 128
    $region81: #{tpu_custom_call.1} parent=1 // pred_fallthru
      _
    // Predicated region
    $region82: #{tpu_custom_call.1} parent=1 // pred_check
      _
    $region83: #{tpu_custom_call.1} parent=1 // pred_check_branch
      %179 = sbr.rel (0) target = $region85
    $region84: #{tpu_custom_call.1} parent=1 // pred_region
      %181 = dma.done [#allocation9], 128
    $region85: #{tpu_custom_call.1} parent=1 // pred_fallthru
      _
    // Predicated region
    $region86: #{tpu_custom_call.1} parent=1 // pred_check
      _
    $region87: #{tpu_custom_call.1} parent=1 // pred_check_branch
      %183 = sbr.rel (0) target = $region89
    $region88: #{tpu_custom_call.1} parent=1 // pred_region
      %185 = dma.done [#allocation9], 128
    $region89: #{tpu_custom_call.1} parent=1 // pred_fallthru
      _
    // Predicated region
    $region90: #{tpu_custom_call.1} parent=1 // pred_check
      _
    $region91: #{tpu_custom_call.1} parent=1 // pred_check_branch
      %187 = sbr.rel (0) target = $region93
    $region92: #{tpu_custom_call.1} parent=1 // pred_region
      %189 = dma.done [#allocation12], 256
    $region93: #{tpu_custom_call.1} parent=1 // pred_fallthru
      _
    // Predicated region
    $region94: #{tpu_custom_call.1} parent=1 // pred_check
      _
    $region95: #{tpu_custom_call.1} parent=1 // pred_check_branch
      %191 = sbr.rel (0) target = $region97
    $region96: #{tpu_custom_call.1} parent=1 // pred_region
      %193 = dma.done [#allocation12], 1024
    $region97: #{tpu_custom_call.1} parent=1 // pred_fallthru
      _
    // Predicated region
    $region98: #{tpu_custom_call.1} parent=1 // pred_check
      _
    $region99: #{tpu_custom_call.1} parent=1 // pred_check_branch
      %195 = sbr.rel (0) target = $region101
    $region100: #{tpu_custom_call.1} parent=1 // pred_region
      %197 = dma.done [#allocation15], 2048
    $region101: #{tpu_custom_call.1} parent=1 // pred_fallthru
      _
    // Predicated region
    $region102: #{tpu_custom_call.1} parent=1 // pred_check
      _
    $region103: #{tpu_custom_call.1} parent=1 // pred_check_branch
      %199 = sbr.rel (0) target = $region105
    $region104: #{tpu_custom_call.1} parent=1 // pred_region
      %201 = dma.done [#allocation15], 4096
    $region105: #{tpu_custom_call.1} parent=1 // pred_fallthru
      _
    // Predicated region
    $region106: #{tpu_custom_call.1} parent=1 // pred_check
      _
    $region107: #{tpu_custom_call.1} parent=1 // pred_check_branch
      %203 = sbr.rel (0) target = $region109
    $region108: #{tpu_custom_call.1} parent=1 // pred_region
      %205 = dma.done [#allocation18], 4096
    $region109: #{tpu_custom_call.1} parent=1 // pred_fallthru
      _
    %v206 = vld [vmem:[#allocation2] sm:$0xff]
    %v207 = vld [vmem:[#allocation8] sm:$0xff]
    %v208 = vld [vmem:[%s4] sm:$0x1]
    %v209 = vld [vmem:[#allocation10] sm:$0xff]
    %v210 = vld [vmem:[%s6] sm:$0x1]
    %v211 = vld [vmem:[#allocation11] sm:$0xff]
    %v212 = vld [vmem:[#allocation11 + $0x8] sm:$0xff]
    %v213 = vld [vmem:[%s8] sm:$0x1]
    %v214 = vld [vmem:[#allocation13] sm:$0xff]
    %v215 = vld [vmem:[#allocation13 + $0x8] sm:$0xff]
    %v216 = vld [vmem:[#allocation13 + $0x10] sm:$0xff]
    %v217 = vld [vmem:[#allocation13 + $0x18] sm:$0xff]
    %v218 = vld [vmem:[#allocation13 + $0x20] sm:$0xff]
    %v219 = vld [vmem:[#allocation13 + $0x28] sm:$0xff]
    %v220 = vld [vmem:[#allocation13 + $0x30] sm:$0xff]
    %v221 = vld [vmem:[#allocation13 + $0x38] sm:$0xff]
    %v222 = vld [vmem:[%s10] sm:$0x1]
    %v223 = vld [vmem:[#allocation14] sm:$0xff]
    %v224 = vld [vmem:[#allocation14 + $0x8] sm:$0xff]
    %v225 = vld [vmem:[#allocation14 + $0x10] sm:$0xff]
    %v226 = vld [vmem:[#allocation14 + $0x18] sm:$0xff]
    %v227 = vld [vmem:[#allocation14 + $0x20] sm:$0xff]
    %v228 = vld [vmem:[#allocation14 + $0x28] sm:$0xff]
    %v229 = vld [vmem:[#allocation14 + $0x30] sm:$0xff]
    %v230 = vld [vmem:[#allocation14 + $0x38] sm:$0xff]
    %v231 = vld [vmem:[#allocation14 + $0x40] sm:$0xff]
    %v232 = vld [vmem:[#allocation14 + $0x48] sm:$0xff]
    %v233 = vld [vmem:[#allocation14 + $0x50] sm:$0xff]
    %v234 = vld [vmem:[#allocation14 + $0x58] sm:$0xff]
    %v235 = vld [vmem:[#allocation14 + $0x60] sm:$0xff]
    %v236 = vld [vmem:[#allocation14 + $0x68] sm:$0xff]
    %v237 = vld [vmem:[#allocation14 + $0x70] sm:$0xff]
    %v238 = vld [vmem:[#allocation14 + $0x78] sm:$0xff]
    %v239 = vld [vmem:[%s12] sm:$0x1]
    %v240 = vld [vmem:[#allocation16] sm:$0xff]
    %v241 = vld [vmem:[#allocation16 + $0x8] sm:$0xff]
    %v242 = vld [vmem:[#allocation16 + $0x10] sm:$0xff]
    %v243 = vld [vmem:[#allocation16 + $0x18] sm:$0xff]
    %v244 = vld [vmem:[#allocation16 + $0x20] sm:$0xff]
    %v245 = vld [vmem:[#allocation16 + $0x28] sm:$0xff]
    %v246 = vld [vmem:[#allocation16 + $0x30] sm:$0xff]
    %v247 = vld [vmem:[#allocation16 + $0x38] sm:$0xff]
    %v248 = vld [vmem:[#allocation16 + $0x40] sm:$0xff]
    %v249 = vld [vmem:[#allocation16 + $0x48] sm:$0xff]
    %v250 = vld [vmem:[#allocation16 + $0x50] sm:$0xff]
    %v251 = vld [vmem:[#allocation16 + $0x58] sm:$0xff]
    %v252 = vld [vmem:[#allocation16 + $0x60] sm:$0xff]
    %v253 = vld [vmem:[#allocation16 + $0x68] sm:$0xff]
    %v254 = vld [vmem:[#allocation16 + $0x70] sm:$0xff]
    %v255 = vld [vmem:[#allocation16 + $0x78] sm:$0xff]
    %v256 = vld [vmem:[#allocation16 + $0x80] sm:$0xff]
    %v257 = vld [vmem:[#allocation16 + $0x88] sm:$0xff]
    %v258 = vld [vmem:[#allocation16 + $0x90] sm:$0xff]
    %v259 = vld [vmem:[#allocation16 + $0x98] sm:$0xff]
    %v260 = vld [vmem:[#allocation16 + $0xa0] sm:$0xff]
    %v261 = vld [vmem:[#allocation16 + $0xa8] sm:$0xff]
    %v262 = vld [vmem:[#allocation16 + $0xb0] sm:$0xff]
    %v263 = vld [vmem:[#allocation16 + $0xb8] sm:$0xff]
    %v264 = vld [vmem:[#allocation16 + $0xc0] sm:$0xff]
    %v265 = vld [vmem:[#allocation16 + $0xc8] sm:$0xff]
    %v266 = vld [vmem:[#allocation16 + $0xd0] sm:$0xff]
    %v267 = vld [vmem:[#allocation16 + $0xd8] sm:$0xff]
    %v268 = vld [vmem:[#allocation16 + $0xe0] sm:$0xff]
    %v269 = vld [vmem:[#allocation16 + $0xe8] sm:$0xff]
    %v270 = vld [vmem:[#allocation16 + $0xf0] sm:$0xff]
    %v271 = vld [vmem:[#allocation16 + $0xf8] sm:$0xff]
    %v272 = vld [vmem:[%s14] sm:$0x3]
    %v273 = vld [vmem:[#allocation17] sm:$0xff]
    %v274 = vld [vmem:[#allocation17 + $0x8] sm:$0xff]
    %v275 = vld [vmem:[#allocation17 + $0x10] sm:$0xff]
    %v276 = vld [vmem:[#allocation17 + $0x18] sm:$0xff]
    %v277 = vld [vmem:[#allocation17 + $0x20] sm:$0xff]
    %v278 = vld [vmem:[#allocation17 + $0x28] sm:$0xff]
    %v279 = vld [vmem:[#allocation17 + $0x30] sm:$0xff]
    %v280 = vld [vmem:[#allocation17 + $0x38] sm:$0xff]
    %v281 = vld [vmem:[#allocation17 + $0x40] sm:$0xff]
    %v282 = vld [vmem:[#allocation17 + $0x48] sm:$0xff]
    %v283 = vld [vmem:[#allocation17 + $0x50] sm:$0xff]
    %v284 = vld [vmem:[#allocation17 + $0x58] sm:$0xff]
    %v285 = vld [vmem:[#allocation17 + $0x60] sm:$0xff]
    %v286 = vld [vmem:[#allocation17 + $0x68] sm:$0xff]
    %v287 = vld [vmem:[#allocation17 + $0x70] sm:$0xff]
    %v288 = vld [vmem:[#allocation17 + $0x78] sm:$0xff]
    %v289 = vld [vmem:[#allocation17 + $0x80] sm:$0xff]
    %v290 = vld [vmem:[#allocation17 + $0x88] sm:$0xff]
    %v291 = vld [vmem:[#allocation17 + $0x90] sm:$0xff]
    %v292 = vld [vmem:[#allocation17 + $0x98] sm:$0xff]
    %v293 = vld [vmem:[#allocation17 + $0xa0] sm:$0xff]
    %v294 = vld [vmem:[#allocation17 + $0xa8] sm:$0xff]
    %v295 = vld [vmem:[#allocation17 + $0xb0] sm:$0xff]
    %v296 = vld [vmem:[#allocation17 + $0xb8] sm:$0xff]
    %v297 = vld [vmem:[#allocation17 + $0xc0] sm:$0xff]
    %v298 = vld [vmem:[#allocation17 + $0xc8] sm:$0xff]
    %v299 = vld [vmem:[#allocation17 + $0xd0] sm:$0xff]
    %v300 = vld [vmem:[#allocation17 + $0xd8] sm:$0xff]
    %v301 = vld [vmem:[#allocation17 + $0xe0] sm:$0xff]
    %v302 = vld [vmem:[#allocation17 + $0xe8] sm:$0xff]
    %v303 = vld [vmem:[#allocation17 + $0xf0] sm:$0xff]
    %v304 = vld [vmem:[#allocation17 + $0xf8] sm:$0xff]
    %v305 = vld [vmem:[%s16] sm:$0x1]
    %v306 = vld [vmem:[#allocation5] sm:$0xff]
    %v308 = vperm.slane %v208, 0
    %vm310 = vcmask 64512
    %v312 = vsel %vm310, %v306, 0
    %314 = vmatpush.msra.mxu0 0.0
    %315 = vmatpush.msra.mxu0 0.0
    %316 = vmatpush.msra.mxu0 0.0
    %317 = vmatpush.msra.mxu0 0.0
    %318 = vmatpush.msra.mxu0 0.0
    %319 = vmatpush.msra.mxu0 0.0
    %320 = vmatpush.msra.mxu0 0.0
    %321 = vmatpush.msra.mxu0 0.0
    %322 = vmatpush.msra.mxu0 0.0
    %323 = vmatpush.msra.mxu0 0.0
    %324 = vmatpush.msra.mxu0 0.0
    %325 = vmatpush.msra.mxu0 0.0
    %326 = vmatpush.msra.mxu0 0.0
    %327 = vmatpush.msra.mxu0 0.0
    %328 = vmatpush.msra.mxu0 0.0
    %v329 = vand.u32 %v207, 4294901760
    %330 = vmatpush.msra.mxu0 %v329
    %v331 = vand.u32 %v312, 4294901760
    %v332 = vsub.f32 %v312, %v331
    %v333 = vand.u32 %v332, 4294901760
    %v334 = vsub.f32 %v332, %v333
    %v335 = vand.u32 %v334, 4294901760
    %336 = vmatmul.f32.gmra.mxu0 %v335
    %v337 = vpop.f32.mrf.mxu0
    %v338 = vadd.f32 %v308, %v337
    %339 = vdwg.mxu0
    %340 = vmatpush.msra.mxu0 0.0
    %341 = vmatpush.msra.mxu0 0.0
    %342 = vmatpush.msra.mxu0 0.0
    %343 = vmatpush.msra.mxu0 0.0
    %344 = vmatpush.msra.mxu0 0.0
    %345 = vmatpush.msra.mxu0 0.0
    %346 = vmatpush.msra.mxu0 0.0
    %347 = vmatpush.msra.mxu0 0.0
    %348 = vmatpush.msra.mxu0 0.0
    %349 = vmatpush.msra.mxu0 0.0
    %350 = vmatpush.msra.mxu0 0.0
    %351 = vmatpush.msra.mxu0 0.0
    %352 = vmatpush.msra.mxu0 0.0
    %353 = vmatpush.msra.mxu0 0.0
    %354 = vmatpush.msra.mxu0 0.0
    %v355 = vand.u32 %v207, 4294901760
    %v356 = vsub.f32 %v207, %v355
    %v357 = vand.u32 %v356, 4294901760
    %v358 = vsub.f32 %v356, %v357
    %v359 = vand.u32 %v358, 4294901760
    %360 = vmatpush.msra.mxu0 %v359
    %v361 = vand.u32 %v312, 4294901760
    %362 = vmatmul.f32.gmra.mxu0 %v361
    %v363 = vpop.f32.mrf.mxu0
    %v364 = vadd.f32 %v338, %v363
    %365 = vdwg.mxu0
    %366 = vmatpush.msra.mxu0 0.0
    %367 = vmatpush.msra.mxu0 0.0
    %368 = vmatpush.msra.mxu0 0.0
    %369 = vmatpush.msra.mxu0 0.0
    %370 = vmatpush.msra.mxu0 0.0
    %371 = vmatpush.msra.mxu0 0.0
    %372 = vmatpush.msra.mxu0 0.0
    %373 = vmatpush.msra.mxu0 0.0
    %374 = vmatpush.msra.mxu0 0.0
    %375 = vmatpush.msra.mxu0 0.0
    %376 = vmatpush.msra.mxu0 0.0
    %377 = vmatpush.msra.mxu0 0.0
    %378 = vmatpush.msra.mxu0 0.0
    %379 = vmatpush.msra.mxu0 0.0
    %380 = vmatpush.msra.mxu0 0.0
    %v381 = vand.u32 %v207, 4294901760
    %v382 = vsub.f32 %v207, %v381
    %383 = vmatpush.msra.mxu0 %v382
    %v384 = vand.u32 %v312, 4294901760
    %v385 = vsub.f32 %v312, %v384
    %386 = vmatmul.f32.gmra.mxu0 %v385
    %v387 = vpop.f32.mrf.mxu0
    %v388 = vadd.f32 %v364, %v387
    %389 = vdwg.mxu0
    %390 = vmatpush.msra.mxu0 0.0
    %391 = vmatpush.msra.mxu0 0.0
    %392 = vmatpush.msra.mxu0 0.0
    %393 = vmatpush.msra.mxu0 0.0
    %394 = vmatpush.msra.mxu0 0.0
    %395 = vmatpush.msra.mxu0 0.0
    %396 = vmatpush.msra.mxu0 0.0
    %397 = vmatpush.msra.mxu0 0.0
    %398 = vmatpush.msra.mxu0 0.0
    %399 = vmatpush.msra.mxu0 0.0
    %400 = vmatpush.msra.mxu0 0.0
    %401 = vmatpush.msra.mxu0 0.0
    %402 = vmatpush.msra.mxu0 0.0
    %403 = vmatpush.msra.mxu0 0.0
    %404 = vmatpush.msra.mxu0 0.0
    %v405 = vand.u32 %v207, 4294901760
    %406 = vmatpush.msra.mxu0 %v405
    %v407 = vand.u32 %v312, 4294901760
    %v408 = vsub.f32 %v312, %v407
    %v409 = vand.u32 %v408, 4294901760
    %410 = vmatmul.f32.gmra.mxu0 %v409
    %v411 = vpop.f32.mrf.mxu0
    %v412 = vadd.f32 %v388, %v411
    %413 = vdwg.mxu0
    %414 = vmatpush.msra.mxu0 0.0
    %415 = vmatpush.msra.mxu0 0.0
    %416 = vmatpush.msra.mxu0 0.0
    %417 = vmatpush.msra.mxu0 0.0
    %418 = vmatpush.msra.mxu0 0.0
    %419 = vmatpush.msra.mxu0 0.0
    %420 = vmatpush.msra.mxu0 0.0
    %421 = vmatpush.msra.mxu0 0.0
    %422 = vmatpush.msra.mxu0 0.0
    %423 = vmatpush.msra.mxu0 0.0
    %424 = vmatpush.msra.mxu0 0.0
    %425 = vmatpush.msra.mxu0 0.0
    %426 = vmatpush.msra.mxu0 0.0
    %427 = vmatpush.msra.mxu0 0.0
    %428 = vmatpush.msra.mxu0 0.0
    %v429 = vand.u32 %v207, 4294901760
    %v430 = vsub.f32 %v207, %v429
    %v431 = vand.u32 %v430, 4294901760
    %432 = vmatpush.msra.mxu0 %v431
    %v433 = vand.u32 %v312, 4294901760
    %434 = vmatmul.f32.gmra.mxu0 %v433
    %v435 = vpop.f32.mrf.mxu0
    %v436 = vadd.f32 %v412, %v435
    %437 = vdwg.mxu0
    %438 = vmatpush.msra.mxu0 0.0
    %439 = vmatpush.msra.mxu0 0.0
    %440 = vmatpush.msra.mxu0 0.0
    %441 = vmatpush.msra.mxu0 0.0
    %442 = vmatpush.msra.mxu0 0.0
    %443 = vmatpush.msra.mxu0 0.0
    %444 = vmatpush.msra.mxu0 0.0
    %445 = vmatpush.msra.mxu0 0.0
    %446 = vmatpush.msra.mxu0 0.0
    %447 = vmatpush.msra.mxu0 0.0
    %448 = vmatpush.msra.mxu0 0.0
    %449 = vmatpush.msra.mxu0 0.0
    %450 = vmatpush.msra.mxu0 0.0
    %451 = vmatpush.msra.mxu0 0.0
    %452 = vmatpush.msra.mxu0 0.0
    %v453 = vand.u32 %v207, 4294901760
    %454 = vmatpush.msra.mxu0 %v453
    %v455 = vand.u32 %v312, 4294901760
    %456 = vmatmul.f32.gmra.mxu0 %v455
    %v457 = vpop.f32.mrf.mxu0
    %v458 = vadd.f32 %v436, %v457
    %459 = vdwg.mxu0
    %v460 = vmax.f32 %v458, 0.0
    %v461 = vsub.f32 0.0, %v460
    %v462 = vmul.f32 %v461, 1.442695
    %v463 = vpow.pop %v462
    %v464 = vadd.f32 %v463, 1.0
    %v465 = vrcp.pop %v464
    %v466 = vmul.f32 %v464, %v465
    %v467 = vsub.f32 1.0, %v466
    %v468 = vmul.f32 %v465, %v467
    %v469 = vadd.f32 %v465, %v468
    %vm470 = vweird.f32 %v464
    %vm471 = vweird.f32 %v465
    %vm472 = vmor %vm470, %vm471
    %v473 = vsel %vm472, %v465, %v469
    %v474 = vand.u32 2147483647, %v464
    %vm475 = vcmp.eq.f32.partialorder %v474, 8.507059e+37
    %v476 = vand.u32 %v464, 2147483648
    %v477 = vor.u32 1.1754944e-38, %v476
    %v478 = vsel %vm475, %v477, %v473
    %v479 = vmul.f32 1.0, %v478
    %v481 = vperm.slane %v210, 0
    %483 = vmatpush.msra.mxu0 0.0
    %484 = vmatpush.msra.mxu0 0.0
    %485 = vmatpush.msra.mxu0 0.0
    %486 = vmatpush.msra.mxu0 0.0
    %487 = vmatpush.msra.mxu0 0.0
    %488 = vmatpush.msra.mxu0 0.0
    %489 = vmatpush.msra.mxu0 0.0
    %490 = vmatpush.msra.mxu0 0.0
    %491 = vmatpush.msra.mxu0 0.0
    %492 = vmatpush.msra.mxu0 0.0
    %493 = vmatpush.msra.mxu0 0.0
    %494 = vmatpush.msra.mxu0 0.0
    %495 = vmatpush.msra.mxu0 0.0
    %496 = vmatpush.msra.mxu0 0.0
    %497 = vmatpush.msra.mxu0 0.0
    %v498 = vand.u32 %v209, 4294901760
    %499 = vmatpush.msra.mxu0 %v498
    %v500 = vand.u32 %v312, 4294901760
    %v501 = vsub.f32 %v312, %v500
    %v502 = vand.u32 %v501, 4294901760
    %v503 = vsub.f32 %v501, %v502
    %v504 = vand.u32 %v503, 4294901760
    %505 = vmatmul.f32.gmra.mxu0 %v504
    %v506 = vpop.f32.mrf.mxu0
    %v507 = vadd.f32 %v481, %v506
    %508 = vdwg.mxu0
    %509 = vmatpush.msra.mxu0 0.0
    %510 = vmatpush.msra.mxu0 0.0
    %511 = vmatpush.msra.mxu0 0.0
    %512 = vmatpush.msra.mxu0 0.0
    %513 = vmatpush.msra.mxu0 0.0
    %514 = vmatpush.msra.mxu0 0.0
    %515 = vmatpush.msra.mxu0 0.0
    %516 = vmatpush.msra.mxu0 0.0
    %517 = vmatpush.msra.mxu0 0.0
    %518 = vmatpush.msra.mxu0 0.0
    %519 = vmatpush.msra.mxu0 0.0
    %520 = vmatpush.msra.mxu0 0.0
    %521 = vmatpush.msra.mxu0 0.0
    %522 = vmatpush.msra.mxu0 0.0
    %523 = vmatpush.msra.mxu0 0.0
    %v524 = vand.u32 %v209, 4294901760
    %v525 = vsub.f32 %v209, %v524
    %v526 = vand.u32 %v525, 4294901760
    %v527 = vsub.f32 %v525, %v526
    %v528 = vand.u32 %v527, 4294901760
    %529 = vmatpush.msra.mxu0 %v528
    %v530 = vand.u32 %v312, 4294901760
    %531 = vmatmul.f32.gmra.mxu0 %v530
    %v532 = vpop.f32.mrf.mxu0
    %v533 = vadd.f32 %v507, %v532
    %534 = vdwg.mxu0
    %535 = vmatpush.msra.mxu0 0.0
    %536 = vmatpush.msra.mxu0 0.0
    %537 = vmatpush.msra.mxu0 0.0
    %538 = vmatpush.msra.mxu0 0.0
    %539 = vmatpush.msra.mxu0 0.0
    %540 = vmatpush.msra.mxu0 0.0
    %541 = vmatpush.msra.mxu0 0.0
    %542 = vmatpush.msra.mxu0 0.0
    %543 = vmatpush.msra.mxu0 0.0
    %544 = vmatpush.msra.mxu0 0.0
    %545 = vmatpush.msra.mxu0 0.0
    %546 = vmatpush.msra.mxu0 0.0
    %547 = vmatpush.msra.mxu0 0.0
    %548 = vmatpush.msra.mxu0 0.0
    %549 = vmatpush.msra.mxu0 0.0
    %v550 = vand.u32 %v209, 4294901760
    %v551 = vsub.f32 %v209, %v550
    %552 = vmatpush.msra.mxu0 %v551
    %v553 = vand.u32 %v312, 4294901760
    %v554 = vsub.f32 %v312, %v553
    %555 = vmatmul.f32.gmra.mxu0 %v554
    %v556 = vpop.f32.mrf.mxu0
    %v557 = vadd.f32 %v533, %v556
    %558 = vdwg.mxu0
    %559 = vmatpush.msra.mxu0 0.0
    %560 = vmatpush.msra.mxu0 0.0
    %561 = vmatpush.msra.mxu0 0.0
    %562 = vmatpush.msra.mxu0 0.0
    %563 = vmatpush.msra.mxu0 0.0
    %564 = vmatpush.msra.mxu0 0.0
    %565 = vmatpush.msra.mxu0 0.0
    %566 = vmatpush.msra.mxu0 0.0
    %567 = vmatpush.msra.mxu0 0.0
    %568 = vmatpush.msra.mxu0 0.0
    %569 = vmatpush.msra.mxu0 0.0
    %570 = vmatpush.msra.mxu0 0.0
    %571 = vmatpush.msra.mxu0 0.0
    %572 = vmatpush.msra.mxu0 0.0
    %573 = vmatpush.msra.mxu0 0.0
    %v574 = vand.u32 %v209, 4294901760
    %575 = vmatpush.msra.mxu0 %v574
    %v576 = vand.u32 %v312, 4294901760
    %v577 = vsub.f32 %v312, %v576
    %v578 = vand.u32 %v577, 4294901760
    %579 = vmatmul.f32.gmra.mxu0 %v578
    %v580 = vpop.f32.mrf.mxu0
    %v581 = vadd.f32 %v557, %v580
    %582 = vdwg.mxu0
    %583 = vmatpush.msra.mxu0 0.0
    %584 = vmatpush.msra.mxu0 0.0
    %585 = vmatpush.msra.mxu0 0.0
    %586 = vmatpush.msra.mxu0 0.0
    %587 = vmatpush.msra.mxu0 0.0
    %588 = vmatpush.msra.mxu0 0.0
    %589 = vmatpush.msra.mxu0 0.0
    %590 = vmatpush.msra.mxu0 0.0
    %591 = vmatpush.msra.mxu0 0.0
    %592 = vmatpush.msra.mxu0 0.0
    %593 = vmatpush.msra.mxu0 0.0
    %594 = vmatpush.msra.mxu0 0.0
    %595 = vmatpush.msra.mxu0 0.0
    %596 = vmatpush.msra.mxu0 0.0
    %597 = vmatpush.msra.mxu0 0.0
    %v598 = vand.u32 %v209, 4294901760
    %v599 = vsub.f32 %v209, %v598
    %v600 = vand.u32 %v599, 4294901760
    %601 = vmatpush.msra.mxu0 %v600
    %v602 = vand.u32 %v312, 4294901760
    %603 = vmatmul.f32.gmra.mxu0 %v602
    %v604 = vpop.f32.mrf.mxu0
    %v605 = vadd.f32 %v581, %v604
    %606 = vdwg.mxu0
    %607 = vmatpush.msra.mxu0 0.0
    %608 = vmatpush.msra.mxu0 0.0
    %609 = vmatpush.msra.mxu0 0.0
    %610 = vmatpush.msra.mxu0 0.0
    %611 = vmatpush.msra.mxu0 0.0
    %612 = vmatpush.msra.mxu0 0.0
    %613 = vmatpush.msra.mxu0 0.0
    %614 = vmatpush.msra.mxu0 0.0
    %615 = vmatpush.msra.mxu0 0.0
    %616 = vmatpush.msra.mxu0 0.0
    %617 = vmatpush.msra.mxu0 0.0
    %618 = vmatpush.msra.mxu0 0.0
    %619 = vmatpush.msra.mxu0 0.0
    %620 = vmatpush.msra.mxu0 0.0
    %621 = vmatpush.msra.mxu0 0.0
    %v622 = vand.u32 %v209, 4294901760
    %623 = vmatpush.msra.mxu0 %v622
    %v624 = vand.u32 %v312, 4294901760
    %625 = vmatmul.f32.gmra.mxu0 %v624
    %v626 = vpop.f32.mrf.mxu0
    %v627 = vadd.f32 %v605, %v626
    %628 = vdwg.mxu0
    %v629 = vmax.f32 %v627, 0.0
    %v630 = vmul.f32 %v206, %v479
    %v631 = vadd.f32 %v630, %v629
    %v633 = vperm.slane %v213, 0
    %vm635 = vcmask 130048
    %v637 = vsel %vm635, %v631, 0
    %639 = vmatpush.msra.mxu0 0.0
    %640 = vmatpush.msra.mxu0 0.0
    %641 = vmatpush.msra.mxu0 0.0
    %642 = vmatpush.msra.mxu0 0.0
    %643 = vmatpush.msra.mxu0 0.0
    %644 = vmatpush.msra.mxu0 0.0
    %645 = vmatpush.msra.mxu0 0.0
    %646 = vmatpush.msra.mxu0 0.0
    %647 = vmatpush.msra.mxu0 0.0
    %648 = vmatpush.msra.mxu0 0.0
    %649 = vmatpush.msra.mxu0 0.0
    %650 = vmatpush.msra.mxu0 0.0
    %651 = vmatpush.msra.mxu0 0.0
    %652 = vmatpush.msra.mxu0 0.0
    %v653 = vand.u32 %v212, 4294901760
    %654 = vmatpush.msra.mxu0 %v653
    %v655 = vand.u32 %v211, 4294901760
    %656 = vmatpush.msra.mxu0 %v655
    %v657 = vand.u32 %v637, 4294901760
    %v658 = vsub.f32 %v637, %v657
    %v659 = vand.u32 %v658, 4294901760
    %v660 = vsub.f32 %v658, %v659
    %v661 = vand.u32 %v660, 4294901760
    %662 = vmatmul.f32.gmra.mxu0 %v661
    %v663 = vpop.f32.mrf.mxu0
    %v664 = vadd.f32 %v633, %v663
    %665 = vdwg.mxu0
    %666 = vmatpush.msra.mxu0 0.0
    %667 = vmatpush.msra.mxu0 0.0
    %668 = vmatpush.msra.mxu0 0.0
    %669 = vmatpush.msra.mxu0 0.0
    %670 = vmatpush.msra.mxu0 0.0
    %671 = vmatpush.msra.mxu0 0.0
    %672 = vmatpush.msra.mxu0 0.0
    %673 = vmatpush.msra.mxu0 0.0
    %674 = vmatpush.msra.mxu0 0.0
    %675 = vmatpush.msra.mxu0 0.0
    %676 = vmatpush.msra.mxu0 0.0
    %677 = vmatpush.msra.mxu0 0.0
    %678 = vmatpush.msra.mxu0 0.0
    %679 = vmatpush.msra.mxu0 0.0
    %v680 = vand.u32 %v212, 4294901760
    %v681 = vsub.f32 %v212, %v680
    %v682 = vand.u32 %v681, 4294901760
    %v683 = vsub.f32 %v681, %v682
    %v684 = vand.u32 %v683, 4294901760
    %685 = vmatpush.msra.mxu0 %v684
    %v686 = vand.u32 %v211, 4294901760
    %v687 = vsub.f32 %v211, %v686
    %v688 = vand.u32 %v687, 4294901760
    %v689 = vsub.f32 %v687, %v688
    %v690 = vand.u32 %v689, 4294901760
    %691 = vmatpush.msra.mxu0 %v690
    %v692 = vand.u32 %v637, 4294901760
    %693 = vmatmul.f32.gmra.mxu0 %v692
    %v694 = vpop.f32.mrf.mxu0
    %v695 = vadd.f32 %v664, %v694
    %696 = vdwg.mxu0
    %697 = vmatpush.msra.mxu0 0.0
    %698 = vmatpush.msra.mxu0 0.0
    %699 = vmatpush.msra.mxu0 0.0
    %700 = vmatpush.msra.mxu0 0.0
    %701 = vmatpush.msra.mxu0 0.0
    %702 = vmatpush.msra.mxu0 0.0
    %703 = vmatpush.msra.mxu0 0.0
    %704 = vmatpush.msra.mxu0 0.0
    %705 = vmatpush.msra.mxu0 0.0
    %706 = vmatpush.msra.mxu0 0.0
    %707 = vmatpush.msra.mxu0 0.0
    %708 = vmatpush.msra.mxu0 0.0
    %709 = vmatpush.msra.mxu0 0.0
    %710 = vmatpush.msra.mxu0 0.0
    %v711 = vand.u32 %v212, 4294901760
    %v712 = vsub.f32 %v212, %v711
    %713 = vmatpush.msra.mxu0 %v712
    %v714 = vand.u32 %v211, 4294901760
    %v715 = vsub.f32 %v211, %v714
    %716 = vmatpush.msra.mxu0 %v715
    %v717 = vand.u32 %v637, 4294901760
    %v718 = vsub.f32 %v637, %v717
    %719 = vmatmul.f32.gmra.mxu0 %v718
    %v720 = vpop.f32.mrf.mxu0
    %v721 = vadd.f32 %v695, %v720
    %722 = vdwg.mxu0
    %723 = vmatpush.msra.mxu0 0.0
    %724 = vmatpush.msra.mxu0 0.0
    %725 = vmatpush.msra.mxu0 0.0
    %726 = vmatpush.msra.mxu0 0.0
    %727 = vmatpush.msra.mxu0 0.0
    %728 = vmatpush.msra.mxu0 0.0
    %729 = vmatpush.msra.mxu0 0.0
    %730 = vmatpush.msra.mxu0 0.0
    %731 = vmatpush.msra.mxu0 0.0
    %732 = vmatpush.msra.mxu0 0.0
    %733 = vmatpush.msra.mxu0 0.0
    %734 = vmatpush.msra.mxu0 0.0
    %735 = vmatpush.msra.mxu0 0.0
    %736 = vmatpush.msra.mxu0 0.0
    %v737 = vand.u32 %v212, 4294901760
    %738 = vmatpush.msra.mxu0 %v737
    %v739 = vand.u32 %v211, 4294901760
    %740 = vmatpush.msra.mxu0 %v739
    %v741 = vand.u32 %v637, 4294901760
    %v742 = vsub.f32 %v637, %v741
    %v743 = vand.u32 %v742, 4294901760
    %744 = vmatmul.f32.gmra.mxu0 %v743
    %v745 = vpop.f32.mrf.mxu0
    %v746 = vadd.f32 %v721, %v745
    %747 = vdwg.mxu0
    %748 = vmatpush.msra.mxu0 0.0
    %749 = vmatpush.msra.mxu0 0.0
    %750 = vmatpush.msra.mxu0 0.0
    %751 = vmatpush.msra.mxu0 0.0
    %752 = vmatpush.msra.mxu0 0.0
    %753 = vmatpush.msra.mxu0 0.0
    %754 = vmatpush.msra.mxu0 0.0
    %755 = vmatpush.msra.mxu0 0.0
    %756 = vmatpush.msra.mxu0 0.0
    %757 = vmatpush.msra.mxu0 0.0
    %758 = vmatpush.msra.mxu0 0.0
    %759 = vmatpush.msra.mxu0 0.0
    %760 = vmatpush.msra.mxu0 0.0
    %761 = vmatpush.msra.mxu0 0.0
    %v762 = vand.u32 %v212, 4294901760
    %v763 = vsub.f32 %v212, %v762
    %v764 = vand.u32 %v763, 4294901760
    %765 = vmatpush.msra.mxu0 %v764
    %v766 = vand.u32 %v211, 4294901760
    %v767 = vsub.f32 %v211, %v766
    %v768 = vand.u32 %v767, 4294901760
    %769 = vmatpush.msra.mxu0 %v768
    %v770 = vand.u32 %v637, 4294901760
    %771 = vmatmul.f32.gmra.mxu0 %v770
    %v772 = vpop.f32.mrf.mxu0
    %v773 = vadd.f32 %v746, %v772
    %774 = vdwg.mxu0
    %775 = vmatpush.msra.mxu0 0.0
    %776 = vmatpush.msra.mxu0 0.0
    %777 = vmatpush.msra.mxu0 0.0
    %778 = vmatpush.msra.mxu0 0.0
    %779 = vmatpush.msra.mxu0 0.0
    %780 = vmatpush.msra.mxu0 0.0
    %781 = vmatpush.msra.mxu0 0.0
    %782 = vmatpush.msra.mxu0 0.0
    %783 = vmatpush.msra.mxu0 0.0
    %784 = vmatpush.msra.mxu0 0.0
    %785 = vmatpush.msra.mxu0 0.0
    %786 = vmatpush.msra.mxu0 0.0
    %787 = vmatpush.msra.mxu0 0.0
    %788 = vmatpush.msra.mxu0 0.0
    %v789 = vand.u32 %v212, 4294901760
    %790 = vmatpush.msra.mxu0 %v789
    %v791 = vand.u32 %v211, 4294901760
    %792 = vmatpush.msra.mxu0 %v791
    %v793 = vand.u32 %v637, 4294901760
    %794 = vmatmul.f32.gmra.mxu0 %v793
    %v795 = vpop.f32.mrf.mxu0
    %v796 = vadd.f32 %v773, %v795
    %797 = vdwg.mxu0
    %v798 = vmax.f32 %v796, 0.0
    %v800 = vperm.slane %v222, 0
    %vm802 = vcmask 523264
    %v804 = vsel %vm802, %v798, 0
    %806 = vmatpush.msra.mxu0 0.0
    %807 = vmatpush.msra.mxu0 0.0
    %808 = vmatpush.msra.mxu0 0.0
    %809 = vmatpush.msra.mxu0 0.0
    %810 = vmatpush.msra.mxu0 0.0
    %811 = vmatpush.msra.mxu0 0.0
    %812 = vmatpush.msra.mxu0 0.0
    %813 = vmatpush.msra.mxu0 0.0
    %v814 = vand.u32 %v221, 4294901760
    %815 = vmatpush.msra.mxu0 %v814
    %v816 = vand.u32 %v220, 4294901760
    %817 = vmatpush.msra.mxu0 %v816
    %v818 = vand.u32 %v219, 4294901760
    %819 = vmatpush.msra.mxu0 %v818
    %v820 = vand.u32 %v218, 4294901760
    %821 = vmatpush.msra.mxu0 %v820
    %v822 = vand.u32 %v217, 4294901760
    %823 = vmatpush.msra.mxu0 %v822
    %v824 = vand.u32 %v216, 4294901760
    %825 = vmatpush.msra.mxu0 %v824
    %v826 = vand.u32 %v215, 4294901760
    %827 = vmatpush.msra.mxu0 %v826
    %v828 = vand.u32 %v214, 4294901760
    %829 = vmatpush.msra.mxu0 %v828
    %v830 = vand.u32 %v804, 4294901760
    %v831 = vsub.f32 %v804, %v830
    %v832 = vand.u32 %v831, 4294901760
    %v833 = vsub.f32 %v831, %v832
    %v834 = vand.u32 %v833, 4294901760
    %835 = vmatmul.f32.gmra.mxu0 %v834
    %v836 = vpop.f32.mrf.mxu0
    %v837 = vadd.f32 %v800, %v836
    %838 = vdwg.mxu0
    %839 = vmatpush.msra.mxu0 0.0
    %840 = vmatpush.msra.mxu0 0.0
    %841 = vmatpush.msra.mxu0 0.0
    %842 = vmatpush.msra.mxu0 0.0
    %843 = vmatpush.msra.mxu0 0.0
    %844 = vmatpush.msra.mxu0 0.0
    %845 = vmatpush.msra.mxu0 0.0
    %846 = vmatpush.msra.mxu0 0.0
    %v847 = vand.u32 %v221, 4294901760
    %v848 = vsub.f32 %v221, %v847
    %v849 = vand.u32 %v848, 4294901760
    %v850 = vsub.f32 %v848, %v849
    %v851 = vand.u32 %v850, 4294901760
    %852 = vmatpush.msra.mxu0 %v851
    %v853 = vand.u32 %v220, 4294901760
    %v854 = vsub.f32 %v220, %v853
    %v855 = vand.u32 %v854, 4294901760
    %v856 = vsub.f32 %v854, %v855
    %v857 = vand.u32 %v856, 4294901760
    %858 = vmatpush.msra.mxu0 %v857
    %v859 = vand.u32 %v219, 4294901760
    %v860 = vsub.f32 %v219, %v859
    %v861 = vand.u32 %v860, 4294901760
    %v862 = vsub.f32 %v860, %v861
    %v863 = vand.u32 %v862, 4294901760
    %864 = vmatpush.msra.mxu0 %v863
    %v865 = vand.u32 %v218, 4294901760
    %v866 = vsub.f32 %v218, %v865
    %v867 = vand.u32 %v866, 4294901760
    %v868 = vsub.f32 %v866, %v867
    %v869 = vand.u32 %v868, 4294901760
    %870 = vmatpush.msra.mxu0 %v869
    %v871 = vand.u32 %v217, 4294901760
    %v872 = vsub.f32 %v217, %v871
    %v873 = vand.u32 %v872, 4294901760
    %v874 = vsub.f32 %v872, %v873
    %v875 = vand.u32 %v874, 4294901760
    %876 = vmatpush.msra.mxu0 %v875
    %v877 = vand.u32 %v216, 4294901760
    %v878 = vsub.f32 %v216, %v877
    %v879 = vand.u32 %v878, 4294901760
    %v880 = vsub.f32 %v878, %v879
    %v881 = vand.u32 %v880, 4294901760
    %882 = vmatpush.msra.mxu0 %v881
    %v883 = vand.u32 %v215, 4294901760
    %v884 = vsub.f32 %v215, %v883
    %v885 = vand.u32 %v884, 4294901760
    %v886 = vsub.f32 %v884, %v885
    %v887 = vand.u32 %v886, 4294901760
    %888 = vmatpush.msra.mxu0 %v887
    %v889 = vand.u32 %v214, 4294901760
    %v890 = vsub.f32 %v214, %v889
    %v891 = vand.u32 %v890, 4294901760
    %v892 = vsub.f32 %v890, %v891
    %v893 = vand.u32 %v892, 4294901760
    %894 = vmatpush.msra.mxu0 %v893
    %v895 = vand.u32 %v804, 4294901760
    %896 = vmatmul.f32.gmra.mxu0 %v895
    %v897 = vpop.f32.mrf.mxu0
    %v898 = vadd.f32 %v837, %v897
    %899 = vdwg.mxu0
    %900 = vmatpush.msra.mxu0 0.0
    %901 = vmatpush.msra.mxu0 0.0
    %902 = vmatpush.msra.mxu0 0.0
    %903 = vmatpush.msra.mxu0 0.0
    %904 = vmatpush.msra.mxu0 0.0
    %905 = vmatpush.msra.mxu0 0.0
    %906 = vmatpush.msra.mxu0 0.0
    %907 = vmatpush.msra.mxu0 0.0
    %v908 = vand.u32 %v221, 4294901760
    %v909 = vsub.f32 %v221, %v908
    %910 = vmatpush.msra.mxu0 %v909
    %v911 = vand.u32 %v220, 4294901760
    %v912 = vsub.f32 %v220, %v911
    %913 = vmatpush.msra.mxu0 %v912
    %v914 = vand.u32 %v219, 4294901760
    %v915 = vsub.f32 %v219, %v914
    %916 = vmatpush.msra.mxu0 %v915
    %v917 = vand.u32 %v218, 4294901760
    %v918 = vsub.f32 %v218, %v917
    %919 = vmatpush.msra.mxu0 %v918
    %v920 = vand.u32 %v217, 4294901760
    %v921 = vsub.f32 %v217, %v920
    %922 = vmatpush.msra.mxu0 %v921
    %v923 = vand.u32 %v216, 4294901760
    %v924 = vsub.f32 %v216, %v923
    %925 = vmatpush.msra.mxu0 %v924
    %v926 = vand.u32 %v215, 4294901760
    %v927 = vsub.f32 %v215, %v926
    %928 = vmatpush.msra.mxu0 %v927
    %v929 = vand.u32 %v214, 4294901760
    %v930 = vsub.f32 %v214, %v929
    %931 = vmatpush.msra.mxu0 %v930
    %v932 = vand.u32 %v804, 4294901760
    %v933 = vsub.f32 %v804, %v932
    %934 = vmatmul.f32.gmra.mxu0 %v933
    %v935 = vpop.f32.mrf.mxu0
    %v936 = vadd.f32 %v898, %v935
    %937 = vdwg.mxu0
    %938 = vmatpush.msra.mxu0 0.0
    %939 = vmatpush.msra.mxu0 0.0
    %940 = vmatpush.msra.mxu0 0.0
    %941 = vmatpush.msra.mxu0 0.0
    %942 = vmatpush.msra.mxu0 0.0
    %943 = vmatpush.msra.mxu0 0.0
    %944 = vmatpush.msra.mxu0 0.0
    %945 = vmatpush.msra.mxu0 0.0
    %v946 = vand.u32 %v221, 4294901760
    %947 = vmatpush.msra.mxu0 %v946
    %v948 = vand.u32 %v220, 4294901760
    %949 = vmatpush.msra.mxu0 %v948
    %v950 = vand.u32 %v219, 4294901760
    %951 = vmatpush.msra.mxu0 %v950
    %v952 = vand.u32 %v218, 4294901760
    %953 = vmatpush.msra.mxu0 %v952
    %v954 = vand.u32 %v217, 4294901760
    %955 = vmatpush.msra.mxu0 %v954
    %v956 = vand.u32 %v216, 4294901760
    %957 = vmatpush.msra.mxu0 %v956
    %v958 = vand.u32 %v215, 4294901760
    %959 = vmatpush.msra.mxu0 %v958
    %v960 = vand.u32 %v214, 4294901760
    %961 = vmatpush.msra.mxu0 %v960
    %v962 = vand.u32 %v804, 4294901760
    %v963 = vsub.f32 %v804, %v962
    %v964 = vand.u32 %v963, 4294901760
    %965 = vmatmul.f32.gmra.mxu0 %v964
    %v966 = vpop.f32.mrf.mxu0
    %v967 = vadd.f32 %v936, %v966
    %968 = vdwg.mxu0
    %969 = vmatpush.msra.mxu0 0.0
    %970 = vmatpush.msra.mxu0 0.0
    %971 = vmatpush.msra.mxu0 0.0
    %972 = vmatpush.msra.mxu0 0.0
    %973 = vmatpush.msra.mxu0 0.0
    %974 = vmatpush.msra.mxu0 0.0
    %975 = vmatpush.msra.mxu0 0.0
    %976 = vmatpush.msra.mxu0 0.0
    %v977 = vand.u32 %v221, 4294901760
    %v978 = vsub.f32 %v221, %v977
    %v979 = vand.u32 %v978, 4294901760
    %980 = vmatpush.msra.mxu0 %v979
    %v981 = vand.u32 %v220, 4294901760
    %v982 = vsub.f32 %v220, %v981
    %v983 = vand.u32 %v982, 4294901760
    %984 = vmatpush.msra.mxu0 %v983
    %v985 = vand.u32 %v219, 4294901760
    %v986 = vsub.f32 %v219, %v985
    %v987 = vand.u32 %v986, 4294901760
    %988 = vmatpush.msra.mxu0 %v987
    %v989 = vand.u32 %v218, 4294901760
    %v990 = vsub.f32 %v218, %v989
    %v991 = vand.u32 %v990, 4294901760
    %992 = vmatpush.msra.mxu0 %v991
    %v993 = vand.u32 %v217, 4294901760
    %v994 = vsub.f32 %v217, %v993
    %v995 = vand.u32 %v994, 4294901760
    %996 = vmatpush.msra.mxu0 %v995
    %v997 = vand.u32 %v216, 4294901760
    %v998 = vsub.f32 %v216, %v997
    %v999 = vand.u32 %v998, 4294901760
    %1000 = vmatpush.msra.mxu0 %v999
    %v1001 = vand.u32 %v215, 4294901760
    %v1002 = vsub.f32 %v215, %v1001
    %v1003 = vand.u32 %v1002, 4294901760
    %1004 = vmatpush.msra.mxu0 %v1003
    %v1005 = vand.u32 %v214, 4294901760
    %v1006 = vsub.f32 %v214, %v1005
    %v1007 = vand.u32 %v1006, 4294901760
    %1008 = vmatpush.msra.mxu0 %v1007
    %v1009 = vand.u32 %v804, 4294901760
    %1010 = vmatmul.f32.gmra.mxu0 %v1009
    %v1011 = vpop.f32.mrf.mxu0
    %v1012 = vadd.f32 %v967, %v1011
    %1013 = vdwg.mxu0
    %1014 = vmatpush.msra.mxu0 0.0
    %1015 = vmatpush.msra.mxu0 0.0
    %1016 = vmatpush.msra.mxu0 0.0
    %1017 = vmatpush.msra.mxu0 0.0
    %1018 = vmatpush.msra.mxu0 0.0
    %1019 = vmatpush.msra.mxu0 0.0
    %1020 = vmatpush.msra.mxu0 0.0
    %1021 = vmatpush.msra.mxu0 0.0
    %v1022 = vand.u32 %v221, 4294901760
    %1023 = vmatpush.msra.mxu0 %v1022
    %v1024 = vand.u32 %v220, 4294901760
    %1025 = vmatpush.msra.mxu0 %v1024
    %v1026 = vand.u32 %v219, 4294901760
    %1027 = vmatpush.msra.mxu0 %v1026
    %v1028 = vand.u32 %v218, 4294901760
    %1029 = vmatpush.msra.mxu0 %v1028
    %v1030 = vand.u32 %v217, 4294901760
    %1031 = vmatpush.msra.mxu0 %v1030
    %v1032 = vand.u32 %v216, 4294901760
    %1033 = vmatpush.msra.mxu0 %v1032
    %v1034 = vand.u32 %v215, 4294901760
    %1035 = vmatpush.msra.mxu0 %v1034
    %v1036 = vand.u32 %v214, 4294901760
    %1037 = vmatpush.msra.mxu0 %v1036
    %v1038 = vand.u32 %v804, 4294901760
    %1039 = vmatmul.f32.gmra.mxu0 %v1038
    %v1040 = vpop.f32.mrf.mxu0
    %v1041 = vadd.f32 %v1012, %v1040
    %1042 = vdwg.mxu0
    %v1043 = vmax.f32 %v1041, 0.0
    %v1045 = vperm.slane %v239, 0
    %v1047 = vand.u32 %v238, 4294901760
    %1048 = vmatpush.msra.mxu0 %v1047
    %v1049 = vand.u32 %v237, 4294901760
    %1050 = vmatpush.msra.mxu0 %v1049
    %v1051 = vand.u32 %v236, 4294901760
    %1052 = vmatpush.msra.mxu0 %v1051
    %v1053 = vand.u32 %v235, 4294901760
    %1054 = vmatpush.msra.mxu0 %v1053
    %v1055 = vand.u32 %v234, 4294901760
    %1056 = vmatpush.msra.mxu0 %v1055
    %v1057 = vand.u32 %v233, 4294901760
    %1058 = vmatpush.msra.mxu0 %v1057
    %v1059 = vand.u32 %v232, 4294901760
    %1060 = vmatpush.msra.mxu0 %v1059
    %v1061 = vand.u32 %v231, 4294901760
    %1062 = vmatpush.msra.mxu0 %v1061
    %v1063 = vand.u32 %v230, 4294901760
    %1064 = vmatpush.msra.mxu0 %v1063
    %v1065 = vand.u32 %v229, 4294901760
    %1066 = vmatpush.msra.mxu0 %v1065
    %v1067 = vand.u32 %v228, 4294901760
    %1068 = vmatpush.msra.mxu0 %v1067
    %v1069 = vand.u32 %v227, 4294901760
    %1070 = vmatpush.msra.mxu0 %v1069
    %v1071 = vand.u32 %v226, 4294901760
    %1072 = vmatpush.msra.mxu0 %v1071
    %v1073 = vand.u32 %v225, 4294901760
    %1074 = vmatpush.msra.mxu0 %v1073
    %v1075 = vand.u32 %v224, 4294901760
    %1076 = vmatpush.msra.mxu0 %v1075
    %v1077 = vand.u32 %v223, 4294901760
    %1078 = vmatpush.msra.mxu0 %v1077
    %v1079 = vand.u32 %v1043, 4294901760
    %v1080 = vsub.f32 %v1043, %v1079
    %v1081 = vand.u32 %v1080, 4294901760
    %v1082 = vsub.f32 %v1080, %v1081
    %v1083 = vand.u32 %v1082, 4294901760
    %1084 = vmatmul.f32.gmra.mxu0 %v1083
    %v1085 = vpop.f32.mrf.mxu0
    %v1086 = vadd.f32 %v1045, %v1085
    %1087 = vdwg.mxu0
    %v1088 = vand.u32 %v238, 4294901760
    %v1089 = vsub.f32 %v238, %v1088
    %v1090 = vand.u32 %v1089, 4294901760
    %v1091 = vsub.f32 %v1089, %v1090
    %v1092 = vand.u32 %v1091, 4294901760
    %1093 = vmatpush.msra.mxu0 %v1092
    %v1094 = vand.u32 %v237, 4294901760
    %v1095 = vsub.f32 %v237, %v1094
    %v1096 = vand.u32 %v1095, 4294901760
    %v1097 = vsub.f32 %v1095, %v1096
    %v1098 = vand.u32 %v1097, 4294901760
    %1099 = vmatpush.msra.mxu0 %v1098
    %v1100 = vand.u32 %v236, 4294901760
    %v1101 = vsub.f32 %v236, %v1100
    %v1102 = vand.u32 %v1101, 4294901760
    %v1103 = vsub.f32 %v1101, %v1102
    %v1104 = vand.u32 %v1103, 4294901760
    %1105 = vmatpush.msra.mxu0 %v1104
    %v1106 = vand.u32 %v235, 4294901760
    %v1107 = vsub.f32 %v235, %v1106
    %v1108 = vand.u32 %v1107, 4294901760
    %v1109 = vsub.f32 %v1107, %v1108
    %v1110 = vand.u32 %v1109, 4294901760
    %1111 = vmatpush.msra.mxu0 %v1110
    %v1112 = vand.u32 %v234, 4294901760
    %v1113 = vsub.f32 %v234, %v1112
    %v1114 = vand.u32 %v1113, 4294901760
    %v1115 = vsub.f32 %v1113, %v1114
    %v1116 = vand.u32 %v1115, 4294901760
    %1117 = vmatpush.msra.mxu0 %v1116
    %v1118 = vand.u32 %v233, 4294901760
    %v1119 = vsub.f32 %v233, %v1118
    %v1120 = vand.u32 %v1119, 4294901760
    %v1121 = vsub.f32 %v1119, %v1120
    %v1122 = vand.u32 %v1121, 4294901760
    %1123 = vmatpush.msra.mxu0 %v1122
    %v1124 = vand.u32 %v232, 4294901760
    %v1125 = vsub.f32 %v232, %v1124
    %v1126 = vand.u32 %v1125, 4294901760
    %v1127 = vsub.f32 %v1125, %v1126
    %v1128 = vand.u32 %v1127, 4294901760
    %1129 = vmatpush.msra.mxu0 %v1128
    %v1130 = vand.u32 %v231, 4294901760
    %v1131 = vsub.f32 %v231, %v1130
    %v1132 = vand.u32 %v1131, 4294901760
    %v1133 = vsub.f32 %v1131, %v1132
    %v1134 = vand.u32 %v1133, 4294901760
    %1135 = vmatpush.msra.mxu0 %v1134
    %v1136 = vand.u32 %v230, 4294901760
    %v1137 = vsub.f32 %v230, %v1136
    %v1138 = vand.u32 %v1137, 4294901760
    %v1139 = vsub.f32 %v1137, %v1138
    %v1140 = vand.u32 %v1139, 4294901760
    %1141 = vmatpush.msra.mxu0 %v1140
    %v1142 = vand.u32 %v229, 4294901760
    %v1143 = vsub.f32 %v229, %v1142
    %v1144 = vand.u32 %v1143, 4294901760
    %v1145 = vsub.f32 %v1143, %v1144
    %v1146 = vand.u32 %v1145, 4294901760
    %1147 = vmatpush.msra.mxu0 %v1146
    %v1148 = vand.u32 %v228, 4294901760
    %v1149 = vsub.f32 %v228, %v1148
    %v1150 = vand.u32 %v1149, 4294901760
    %v1151 = vsub.f32 %v1149, %v1150
    %v1152 = vand.u32 %v1151, 4294901760
    %1153 = vmatpush.msra.mxu0 %v1152
    %v1154 = vand.u32 %v227, 4294901760
    %v1155 = vsub.f32 %v227, %v1154
    %v1156 = vand.u32 %v1155, 4294901760
    %v1157 = vsub.f32 %v1155, %v1156
    %v1158 = vand.u32 %v1157, 4294901760
    %1159 = vmatpush.msra.mxu0 %v1158
    %v1160 = vand.u32 %v226, 4294901760
    %v1161 = vsub.f32 %v226, %v1160
    %v1162 = vand.u32 %v1161, 4294901760
    %v1163 = vsub.f32 %v1161, %v1162
    %v1164 = vand.u32 %v1163, 4294901760
    %1165 = vmatpush.msra.mxu0 %v1164
    %v1166 = vand.u32 %v225, 4294901760
    %v1167 = vsub.f32 %v225, %v1166
    %v1168 = vand.u32 %v1167, 4294901760
    %v1169 = vsub.f32 %v1167, %v1168
    %v1170 = vand.u32 %v1169, 4294901760
    %1171 = vmatpush.msra.mxu0 %v1170
    %v1172 = vand.u32 %v224, 4294901760
    %v1173 = vsub.f32 %v224, %v1172
    %v1174 = vand.u32 %v1173, 4294901760
    %v1175 = vsub.f32 %v1173, %v1174
    %v1176 = vand.u32 %v1175, 4294901760
    %1177 = vmatpush.msra.mxu0 %v1176
    %v1178 = vand.u32 %v223, 4294901760
    %v1179 = vsub.f32 %v223, %v1178
    %v1180 = vand.u32 %v1179, 4294901760
    %v1181 = vsub.f32 %v1179, %v1180
    %v1182 = vand.u32 %v1181, 4294901760
    %1183 = vmatpush.msra.mxu0 %v1182
    %v1184 = vand.u32 %v1043, 4294901760
    %1185 = vmatmul.f32.gmra.mxu0 %v1184
    %v1186 = vpop.f32.mrf.mxu0
    %v1187 = vadd.f32 %v1086, %v1186
    %1188 = vdwg.mxu0
    %v1189 = vand.u32 %v238, 4294901760
    %v1190 = vsub.f32 %v238, %v1189
    %1191 = vmatpush.msra.mxu0 %v1190
    %v1192 = vand.u32 %v237, 4294901760
    %v1193 = vsub.f32 %v237, %v1192
    %1194 = vmatpush.msra.mxu0 %v1193
    %v1195 = vand.u32 %v236, 4294901760
    %v1196 = vsub.f32 %v236, %v1195
    %1197 = vmatpush.msra.mxu0 %v1196
    %v1198 = vand.u32 %v235, 4294901760
    %v1199 = vsub.f32 %v235, %v1198
    %1200 = vmatpush.msra.mxu0 %v1199
    %v1201 = vand.u32 %v234, 4294901760
    %v1202 = vsub.f32 %v234, %v1201
    %1203 = vmatpush.msra.mxu0 %v1202
    %v1204 = vand.u32 %v233, 4294901760
    %v1205 = vsub.f32 %v233, %v1204
    %1206 = vmatpush.msra.mxu0 %v1205
    %v1207 = vand.u32 %v232, 4294901760
    %v1208 = vsub.f32 %v232, %v1207
    %1209 = vmatpush.msra.mxu0 %v1208
    %v1210 = vand.u32 %v231, 4294901760
    %v1211 = vsub.f32 %v231, %v1210
    %1212 = vmatpush.msra.mxu0 %v1211
    %v1213 = vand.u32 %v230, 4294901760
    %v1214 = vsub.f32 %v230, %v1213
    %1215 = vmatpush.msra.mxu0 %v1214
    %v1216 = vand.u32 %v229, 4294901760
    %v1217 = vsub.f32 %v229, %v1216
    %1218 = vmatpush.msra.mxu0 %v1217
    %v1219 = vand.u32 %v228, 4294901760
    %v1220 = vsub.f32 %v228, %v1219
    %1221 = vmatpush.msra.mxu0 %v1220
    %v1222 = vand.u32 %v227, 4294901760
    %v1223 = vsub.f32 %v227, %v1222
    %1224 = vmatpush.msra.mxu0 %v1223
    %v1225 = vand.u32 %v226, 4294901760
    %v1226 = vsub.f32 %v226, %v1225
    %1227 = vmatpush.msra.mxu0 %v1226
    %v1228 = vand.u32 %v225, 4294901760
    %v1229 = vsub.f32 %v225, %v1228
    %1230 = vmatpush.msra.mxu0 %v1229
    %v1231 = vand.u32 %v224, 4294901760
    %v1232 = vsub.f32 %v224, %v1231
    %1233 = vmatpush.msra.mxu0 %v1232
    %v1234 = vand.u32 %v223, 4294901760
    %v1235 = vsub.f32 %v223, %v1234
    %1236 = vmatpush.msra.mxu0 %v1235
    %v1237 = vand.u32 %v1043, 4294901760
    %v1238 = vsub.f32 %v1043, %v1237
    %1239 = vmatmul.f32.gmra.mxu0 %v1238
    %v1240 = vpop.f32.mrf.mxu0
    %v1241 = vadd.f32 %v1187, %v1240
    %1242 = vdwg.mxu0
    %v1243 = vand.u32 %v238, 4294901760
    %1244 = vmatpush.msra.mxu0 %v1243
    %v1245 = vand.u32 %v237, 4294901760
    %1246 = vmatpush.msra.mxu0 %v1245
    %v1247 = vand.u32 %v236, 4294901760
    %1248 = vmatpush.msra.mxu0 %v1247
    %v1249 = vand.u32 %v235, 4294901760
    %1250 = vmatpush.msra.mxu0 %v1249
    %v1251 = vand.u32 %v234, 4294901760
    %1252 = vmatpush.msra.mxu0 %v1251
    %v1253 = vand.u32 %v233, 4294901760
    %1254 = vmatpush.msra.mxu0 %v1253
    %v1255 = vand.u32 %v232, 4294901760
    %1256 = vmatpush.msra.mxu0 %v1255
    %v1257 = vand.u32 %v231, 4294901760
    %1258 = vmatpush.msra.mxu0 %v1257
    %v1259 = vand.u32 %v230, 4294901760
    %1260 = vmatpush.msra.mxu0 %v1259
    %v1261 = vand.u32 %v229, 4294901760
    %1262 = vmatpush.msra.mxu0 %v1261
    %v1263 = vand.u32 %v228, 4294901760
    %1264 = vmatpush.msra.mxu0 %v1263
    %v1265 = vand.u32 %v227, 4294901760
    %1266 = vmatpush.msra.mxu0 %v1265
    %v1267 = vand.u32 %v226, 4294901760
    %1268 = vmatpush.msra.mxu0 %v1267
    %v1269 = vand.u32 %v225, 4294901760
    %1270 = vmatpush.msra.mxu0 %v1269
    %v1271 = vand.u32 %v224, 4294901760
    %1272 = vmatpush.msra.mxu0 %v1271
    %v1273 = vand.u32 %v223, 4294901760
    %1274 = vmatpush.msra.mxu0 %v1273
    %v1275 = vand.u32 %v1043, 4294901760
    %v1276 = vsub.f32 %v1043, %v1275
    %v1277 = vand.u32 %v1276, 4294901760
    %1278 = vmatmul.f32.gmra.mxu0 %v1277
    %v1279 = vpop.f32.mrf.mxu0
    %v1280 = vadd.f32 %v1241, %v1279
    %1281 = vdwg.mxu0
    %v1282 = vand.u32 %v238, 4294901760
    %v1283 = vsub.f32 %v238, %v1282
    %v1284 = vand.u32 %v1283, 4294901760
    %1285 = vmatpush.msra.mxu0 %v1284
    %v1286 = vand.u32 %v237, 4294901760
    %v1287 = vsub.f32 %v237, %v1286
    %v1288 = vand.u32 %v1287, 4294901760
    %1289 = vmatpush.msra.mxu0 %v1288
    %v1290 = vand.u32 %v236, 4294901760
    %v1291 = vsub.f32 %v236, %v1290
    %v1292 = vand.u32 %v1291, 4294901760
    %1293 = vmatpush.msra.mxu0 %v1292
    %v1294 = vand.u32 %v235, 4294901760
    %v1295 = vsub.f32 %v235, %v1294
    %v1296 = vand.u32 %v1295, 4294901760
    %1297 = vmatpush.msra.mxu0 %v1296
    %v1298 = vand.u32 %v234, 4294901760
    %v1299 = vsub.f32 %v234, %v1298
    %v1300 = vand.u32 %v1299, 4294901760
    %1301 = vmatpush.msra.mxu0 %v1300
    %v1302 = vand.u32 %v233, 4294901760
    %v1303 = vsub.f32 %v233, %v1302
    %v1304 = vand.u32 %v1303, 4294901760
    %1305 = vmatpush.msra.mxu0 %v1304
    %v1306 = vand.u32 %v232, 4294901760
    %v1307 = vsub.f32 %v232, %v1306
    %v1308 = vand.u32 %v1307, 4294901760
    %1309 = vmatpush.msra.mxu0 %v1308
    %v1310 = vand.u32 %v231, 4294901760
    %v1311 = vsub.f32 %v231, %v1310
    %v1312 = vand.u32 %v1311, 4294901760
    %1313 = vmatpush.msra.mxu0 %v1312
    %v1314 = vand.u32 %v230, 4294901760
    %v1315 = vsub.f32 %v230, %v1314
    %v1316 = vand.u32 %v1315, 4294901760
    %1317 = vmatpush.msra.mxu0 %v1316
    %v1318 = vand.u32 %v229, 4294901760
    %v1319 = vsub.f32 %v229, %v1318
    %v1320 = vand.u32 %v1319, 4294901760
    %1321 = vmatpush.msra.mxu0 %v1320
    %v1322 = vand.u32 %v228, 4294901760
    %v1323 = vsub.f32 %v228, %v1322
    %v1324 = vand.u32 %v1323, 4294901760
    %1325 = vmatpush.msra.mxu0 %v1324
    %v1326 = vand.u32 %v227, 4294901760
    %v1327 = vsub.f32 %v227, %v1326
    %v1328 = vand.u32 %v1327, 4294901760
    %1329 = vmatpush.msra.mxu0 %v1328
    %v1330 = vand.u32 %v226, 4294901760
    %v1331 = vsub.f32 %v226, %v1330
    %v1332 = vand.u32 %v1331, 4294901760
    %1333 = vmatpush.msra.mxu0 %v1332
    %v1334 = vand.u32 %v225, 4294901760
    %v1335 = vsub.f32 %v225, %v1334
    %v1336 = vand.u32 %v1335, 4294901760
    %1337 = vmatpush.msra.mxu0 %v1336
    %v1338 = vand.u32 %v224, 4294901760
    %v1339 = vsub.f32 %v224, %v1338
    %v1340 = vand.u32 %v1339, 4294901760
    %1341 = vmatpush.msra.mxu0 %v1340
    %v1342 = vand.u32 %v223, 4294901760
    %v1343 = vsub.f32 %v223, %v1342
    %v1344 = vand.u32 %v1343, 4294901760
    %1345 = vmatpush.msra.mxu0 %v1344
    %v1346 = vand.u32 %v1043, 4294901760
    %1347 = vmatmul.f32.gmra.mxu0 %v1346
    %v1348 = vpop.f32.mrf.mxu0
    %v1349 = vadd.f32 %v1280, %v1348
    %1350 = vdwg.mxu0
    %v1351 = vand.u32 %v238, 4294901760
    %1352 = vmatpush.msra.mxu0 %v1351
    %v1353 = vand.u32 %v237, 4294901760
    %1354 = vmatpush.msra.mxu0 %v1353
    %v1355 = vand.u32 %v236, 4294901760
    %1356 = vmatpush.msra.mxu0 %v1355
    %v1357 = vand.u32 %v235, 4294901760
    %1358 = vmatpush.msra.mxu0 %v1357
    %v1359 = vand.u32 %v234, 4294901760
    %1360 = vmatpush.msra.mxu0 %v1359
    %v1361 = vand.u32 %v233, 4294901760
    %1362 = vmatpush.msra.mxu0 %v1361
    %v1363 = vand.u32 %v232, 4294901760
    %1364 = vmatpush.msra.mxu0 %v1363
    %v1365 = vand.u32 %v231, 4294901760
    %1366 = vmatpush.msra.mxu0 %v1365
    %v1367 = vand.u32 %v230, 4294901760
    %1368 = vmatpush.msra.mxu0 %v1367
    %v1369 = vand.u32 %v229, 4294901760
    %1370 = vmatpush.msra.mxu0 %v1369
    %v1371 = vand.u32 %v228, 4294901760
    %1372 = vmatpush.msra.mxu0 %v1371
    %v1373 = vand.u32 %v227, 4294901760
    %1374 = vmatpush.msra.mxu0 %v1373
    %v1375 = vand.u32 %v226, 4294901760
    %1376 = vmatpush.msra.mxu0 %v1375
    %v1377 = vand.u32 %v225, 4294901760
    %1378 = vmatpush.msra.mxu0 %v1377
    %v1379 = vand.u32 %v224, 4294901760
    %1380 = vmatpush.msra.mxu0 %v1379
    %v1381 = vand.u32 %v223, 4294901760
    %1382 = vmatpush.msra.mxu0 %v1381
    %v1383 = vand.u32 %v1043, 4294901760
    %1384 = vmatmul.f32.gmra.mxu0 %v1383
    %v1385 = vpop.f32.mrf.mxu0
    %v1386 = vadd.f32 %v1349, %v1385
    %1387 = vdwg.mxu0
    %v1388 = vmax.f32 %v1386, 0.0
    %v1390 = vperm.slane %v272, 0
    %v1391 = vperm.slane %v272, 1
    %v1394 = vand.u32 %v270, 4294901760
    %1395 = vmatpush.msra.mxu0 %v1394
    %v1396 = vand.u32 %v268, 4294901760
    %1397 = vmatpush.msra.mxu0 %v1396
    %v1398 = vand.u32 %v266, 4294901760
    %1399 = vmatpush.msra.mxu0 %v1398
    %v1400 = vand.u32 %v264, 4294901760
    %1401 = vmatpush.msra.mxu0 %v1400
    %v1402 = vand.u32 %v262, 4294901760
    %1403 = vmatpush.msra.mxu0 %v1402
    %v1404 = vand.u32 %v260, 4294901760
    %1405 = vmatpush.msra.mxu0 %v1404
    %v1406 = vand.u32 %v258, 4294901760
    %1407 = vmatpush.msra.mxu0 %v1406
    %v1408 = vand.u32 %v256, 4294901760
    %1409 = vmatpush.msra.mxu0 %v1408
    %v1410 = vand.u32 %v254, 4294901760
    %1411 = vmatpush.msra.mxu0 %v1410
    %v1412 = vand.u32 %v252, 4294901760
    %1413 = vmatpush.msra.mxu0 %v1412
    %v1414 = vand.u32 %v250, 4294901760
    %1415 = vmatpush.msra.mxu0 %v1414
    %v1416 = vand.u32 %v248, 4294901760
    %1417 = vmatpush.msra.mxu0 %v1416
    %v1418 = vand.u32 %v246, 4294901760
    %1419 = vmatpush.msra.mxu0 %v1418
    %v1420 = vand.u32 %v244, 4294901760
    %1421 = vmatpush.msra.mxu0 %v1420
    %v1422 = vand.u32 %v242, 4294901760
    %1423 = vmatpush.msra.mxu0 %v1422
    %v1424 = vand.u32 %v240, 4294901760
    %1425 = vmatpush.msra.mxu0 %v1424
    %v1426 = vand.u32 %v1388, 4294901760
    %v1427 = vsub.f32 %v1388, %v1426
    %v1428 = vand.u32 %v1427, 4294901760
    %v1429 = vsub.f32 %v1427, %v1428
    %v1430 = vand.u32 %v1429, 4294901760
    %1431 = vmatmul.f32.gmra.mxu0 %v1430
    %v1432 = vpop.f32.mrf.mxu0
    %v1433 = vadd.f32 %v1390, %v1432
    %1434 = vdwg.mxu0
    %v1435 = vand.u32 %v270, 4294901760
    %v1436 = vsub.f32 %v270, %v1435
    %v1437 = vand.u32 %v1436, 4294901760
    %v1438 = vsub.f32 %v1436, %v1437
    %v1439 = vand.u32 %v1438, 4294901760
    %1440 = vmatpush.msra.mxu0 %v1439
    %v1441 = vand.u32 %v268, 4294901760
    %v1442 = vsub.f32 %v268, %v1441
    %v1443 = vand.u32 %v1442, 4294901760
    %v1444 = vsub.f32 %v1442, %v1443
    %v1445 = vand.u32 %v1444, 4294901760
    %1446 = vmatpush.msra.mxu0 %v1445
    %v1447 = vand.u32 %v266, 4294901760
    %v1448 = vsub.f32 %v266, %v1447
    %v1449 = vand.u32 %v1448, 4294901760
    %v1450 = vsub.f32 %v1448, %v1449
    %v1451 = vand.u32 %v1450, 4294901760
    %1452 = vmatpush.msra.mxu0 %v1451
    %v1453 = vand.u32 %v264, 4294901760
    %v1454 = vsub.f32 %v264, %v1453
    %v1455 = vand.u32 %v1454, 4294901760
    %v1456 = vsub.f32 %v1454, %v1455
    %v1457 = vand.u32 %v1456, 4294901760
    %1458 = vmatpush.msra.mxu0 %v1457
    %v1459 = vand.u32 %v262, 4294901760
    %v1460 = vsub.f32 %v262, %v1459
    %v1461 = vand.u32 %v1460, 4294901760
    %v1462 = vsub.f32 %v1460, %v1461
    %v1463 = vand.u32 %v1462, 4294901760
    %1464 = vmatpush.msra.mxu0 %v1463
    %v1465 = vand.u32 %v260, 4294901760
    %v1466 = vsub.f32 %v260, %v1465
    %v1467 = vand.u32 %v1466, 4294901760
    %v1468 = vsub.f32 %v1466, %v1467
    %v1469 = vand.u32 %v1468, 4294901760
    %1470 = vmatpush.msra.mxu0 %v1469
    %v1471 = vand.u32 %v258, 4294901760
    %v1472 = vsub.f32 %v258, %v1471
    %v1473 = vand.u32 %v1472, 4294901760
    %v1474 = vsub.f32 %v1472, %v1473
    %v1475 = vand.u32 %v1474, 4294901760
    %1476 = vmatpush.msra.mxu0 %v1475
    %v1477 = vand.u32 %v256, 4294901760
    %v1478 = vsub.f32 %v256, %v1477
    %v1479 = vand.u32 %v1478, 4294901760
    %v1480 = vsub.f32 %v1478, %v1479
    %v1481 = vand.u32 %v1480, 4294901760
    %1482 = vmatpush.msra.mxu0 %v1481
    %v1483 = vand.u32 %v254, 4294901760
    %v1484 = vsub.f32 %v254, %v1483
    %v1485 = vand.u32 %v1484, 4294901760
    %v1486 = vsub.f32 %v1484, %v1485
    %v1487 = vand.u32 %v1486, 4294901760
    %1488 = vmatpush.msra.mxu0 %v1487
    %v1489 = vand.u32 %v252, 4294901760
    %v1490 = vsub.f32 %v252, %v1489
    %v1491 = vand.u32 %v1490, 4294901760
    %v1492 = vsub.f32 %v1490, %v1491
    %v1493 = vand.u32 %v1492, 4294901760
    %1494 = vmatpush.msra.mxu0 %v1493
    %v1495 = vand.u32 %v250, 4294901760
    %v1496 = vsub.f32 %v250, %v1495
    %v1497 = vand.u32 %v1496, 4294901760
    %v1498 = vsub.f32 %v1496, %v1497
    %v1499 = vand.u32 %v1498, 4294901760
    %1500 = vmatpush.msra.mxu0 %v1499
    %v1501 = vand.u32 %v248, 4294901760
    %v1502 = vsub.f32 %v248, %v1501
    %v1503 = vand.u32 %v1502, 4294901760
    %v1504 = vsub.f32 %v1502, %v1503
    %v1505 = vand.u32 %v1504, 4294901760
    %1506 = vmatpush.msra.mxu0 %v1505
    %v1507 = vand.u32 %v246, 4294901760
    %v1508 = vsub.f32 %v246, %v1507
    %v1509 = vand.u32 %v1508, 4294901760
    %v1510 = vsub.f32 %v1508, %v1509
    %v1511 = vand.u32 %v1510, 4294901760
    %1512 = vmatpush.msra.mxu0 %v1511
    %v1513 = vand.u32 %v244, 4294901760
    %v1514 = vsub.f32 %v244, %v1513
    %v1515 = vand.u32 %v1514, 4294901760
    %v1516 = vsub.f32 %v1514, %v1515
    %v1517 = vand.u32 %v1516, 4294901760
    %1518 = vmatpush.msra.mxu0 %v1517
    %v1519 = vand.u32 %v242, 4294901760
    %v1520 = vsub.f32 %v242, %v1519
    %v1521 = vand.u32 %v1520, 4294901760
    %v1522 = vsub.f32 %v1520, %v1521
    %v1523 = vand.u32 %v1522, 4294901760
    %1524 = vmatpush.msra.mxu0 %v1523
    %v1525 = vand.u32 %v240, 4294901760
    %v1526 = vsub.f32 %v240, %v1525
    %v1527 = vand.u32 %v1526, 4294901760
    %v1528 = vsub.f32 %v1526, %v1527
    %v1529 = vand.u32 %v1528, 4294901760
    %1530 = vmatpush.msra.mxu0 %v1529
    %v1531 = vand.u32 %v1388, 4294901760
    %1532 = vmatmul.f32.gmra.mxu0 %v1531
    %v1533 = vpop.f32.mrf.mxu0
    %v1534 = vadd.f32 %v1433, %v1533
    %1535 = vdwg.mxu0
    %v1536 = vand.u32 %v270, 4294901760
    %v1537 = vsub.f32 %v270, %v1536
    %1538 = vmatpush.msra.mxu0 %v1537
    %v1539 = vand.u32 %v268, 4294901760
    %v1540 = vsub.f32 %v268, %v1539
    %1541 = vmatpush.msra.mxu0 %v1540
    %v1542 = vand.u32 %v266, 4294901760
    %v1543 = vsub.f32 %v266, %v1542
    %1544 = vmatpush.msra.mxu0 %v1543
    %v1545 = vand.u32 %v264, 4294901760
    %v1546 = vsub.f32 %v264, %v1545
    %1547 = vmatpush.msra.mxu0 %v1546
    %v1548 = vand.u32 %v262, 4294901760
    %v1549 = vsub.f32 %v262, %v1548
    %1550 = vmatpush.msra.mxu0 %v1549
    %v1551 = vand.u32 %v260, 4294901760
    %v1552 = vsub.f32 %v260, %v1551
    %1553 = vmatpush.msra.mxu0 %v1552
    %v1554 = vand.u32 %v258, 4294901760
    %v1555 = vsub.f32 %v258, %v1554
    %1556 = vmatpush.msra.mxu0 %v1555
    %v1557 = vand.u32 %v256, 4294901760
    %v1558 = vsub.f32 %v256, %v1557
    %1559 = vmatpush.msra.mxu0 %v1558
    %v1560 = vand.u32 %v254, 4294901760
    %v1561 = vsub.f32 %v254, %v1560
    %1562 = vmatpush.msra.mxu0 %v1561
    %v1563 = vand.u32 %v252, 4294901760
    %v1564 = vsub.f32 %v252, %v1563
    %1565 = vmatpush.msra.mxu0 %v1564
    %v1566 = vand.u32 %v250, 4294901760
    %v1567 = vsub.f32 %v250, %v1566
    %1568 = vmatpush.msra.mxu0 %v1567
    %v1569 = vand.u32 %v248, 4294901760
    %v1570 = vsub.f32 %v248, %v1569
    %1571 = vmatpush.msra.mxu0 %v1570
    %v1572 = vand.u32 %v246, 4294901760
    %v1573 = vsub.f32 %v246, %v1572
    %1574 = vmatpush.msra.mxu0 %v1573
    %v1575 = vand.u32 %v244, 4294901760
    %v1576 = vsub.f32 %v244, %v1575
    %1577 = vmatpush.msra.mxu0 %v1576
    %v1578 = vand.u32 %v242, 4294901760
    %v1579 = vsub.f32 %v242, %v1578
    %1580 = vmatpush.msra.mxu0 %v1579
    %v1581 = vand.u32 %v240, 4294901760
    %v1582 = vsub.f32 %v240, %v1581
    %1583 = vmatpush.msra.mxu0 %v1582
    %v1584 = vand.u32 %v1388, 4294901760
    %v1585 = vsub.f32 %v1388, %v1584
    %1586 = vmatmul.f32.gmra.mxu0 %v1585
    %v1587 = vpop.f32.mrf.mxu0
    %v1588 = vadd.f32 %v1534, %v1587
    %1589 = vdwg.mxu0
    %v1590 = vand.u32 %v270, 4294901760
    %1591 = vmatpush.msra.mxu0 %v1590
    %v1592 = vand.u32 %v268, 4294901760
    %1593 = vmatpush.msra.mxu0 %v1592
    %v1594 = vand.u32 %v266, 4294901760
    %1595 = vmatpush.msra.mxu0 %v1594
    %v1596 = vand.u32 %v264, 4294901760
    %1597 = vmatpush.msra.mxu0 %v1596
    %v1598 = vand.u32 %v262, 4294901760
    %1599 = vmatpush.msra.mxu0 %v1598
    %v1600 = vand.u32 %v260, 4294901760
    %1601 = vmatpush.msra.mxu0 %v1600
    %v1602 = vand.u32 %v258, 4294901760
    %1603 = vmatpush.msra.mxu0 %v1602
    %v1604 = vand.u32 %v256, 4294901760
    %1605 = vmatpush.msra.mxu0 %v1604
    %v1606 = vand.u32 %v254, 4294901760
    %1607 = vmatpush.msra.mxu0 %v1606
    %v1608 = vand.u32 %v252, 4294901760
    %1609 = vmatpush.msra.mxu0 %v1608
    %v1610 = vand.u32 %v250, 4294901760
    %1611 = vmatpush.msra.mxu0 %v1610
    %v1612 = vand.u32 %v248, 4294901760
    %1613 = vmatpush.msra.mxu0 %v1612
    %v1614 = vand.u32 %v246, 4294901760
    %1615 = vmatpush.msra.mxu0 %v1614
    %v1616 = vand.u32 %v244, 4294901760
    %1617 = vmatpush.msra.mxu0 %v1616
    %v1618 = vand.u32 %v242, 4294901760
    %1619 = vmatpush.msra.mxu0 %v1618
    %v1620 = vand.u32 %v240, 4294901760
    %1621 = vmatpush.msra.mxu0 %v1620
    %v1622 = vand.u32 %v1388, 4294901760
    %v1623 = vsub.f32 %v1388, %v1622
    %v1624 = vand.u32 %v1623, 4294901760
    %1625 = vmatmul.f32.gmra.mxu0 %v1624
    %v1626 = vpop.f32.mrf.mxu0
    %v1627 = vadd.f32 %v1588, %v1626
    %1628 = vdwg.mxu0
    %v1629 = vand.u32 %v270, 4294901760
    %v1630 = vsub.f32 %v270, %v1629
    %v1631 = vand.u32 %v1630, 4294901760
    %1632 = vmatpush.msra.mxu0 %v1631
    %v1633 = vand.u32 %v268, 4294901760
    %v1634 = vsub.f32 %v268, %v1633
    %v1635 = vand.u32 %v1634, 4294901760
    %1636 = vmatpush.msra.mxu0 %v1635
    %v1637 = vand.u32 %v266, 4294901760
    %v1638 = vsub.f32 %v266, %v1637
    %v1639 = vand.u32 %v1638, 4294901760
    %1640 = vmatpush.msra.mxu0 %v1639
    %v1641 = vand.u32 %v264, 4294901760
    %v1642 = vsub.f32 %v264, %v1641
    %v1643 = vand.u32 %v1642, 4294901760
    %1644 = vmatpush.msra.mxu0 %v1643
    %v1645 = vand.u32 %v262, 4294901760
    %v1646 = vsub.f32 %v262, %v1645
    %v1647 = vand.u32 %v1646, 4294901760
    %1648 = vmatpush.msra.mxu0 %v1647
    %v1649 = vand.u32 %v260, 4294901760
    %v1650 = vsub.f32 %v260, %v1649
    %v1651 = vand.u32 %v1650, 4294901760
    %1652 = vmatpush.msra.mxu0 %v1651
    %v1653 = vand.u32 %v258, 4294901760
    %v1654 = vsub.f32 %v258, %v1653
    %v1655 = vand.u32 %v1654, 4294901760
    %1656 = vmatpush.msra.mxu0 %v1655
    %v1657 = vand.u32 %v256, 4294901760
    %v1658 = vsub.f32 %v256, %v1657
    %v1659 = vand.u32 %v1658, 4294901760
    %1660 = vmatpush.msra.mxu0 %v1659
    %v1661 = vand.u32 %v254, 4294901760
    %v1662 = vsub.f32 %v254, %v1661
    %v1663 = vand.u32 %v1662, 4294901760
    %1664 = vmatpush.msra.mxu0 %v1663
    %v1665 = vand.u32 %v252, 4294901760
    %v1666 = vsub.f32 %v252, %v1665
    %v1667 = vand.u32 %v1666, 4294901760
    %1668 = vmatpush.msra.mxu0 %v1667
    %v1669 = vand.u32 %v250, 4294901760
    %v1670 = vsub.f32 %v250, %v1669
    %v1671 = vand.u32 %v1670, 4294901760
    %1672 = vmatpush.msra.mxu0 %v1671
    %v1673 = vand.u32 %v248, 4294901760
    %v1674 = vsub.f32 %v248, %v1673
    %v1675 = vand.u32 %v1674, 4294901760
    %1676 = vmatpush.msra.mxu0 %v1675
    %v1677 = vand.u32 %v246, 4294901760
    %v1678 = vsub.f32 %v246, %v1677
    %v1679 = vand.u32 %v1678, 4294901760
    %1680 = vmatpush.msra.mxu0 %v1679
    %v1681 = vand.u32 %v244, 4294901760
    %v1682 = vsub.f32 %v244, %v1681
    %v1683 = vand.u32 %v1682, 4294901760
    %1684 = vmatpush.msra.mxu0 %v1683
    %v1685 = vand.u32 %v242, 4294901760
    %v1686 = vsub.f32 %v242, %v1685
    %v1687 = vand.u32 %v1686, 4294901760
    %1688 = vmatpush.msra.mxu0 %v1687
    %v1689 = vand.u32 %v240, 4294901760
    %v1690 = vsub.f32 %v240, %v1689
    %v1691 = vand.u32 %v1690, 4294901760
    %1692 = vmatpush.msra.mxu0 %v1691
    %v1693 = vand.u32 %v1388, 4294901760
    %1694 = vmatmul.f32.gmra.mxu0 %v1693
    %v1695 = vpop.f32.mrf.mxu0
    %v1696 = vadd.f32 %v1627, %v1695
    %1697 = vdwg.mxu0
    %v1698 = vand.u32 %v270, 4294901760
    %1699 = vmatpush.msra.mxu0 %v1698
    %v1700 = vand.u32 %v268, 4294901760
    %1701 = vmatpush.msra.mxu0 %v1700
    %v1702 = vand.u32 %v266, 4294901760
    %1703 = vmatpush.msra.mxu0 %v1702
    %v1704 = vand.u32 %v264, 4294901760
    %1705 = vmatpush.msra.mxu0 %v1704
    %v1706 = vand.u32 %v262, 4294901760
    %1707 = vmatpush.msra.mxu0 %v1706
    %v1708 = vand.u32 %v260, 4294901760
    %1709 = vmatpush.msra.mxu0 %v1708
    %v1710 = vand.u32 %v258, 4294901760
    %1711 = vmatpush.msra.mxu0 %v1710
    %v1712 = vand.u32 %v256, 4294901760
    %1713 = vmatpush.msra.mxu0 %v1712
    %v1714 = vand.u32 %v254, 4294901760
    %1715 = vmatpush.msra.mxu0 %v1714
    %v1716 = vand.u32 %v252, 4294901760
    %1717 = vmatpush.msra.mxu0 %v1716
    %v1718 = vand.u32 %v250, 4294901760
    %1719 = vmatpush.msra.mxu0 %v1718
    %v1720 = vand.u32 %v248, 4294901760
    %1721 = vmatpush.msra.mxu0 %v1720
    %v1722 = vand.u32 %v246, 4294901760
    %1723 = vmatpush.msra.mxu0 %v1722
    %v1724 = vand.u32 %v244, 4294901760
    %1725 = vmatpush.msra.mxu0 %v1724
    %v1726 = vand.u32 %v242, 4294901760
    %1727 = vmatpush.msra.mxu0 %v1726
    %v1728 = vand.u32 %v240, 4294901760
    %1729 = vmatpush.msra.mxu0 %v1728
    %v1730 = vand.u32 %v1388, 4294901760
    %1731 = vmatmul.f32.gmra.mxu0 %v1730
    %v1732 = vpop.f32.mrf.mxu0
    %v1733 = vadd.f32 %v1696, %v1732
    %1734 = vdwg.mxu0
    %v1735 = vand.u32 %v271, 4294901760
    %1736 = vmatpush.msra.mxu0 %v1735
    %v1737 = vand.u32 %v269, 4294901760
    %1738 = vmatpush.msra.mxu0 %v1737
    %v1739 = vand.u32 %v267, 4294901760
    %1740 = vmatpush.msra.mxu0 %v1739
    %v1741 = vand.u32 %v265, 4294901760
    %1742 = vmatpush.msra.mxu0 %v1741
    %v1743 = vand.u32 %v263, 4294901760
    %1744 = vmatpush.msra.mxu0 %v1743
    %v1745 = vand.u32 %v261, 4294901760
    %1746 = vmatpush.msra.mxu0 %v1745
    %v1747 = vand.u32 %v259, 4294901760
    %1748 = vmatpush.msra.mxu0 %v1747
    %v1749 = vand.u32 %v257, 4294901760
    %1750 = vmatpush.msra.mxu0 %v1749
    %v1751 = vand.u32 %v255, 4294901760
    %1752 = vmatpush.msra.mxu0 %v1751
    %v1753 = vand.u32 %v253, 4294901760
    %1754 = vmatpush.msra.mxu0 %v1753
    %v1755 = vand.u32 %v251, 4294901760
    %1756 = vmatpush.msra.mxu0 %v1755
    %v1757 = vand.u32 %v249, 4294901760
    %1758 = vmatpush.msra.mxu0 %v1757
    %v1759 = vand.u32 %v247, 4294901760
    %1760 = vmatpush.msra.mxu0 %v1759
    %v1761 = vand.u32 %v245, 4294901760
    %1762 = vmatpush.msra.mxu0 %v1761
    %v1763 = vand.u32 %v243, 4294901760
    %1764 = vmatpush.msra.mxu0 %v1763
    %v1765 = vand.u32 %v241, 4294901760
    %1766 = vmatpush.msra.mxu0 %v1765
    %v1767 = vand.u32 %v1388, 4294901760
    %v1768 = vsub.f32 %v1388, %v1767
    %v1769 = vand.u32 %v1768, 4294901760
    %v1770 = vsub.f32 %v1768, %v1769
    %v1771 = vand.u32 %v1770, 4294901760
    %1772 = vmatmul.f32.gmra.mxu0 %v1771
    %v1773 = vpop.f32.mrf.mxu0
    %v1774 = vadd.f32 %v1391, %v1773
    %1775 = vdwg.mxu0
    %v1776 = vand.u32 %v271, 4294901760
    %v1777 = vsub.f32 %v271, %v1776
    %v1778 = vand.u32 %v1777, 4294901760
    %v1779 = vsub.f32 %v1777, %v1778
    %v1780 = vand.u32 %v1779, 4294901760
    %1781 = vmatpush.msra.mxu0 %v1780
    %v1782 = vand.u32 %v269, 4294901760
    %v1783 = vsub.f32 %v269, %v1782
    %v1784 = vand.u32 %v1783, 4294901760
    %v1785 = vsub.f32 %v1783, %v1784
    %v1786 = vand.u32 %v1785, 4294901760
    %1787 = vmatpush.msra.mxu0 %v1786
    %v1788 = vand.u32 %v267, 4294901760
    %v1789 = vsub.f32 %v267, %v1788
    %v1790 = vand.u32 %v1789, 4294901760
    %v1791 = vsub.f32 %v1789, %v1790
    %v1792 = vand.u32 %v1791, 4294901760
    %1793 = vmatpush.msra.mxu0 %v1792
    %v1794 = vand.u32 %v265, 4294901760
    %v1795 = vsub.f32 %v265, %v1794
    %v1796 = vand.u32 %v1795, 4294901760
    %v1797 = vsub.f32 %v1795, %v1796
    %v1798 = vand.u32 %v1797, 4294901760
    %1799 = vmatpush.msra.mxu0 %v1798
    %v1800 = vand.u32 %v263, 4294901760
    %v1801 = vsub.f32 %v263, %v1800
    %v1802 = vand.u32 %v1801, 4294901760
    %v1803 = vsub.f32 %v1801, %v1802
    %v1804 = vand.u32 %v1803, 4294901760
    %1805 = vmatpush.msra.mxu0 %v1804
    %v1806 = vand.u32 %v261, 4294901760
    %v1807 = vsub.f32 %v261, %v1806
    %v1808 = vand.u32 %v1807, 4294901760
    %v1809 = vsub.f32 %v1807, %v1808
    %v1810 = vand.u32 %v1809, 4294901760
    %1811 = vmatpush.msra.mxu0 %v1810
    %v1812 = vand.u32 %v259, 4294901760
    %v1813 = vsub.f32 %v259, %v1812
    %v1814 = vand.u32 %v1813, 4294901760
    %v1815 = vsub.f32 %v1813, %v1814
    %v1816 = vand.u32 %v1815, 4294901760
    %1817 = vmatpush.msra.mxu0 %v1816
    %v1818 = vand.u32 %v257, 4294901760
    %v1819 = vsub.f32 %v257, %v1818
    %v1820 = vand.u32 %v1819, 4294901760
    %v1821 = vsub.f32 %v1819, %v1820
    %v1822 = vand.u32 %v1821, 4294901760
    %1823 = vmatpush.msra.mxu0 %v1822
    %v1824 = vand.u32 %v255, 4294901760
    %v1825 = vsub.f32 %v255, %v1824
    %v1826 = vand.u32 %v1825, 4294901760
    %v1827 = vsub.f32 %v1825, %v1826
    %v1828 = vand.u32 %v1827, 4294901760
    %1829 = vmatpush.msra.mxu0 %v1828
    %v1830 = vand.u32 %v253, 4294901760
    %v1831 = vsub.f32 %v253, %v1830
    %v1832 = vand.u32 %v1831, 4294901760
    %v1833 = vsub.f32 %v1831, %v1832
    %v1834 = vand.u32 %v1833, 4294901760
    %1835 = vmatpush.msra.mxu0 %v1834
    %v1836 = vand.u32 %v251, 4294901760
    %v1837 = vsub.f32 %v251, %v1836
    %v1838 = vand.u32 %v1837, 4294901760
    %v1839 = vsub.f32 %v1837, %v1838
    %v1840 = vand.u32 %v1839, 4294901760
    %1841 = vmatpush.msra.mxu0 %v1840
    %v1842 = vand.u32 %v249, 4294901760
    %v1843 = vsub.f32 %v249, %v1842
    %v1844 = vand.u32 %v1843, 4294901760
    %v1845 = vsub.f32 %v1843, %v1844
    %v1846 = vand.u32 %v1845, 4294901760
    %1847 = vmatpush.msra.mxu0 %v1846
    %v1848 = vand.u32 %v247, 4294901760
    %v1849 = vsub.f32 %v247, %v1848
    %v1850 = vand.u32 %v1849, 4294901760
    %v1851 = vsub.f32 %v1849, %v1850
    %v1852 = vand.u32 %v1851, 4294901760
    %1853 = vmatpush.msra.mxu0 %v1852
    %v1854 = vand.u32 %v245, 4294901760
    %v1855 = vsub.f32 %v245, %v1854
    %v1856 = vand.u32 %v1855, 4294901760
    %v1857 = vsub.f32 %v1855, %v1856
    %v1858 = vand.u32 %v1857, 4294901760
    %1859 = vmatpush.msra.mxu0 %v1858
    %v1860 = vand.u32 %v243, 4294901760
    %v1861 = vsub.f32 %v243, %v1860
    %v1862 = vand.u32 %v1861, 4294901760
    %v1863 = vsub.f32 %v1861, %v1862
    %v1864 = vand.u32 %v1863, 4294901760
    %1865 = vmatpush.msra.mxu0 %v1864
    %v1866 = vand.u32 %v241, 4294901760
    %v1867 = vsub.f32 %v241, %v1866
    %v1868 = vand.u32 %v1867, 4294901760
    %v1869 = vsub.f32 %v1867, %v1868
    %v1870 = vand.u32 %v1869, 4294901760
    %1871 = vmatpush.msra.mxu0 %v1870
    %v1872 = vand.u32 %v1388, 4294901760
    %1873 = vmatmul.f32.gmra.mxu0 %v1872
    %v1874 = vpop.f32.mrf.mxu0
    %v1875 = vadd.f32 %v1774, %v1874
    %1876 = vdwg.mxu0
    %v1877 = vand.u32 %v271, 4294901760
    %v1878 = vsub.f32 %v271, %v1877
    %1879 = vmatpush.msra.mxu0 %v1878
    %v1880 = vand.u32 %v269, 4294901760
    %v1881 = vsub.f32 %v269, %v1880
    %1882 = vmatpush.msra.mxu0 %v1881
    %v1883 = vand.u32 %v267, 4294901760
    %v1884 = vsub.f32 %v267, %v1883
    %1885 = vmatpush.msra.mxu0 %v1884
    %v1886 = vand.u32 %v265, 4294901760
    %v1887 = vsub.f32 %v265, %v1886
    %1888 = vmatpush.msra.mxu0 %v1887
    %v1889 = vand.u32 %v263, 4294901760
    %v1890 = vsub.f32 %v263, %v1889
    %1891 = vmatpush.msra.mxu0 %v1890
    %v1892 = vand.u32 %v261, 4294901760
    %v1893 = vsub.f32 %v261, %v1892
    %1894 = vmatpush.msra.mxu0 %v1893
    %v1895 = vand.u32 %v259, 4294901760
    %v1896 = vsub.f32 %v259, %v1895
    %1897 = vmatpush.msra.mxu0 %v1896
    %v1898 = vand.u32 %v257, 4294901760
    %v1899 = vsub.f32 %v257, %v1898
    %1900 = vmatpush.msra.mxu0 %v1899
    %v1901 = vand.u32 %v255, 4294901760
    %v1902 = vsub.f32 %v255, %v1901
    %1903 = vmatpush.msra.mxu0 %v1902
    %v1904 = vand.u32 %v253, 4294901760
    %v1905 = vsub.f32 %v253, %v1904
    %1906 = vmatpush.msra.mxu0 %v1905
    %v1907 = vand.u32 %v251, 4294901760
    %v1908 = vsub.f32 %v251, %v1907
    %1909 = vmatpush.msra.mxu0 %v1908
    %v1910 = vand.u32 %v249, 4294901760
    %v1911 = vsub.f32 %v249, %v1910
    %1912 = vmatpush.msra.mxu0 %v1911
    %v1913 = vand.u32 %v247, 4294901760
    %v1914 = vsub.f32 %v247, %v1913
    %1915 = vmatpush.msra.mxu0 %v1914
    %v1916 = vand.u32 %v245, 4294901760
    %v1917 = vsub.f32 %v245, %v1916
    %1918 = vmatpush.msra.mxu0 %v1917
    %v1919 = vand.u32 %v243, 4294901760
    %v1920 = vsub.f32 %v243, %v1919
    %1921 = vmatpush.msra.mxu0 %v1920
    %v1922 = vand.u32 %v241, 4294901760
    %v1923 = vsub.f32 %v241, %v1922
    %1924 = vmatpush.msra.mxu0 %v1923
    %v1925 = vand.u32 %v1388, 4294901760
    %v1926 = vsub.f32 %v1388, %v1925
    %1927 = vmatmul.f32.gmra.mxu0 %v1926
    %v1928 = vpop.f32.mrf.mxu0
    %v1929 = vadd.f32 %v1875, %v1928
    %1930 = vdwg.mxu0
    %v1931 = vand.u32 %v271, 4294901760
    %1932 = vmatpush.msra.mxu0 %v1931
    %v1933 = vand.u32 %v269, 4294901760
    %1934 = vmatpush.msra.mxu0 %v1933
    %v1935 = vand.u32 %v267, 4294901760
    %1936 = vmatpush.msra.mxu0 %v1935
    %v1937 = vand.u32 %v265, 4294901760
    %1938 = vmatpush.msra.mxu0 %v1937
    %v1939 = vand.u32 %v263, 4294901760
    %1940 = vmatpush.msra.mxu0 %v1939
    %v1941 = vand.u32 %v261, 4294901760
    %1942 = vmatpush.msra.mxu0 %v1941
    %v1943 = vand.u32 %v259, 4294901760
    %1944 = vmatpush.msra.mxu0 %v1943
    %v1945 = vand.u32 %v257, 4294901760
    %1946 = vmatpush.msra.mxu0 %v1945
    %v1947 = vand.u32 %v255, 4294901760
    %1948 = vmatpush.msra.mxu0 %v1947
    %v1949 = vand.u32 %v253, 4294901760
    %1950 = vmatpush.msra.mxu0 %v1949
    %v1951 = vand.u32 %v251, 4294901760
    %1952 = vmatpush.msra.mxu0 %v1951
    %v1953 = vand.u32 %v249, 4294901760
    %1954 = vmatpush.msra.mxu0 %v1953
    %v1955 = vand.u32 %v247, 4294901760
    %1956 = vmatpush.msra.mxu0 %v1955
    %v1957 = vand.u32 %v245, 4294901760
    %1958 = vmatpush.msra.mxu0 %v1957
    %v1959 = vand.u32 %v243, 4294901760
    %1960 = vmatpush.msra.mxu0 %v1959
    %v1961 = vand.u32 %v241, 4294901760
    %1962 = vmatpush.msra.mxu0 %v1961
    %v1963 = vand.u32 %v1388, 4294901760
    %v1964 = vsub.f32 %v1388, %v1963
    %v1965 = vand.u32 %v1964, 4294901760
    %1966 = vmatmul.f32.gmra.mxu0 %v1965
    %v1967 = vpop.f32.mrf.mxu0
    %v1968 = vadd.f32 %v1929, %v1967
    %1969 = vdwg.mxu0
    %v1970 = vand.u32 %v271, 4294901760
    %v1971 = vsub.f32 %v271, %v1970
    %v1972 = vand.u32 %v1971, 4294901760
    %1973 = vmatpush.msra.mxu0 %v1972
    %v1974 = vand.u32 %v269, 4294901760
    %v1975 = vsub.f32 %v269, %v1974
    %v1976 = vand.u32 %v1975, 4294901760
    %1977 = vmatpush.msra.mxu0 %v1976
    %v1978 = vand.u32 %v267, 4294901760
    %v1979 = vsub.f32 %v267, %v1978
    %v1980 = vand.u32 %v1979, 4294901760
    %1981 = vmatpush.msra.mxu0 %v1980
    %v1982 = vand.u32 %v265, 4294901760
    %v1983 = vsub.f32 %v265, %v1982
    %v1984 = vand.u32 %v1983, 4294901760
    %1985 = vmatpush.msra.mxu0 %v1984
    %v1986 = vand.u32 %v263, 4294901760
    %v1987 = vsub.f32 %v263, %v1986
    %v1988 = vand.u32 %v1987, 4294901760
    %1989 = vmatpush.msra.mxu0 %v1988
    %v1990 = vand.u32 %v261, 4294901760
    %v1991 = vsub.f32 %v261, %v1990
    %v1992 = vand.u32 %v1991, 4294901760
    %1993 = vmatpush.msra.mxu0 %v1992
    %v1994 = vand.u32 %v259, 4294901760
    %v1995 = vsub.f32 %v259, %v1994
    %v1996 = vand.u32 %v1995, 4294901760
    %1997 = vmatpush.msra.mxu0 %v1996
    %v1998 = vand.u32 %v257, 4294901760
    %v1999 = vsub.f32 %v257, %v1998
    %v2000 = vand.u32 %v1999, 4294901760
    %2001 = vmatpush.msra.mxu0 %v2000
    %v2002 = vand.u32 %v255, 4294901760
    %v2003 = vsub.f32 %v255, %v2002
    %v2004 = vand.u32 %v2003, 4294901760
    %2005 = vmatpush.msra.mxu0 %v2004
    %v2006 = vand.u32 %v253, 4294901760
    %v2007 = vsub.f32 %v253, %v2006
    %v2008 = vand.u32 %v2007, 4294901760
    %2009 = vmatpush.msra.mxu0 %v2008
    %v2010 = vand.u32 %v251, 4294901760
    %v2011 = vsub.f32 %v251, %v2010
    %v2012 = vand.u32 %v2011, 4294901760
    %2013 = vmatpush.msra.mxu0 %v2012
    %v2014 = vand.u32 %v249, 4294901760
    %v2015 = vsub.f32 %v249, %v2014
    %v2016 = vand.u32 %v2015, 4294901760
    %2017 = vmatpush.msra.mxu0 %v2016
    %v2018 = vand.u32 %v247, 4294901760
    %v2019 = vsub.f32 %v247, %v2018
    %v2020 = vand.u32 %v2019, 4294901760
    %2021 = vmatpush.msra.mxu0 %v2020
    %v2022 = vand.u32 %v245, 4294901760
    %v2023 = vsub.f32 %v245, %v2022
    %v2024 = vand.u32 %v2023, 4294901760
    %2025 = vmatpush.msra.mxu0 %v2024
    %v2026 = vand.u32 %v243, 4294901760
    %v2027 = vsub.f32 %v243, %v2026
    %v2028 = vand.u32 %v2027, 4294901760
    %2029 = vmatpush.msra.mxu0 %v2028
    %v2030 = vand.u32 %v241, 4294901760
    %v2031 = vsub.f32 %v241, %v2030
    %v2032 = vand.u32 %v2031, 4294901760
    %2033 = vmatpush.msra.mxu0 %v2032
    %v2034 = vand.u32 %v1388, 4294901760
    %2035 = vmatmul.f32.gmra.mxu0 %v2034
    %v2036 = vpop.f32.mrf.mxu0
    %v2037 = vadd.f32 %v1968, %v2036
    %2038 = vdwg.mxu0
    %v2039 = vand.u32 %v271, 4294901760
    %2040 = vmatpush.msra.mxu0 %v2039
    %v2041 = vand.u32 %v269, 4294901760
    %2042 = vmatpush.msra.mxu0 %v2041
    %v2043 = vand.u32 %v267, 4294901760
    %2044 = vmatpush.msra.mxu0 %v2043
    %v2045 = vand.u32 %v265, 4294901760
    %2046 = vmatpush.msra.mxu0 %v2045
    %v2047 = vand.u32 %v263, 4294901760
    %2048 = vmatpush.msra.mxu0 %v2047
    %v2049 = vand.u32 %v261, 4294901760
    %2050 = vmatpush.msra.mxu0 %v2049
    %v2051 = vand.u32 %v259, 4294901760
    %2052 = vmatpush.msra.mxu0 %v2051
    %v2053 = vand.u32 %v257, 4294901760
    %2054 = vmatpush.msra.mxu0 %v2053
    %v2055 = vand.u32 %v255, 4294901760
    %2056 = vmatpush.msra.mxu0 %v2055
    %v2057 = vand.u32 %v253, 4294901760
    %2058 = vmatpush.msra.mxu0 %v2057
    %v2059 = vand.u32 %v251, 4294901760
    %2060 = vmatpush.msra.mxu0 %v2059
    %v2061 = vand.u32 %v249, 4294901760
    %2062 = vmatpush.msra.mxu0 %v2061
    %v2063 = vand.u32 %v247, 4294901760
    %2064 = vmatpush.msra.mxu0 %v2063
    %v2065 = vand.u32 %v245, 4294901760
    %2066 = vmatpush.msra.mxu0 %v2065
    %v2067 = vand.u32 %v243, 4294901760
    %2068 = vmatpush.msra.mxu0 %v2067
    %v2069 = vand.u32 %v241, 4294901760
    %2070 = vmatpush.msra.mxu0 %v2069
    %v2071 = vand.u32 %v1388, 4294901760
    %2072 = vmatmul.f32.gmra.mxu0 %v2071
    %v2073 = vpop.f32.mrf.mxu0
    %v2074 = vadd.f32 %v2037, %v2073
    %2075 = vdwg.mxu0
    %v2076 = vmax.f32 %v1733, 0.0
    %v2077 = vmax.f32 %v2074, 0.0
    %v2079 = vperm.slane %v305, 0
    %v2081 = vand.u32 %v288, 4294901760
    %2082 = vmatpush.msra.mxu0 %v2081
    %v2083 = vand.u32 %v287, 4294901760
    %2084 = vmatpush.msra.mxu0 %v2083
    %v2085 = vand.u32 %v286, 4294901760
    %2086 = vmatpush.msra.mxu0 %v2085
    %v2087 = vand.u32 %v285, 4294901760
    %2088 = vmatpush.msra.mxu0 %v2087
    %v2089 = vand.u32 %v284, 4294901760
    %2090 = vmatpush.msra.mxu0 %v2089
    %v2091 = vand.u32 %v283, 4294901760
    %2092 = vmatpush.msra.mxu0 %v2091
    %v2093 = vand.u32 %v282, 4294901760
    %2094 = vmatpush.msra.mxu0 %v2093
    %v2095 = vand.u32 %v281, 4294901760
    %2096 = vmatpush.msra.mxu0 %v2095
    %v2097 = vand.u32 %v280, 4294901760
    %2098 = vmatpush.msra.mxu0 %v2097
    %v2099 = vand.u32 %v279, 4294901760
    %2100 = vmatpush.msra.mxu0 %v2099
    %v2101 = vand.u32 %v278, 4294901760
    %2102 = vmatpush.msra.mxu0 %v2101
    %v2103 = vand.u32 %v277, 4294901760
    %2104 = vmatpush.msra.mxu0 %v2103
    %v2105 = vand.u32 %v276, 4294901760
    %2106 = vmatpush.msra.mxu0 %v2105
    %v2107 = vand.u32 %v275, 4294901760
    %2108 = vmatpush.msra.mxu0 %v2107
    %v2109 = vand.u32 %v274, 4294901760
    %2110 = vmatpush.msra.mxu0 %v2109
    %v2111 = vand.u32 %v273, 4294901760
    %2112 = vmatpush.msra.mxu0 %v2111
    %v2113 = vand.u32 %v2076, 4294901760
    %v2114 = vsub.f32 %v2076, %v2113
    %v2115 = vand.u32 %v2114, 4294901760
    %v2116 = vsub.f32 %v2114, %v2115
    %v2117 = vand.u32 %v2116, 4294901760
    %2118 = vmatmul.f32.gmra.mxu0 %v2117
    %v2119 = vpop.f32.mrf.mxu0
    %v2120 = vadd.f32 %v2079, %v2119
    %2121 = vdwg.mxu0
    %v2122 = vand.u32 %v288, 4294901760
    %v2123 = vsub.f32 %v288, %v2122
    %v2124 = vand.u32 %v2123, 4294901760
    %v2125 = vsub.f32 %v2123, %v2124
    %v2126 = vand.u32 %v2125, 4294901760
    %2127 = vmatpush.msra.mxu0 %v2126
    %v2128 = vand.u32 %v287, 4294901760
    %v2129 = vsub.f32 %v287, %v2128
    %v2130 = vand.u32 %v2129, 4294901760
    %v2131 = vsub.f32 %v2129, %v2130
    %v2132 = vand.u32 %v2131, 4294901760
    %2133 = vmatpush.msra.mxu0 %v2132
    %v2134 = vand.u32 %v286, 4294901760
    %v2135 = vsub.f32 %v286, %v2134
    %v2136 = vand.u32 %v2135, 4294901760
    %v2137 = vsub.f32 %v2135, %v2136
    %v2138 = vand.u32 %v2137, 4294901760
    %2139 = vmatpush.msra.mxu0 %v2138
    %v2140 = vand.u32 %v285, 4294901760
    %v2141 = vsub.f32 %v285, %v2140
    %v2142 = vand.u32 %v2141, 4294901760
    %v2143 = vsub.f32 %v2141, %v2142
    %v2144 = vand.u32 %v2143, 4294901760
    %2145 = vmatpush.msra.mxu0 %v2144
    %v2146 = vand.u32 %v284, 4294901760
    %v2147 = vsub.f32 %v284, %v2146
    %v2148 = vand.u32 %v2147, 4294901760
    %v2149 = vsub.f32 %v2147, %v2148
    %v2150 = vand.u32 %v2149, 4294901760
    %2151 = vmatpush.msra.mxu0 %v2150
    %v2152 = vand.u32 %v283, 4294901760
    %v2153 = vsub.f32 %v283, %v2152
    %v2154 = vand.u32 %v2153, 4294901760
    %v2155 = vsub.f32 %v2153, %v2154
    %v2156 = vand.u32 %v2155, 4294901760
    %2157 = vmatpush.msra.mxu0 %v2156
    %v2158 = vand.u32 %v282, 4294901760
    %v2159 = vsub.f32 %v282, %v2158
    %v2160 = vand.u32 %v2159, 4294901760
    %v2161 = vsub.f32 %v2159, %v2160
    %v2162 = vand.u32 %v2161, 4294901760
    %2163 = vmatpush.msra.mxu0 %v2162
    %v2164 = vand.u32 %v281, 4294901760
    %v2165 = vsub.f32 %v281, %v2164
    %v2166 = vand.u32 %v2165, 4294901760
    %v2167 = vsub.f32 %v2165, %v2166
    %v2168 = vand.u32 %v2167, 4294901760
    %2169 = vmatpush.msra.mxu0 %v2168
    %v2170 = vand.u32 %v280, 4294901760
    %v2171 = vsub.f32 %v280, %v2170
    %v2172 = vand.u32 %v2171, 4294901760
    %v2173 = vsub.f32 %v2171, %v2172
    %v2174 = vand.u32 %v2173, 4294901760
    %2175 = vmatpush.msra.mxu0 %v2174
    %v2176 = vand.u32 %v279, 4294901760
    %v2177 = vsub.f32 %v279, %v2176
    %v2178 = vand.u32 %v2177, 4294901760
    %v2179 = vsub.f32 %v2177, %v2178
    %v2180 = vand.u32 %v2179, 4294901760
    %2181 = vmatpush.msra.mxu0 %v2180
    %v2182 = vand.u32 %v278, 4294901760
    %v2183 = vsub.f32 %v278, %v2182
    %v2184 = vand.u32 %v2183, 4294901760
    %v2185 = vsub.f32 %v2183, %v2184
    %v2186 = vand.u32 %v2185, 4294901760
    %2187 = vmatpush.msra.mxu0 %v2186
    %v2188 = vand.u32 %v277, 4294901760
    %v2189 = vsub.f32 %v277, %v2188
    %v2190 = vand.u32 %v2189, 4294901760
    %v2191 = vsub.f32 %v2189, %v2190
    %v2192 = vand.u32 %v2191, 4294901760
    %2193 = vmatpush.msra.mxu0 %v2192
    %v2194 = vand.u32 %v276, 4294901760
    %v2195 = vsub.f32 %v276, %v2194
    %v2196 = vand.u32 %v2195, 4294901760
    %v2197 = vsub.f32 %v2195, %v2196
    %v2198 = vand.u32 %v2197, 4294901760
    %2199 = vmatpush.msra.mxu0 %v2198
    %v2200 = vand.u32 %v275, 4294901760
    %v2201 = vsub.f32 %v275, %v2200
    %v2202 = vand.u32 %v2201, 4294901760
    %v2203 = vsub.f32 %v2201, %v2202
    %v2204 = vand.u32 %v2203, 4294901760
    %2205 = vmatpush.msra.mxu0 %v2204
    %v2206 = vand.u32 %v274, 4294901760
    %v2207 = vsub.f32 %v274, %v2206
    %v2208 = vand.u32 %v2207, 4294901760
    %v2209 = vsub.f32 %v2207, %v2208
    %v2210 = vand.u32 %v2209, 4294901760
    %2211 = vmatpush.msra.mxu0 %v2210
    %v2212 = vand.u32 %v273, 4294901760
    %v2213 = vsub.f32 %v273, %v2212
    %v2214 = vand.u32 %v2213, 4294901760
    %v2215 = vsub.f32 %v2213, %v2214
    %v2216 = vand.u32 %v2215, 4294901760
    %2217 = vmatpush.msra.mxu0 %v2216
    %v2218 = vand.u32 %v2076, 4294901760
    %2219 = vmatmul.f32.gmra.mxu0 %v2218
    %v2220 = vpop.f32.mrf.mxu0
    %v2221 = vadd.f32 %v2120, %v2220
    %2222 = vdwg.mxu0
    %v2223 = vand.u32 %v288, 4294901760
    %v2224 = vsub.f32 %v288, %v2223
    %2225 = vmatpush.msra.mxu0 %v2224
    %v2226 = vand.u32 %v287, 4294901760
    %v2227 = vsub.f32 %v287, %v2226
    %2228 = vmatpush.msra.mxu0 %v2227
    %v2229 = vand.u32 %v286, 4294901760
    %v2230 = vsub.f32 %v286, %v2229
    %2231 = vmatpush.msra.mxu0 %v2230
    %v2232 = vand.u32 %v285, 4294901760
    %v2233 = vsub.f32 %v285, %v2232
    %2234 = vmatpush.msra.mxu0 %v2233
    %v2235 = vand.u32 %v284, 4294901760
    %v2236 = vsub.f32 %v284, %v2235
    %2237 = vmatpush.msra.mxu0 %v2236
    %v2238 = vand.u32 %v283, 4294901760
    %v2239 = vsub.f32 %v283, %v2238
    %2240 = vmatpush.msra.mxu0 %v2239
    %v2241 = vand.u32 %v282, 4294901760
    %v2242 = vsub.f32 %v282, %v2241
    %2243 = vmatpush.msra.mxu0 %v2242
    %v2244 = vand.u32 %v281, 4294901760
    %v2245 = vsub.f32 %v281, %v2244
    %2246 = vmatpush.msra.mxu0 %v2245
    %v2247 = vand.u32 %v280, 4294901760
    %v2248 = vsub.f32 %v280, %v2247
    %2249 = vmatpush.msra.mxu0 %v2248
    %v2250 = vand.u32 %v279, 4294901760
    %v2251 = vsub.f32 %v279, %v2250
    %2252 = vmatpush.msra.mxu0 %v2251
    %v2253 = vand.u32 %v278, 4294901760
    %v2254 = vsub.f32 %v278, %v2253
    %2255 = vmatpush.msra.mxu0 %v2254
    %v2256 = vand.u32 %v277, 4294901760
    %v2257 = vsub.f32 %v277, %v2256
    %2258 = vmatpush.msra.mxu0 %v2257
    %v2259 = vand.u32 %v276, 4294901760
    %v2260 = vsub.f32 %v276, %v2259
    %2261 = vmatpush.msra.mxu0 %v2260
    %v2262 = vand.u32 %v275, 4294901760
    %v2263 = vsub.f32 %v275, %v2262
    %2264 = vmatpush.msra.mxu0 %v2263
    %v2265 = vand.u32 %v274, 4294901760
    %v2266 = vsub.f32 %v274, %v2265
    %2267 = vmatpush.msra.mxu0 %v2266
    %v2268 = vand.u32 %v273, 4294901760
    %v2269 = vsub.f32 %v273, %v2268
    %2270 = vmatpush.msra.mxu0 %v2269
    %v2271 = vand.u32 %v2076, 4294901760
    %v2272 = vsub.f32 %v2076, %v2271
    %2273 = vmatmul.f32.gmra.mxu0 %v2272
    %v2274 = vpop.f32.mrf.mxu0
    %v2275 = vadd.f32 %v2221, %v2274
    %2276 = vdwg.mxu0
    %v2277 = vand.u32 %v288, 4294901760
    %2278 = vmatpush.msra.mxu0 %v2277
    %v2279 = vand.u32 %v287, 4294901760
    %2280 = vmatpush.msra.mxu0 %v2279
    %v2281 = vand.u32 %v286, 4294901760
    %2282 = vmatpush.msra.mxu0 %v2281
    %v2283 = vand.u32 %v285, 4294901760
    %2284 = vmatpush.msra.mxu0 %v2283
    %v2285 = vand.u32 %v284, 4294901760
    %2286 = vmatpush.msra.mxu0 %v2285
    %v2287 = vand.u32 %v283, 4294901760
    %2288 = vmatpush.msra.mxu0 %v2287
    %v2289 = vand.u32 %v282, 4294901760
    %2290 = vmatpush.msra.mxu0 %v2289
    %v2291 = vand.u32 %v281, 4294901760
    %2292 = vmatpush.msra.mxu0 %v2291
    %v2293 = vand.u32 %v280, 4294901760
    %2294 = vmatpush.msra.mxu0 %v2293
    %v2295 = vand.u32 %v279, 4294901760
    %2296 = vmatpush.msra.mxu0 %v2295
    %v2297 = vand.u32 %v278, 4294901760
    %2298 = vmatpush.msra.mxu0 %v2297
    %v2299 = vand.u32 %v277, 4294901760
    %2300 = vmatpush.msra.mxu0 %v2299
    %v2301 = vand.u32 %v276, 4294901760
    %2302 = vmatpush.msra.mxu0 %v2301
    %v2303 = vand.u32 %v275, 4294901760
    %2304 = vmatpush.msra.mxu0 %v2303
    %v2305 = vand.u32 %v274, 4294901760
    %2306 = vmatpush.msra.mxu0 %v2305
    %v2307 = vand.u32 %v273, 4294901760
    %2308 = vmatpush.msra.mxu0 %v2307
    %v2309 = vand.u32 %v2076, 4294901760
    %v2310 = vsub.f32 %v2076, %v2309
    %v2311 = vand.u32 %v2310, 4294901760
    %2312 = vmatmul.f32.gmra.mxu0 %v2311
    %v2313 = vpop.f32.mrf.mxu0
    %v2314 = vadd.f32 %v2275, %v2313
    %2315 = vdwg.mxu0
    %v2316 = vand.u32 %v288, 4294901760
    %v2317 = vsub.f32 %v288, %v2316
    %v2318 = vand.u32 %v2317, 4294901760
    %2319 = vmatpush.msra.mxu0 %v2318
    %v2320 = vand.u32 %v287, 4294901760
    %v2321 = vsub.f32 %v287, %v2320
    %v2322 = vand.u32 %v2321, 4294901760
    %2323 = vmatpush.msra.mxu0 %v2322
    %v2324 = vand.u32 %v286, 4294901760
    %v2325 = vsub.f32 %v286, %v2324
    %v2326 = vand.u32 %v2325, 4294901760
    %2327 = vmatpush.msra.mxu0 %v2326
    %v2328 = vand.u32 %v285, 4294901760
    %v2329 = vsub.f32 %v285, %v2328
    %v2330 = vand.u32 %v2329, 4294901760
    %2331 = vmatpush.msra.mxu0 %v2330
    %v2332 = vand.u32 %v284, 4294901760
    %v2333 = vsub.f32 %v284, %v2332
    %v2334 = vand.u32 %v2333, 4294901760
    %2335 = vmatpush.msra.mxu0 %v2334
    %v2336 = vand.u32 %v283, 4294901760
    %v2337 = vsub.f32 %v283, %v2336
    %v2338 = vand.u32 %v2337, 4294901760
    %2339 = vmatpush.msra.mxu0 %v2338
    %v2340 = vand.u32 %v282, 4294901760
    %v2341 = vsub.f32 %v282, %v2340
    %v2342 = vand.u32 %v2341, 4294901760
    %2343 = vmatpush.msra.mxu0 %v2342
    %v2344 = vand.u32 %v281, 4294901760
    %v2345 = vsub.f32 %v281, %v2344
    %v2346 = vand.u32 %v2345, 4294901760
    %2347 = vmatpush.msra.mxu0 %v2346
    %v2348 = vand.u32 %v280, 4294901760
    %v2349 = vsub.f32 %v280, %v2348
    %v2350 = vand.u32 %v2349, 4294901760
    %2351 = vmatpush.msra.mxu0 %v2350
    %v2352 = vand.u32 %v279, 4294901760
    %v2353 = vsub.f32 %v279, %v2352
    %v2354 = vand.u32 %v2353, 4294901760
    %2355 = vmatpush.msra.mxu0 %v2354
    %v2356 = vand.u32 %v278, 4294901760
    %v2357 = vsub.f32 %v278, %v2356
    %v2358 = vand.u32 %v2357, 4294901760
    %2359 = vmatpush.msra.mxu0 %v2358
    %v2360 = vand.u32 %v277, 4294901760
    %v2361 = vsub.f32 %v277, %v2360
    %v2362 = vand.u32 %v2361, 4294901760
    %2363 = vmatpush.msra.mxu0 %v2362
    %v2364 = vand.u32 %v276, 4294901760
    %v2365 = vsub.f32 %v276, %v2364
    %v2366 = vand.u32 %v2365, 4294901760
    %2367 = vmatpush.msra.mxu0 %v2366
    %v2368 = vand.u32 %v275, 4294901760
    %v2369 = vsub.f32 %v275, %v2368
    %v2370 = vand.u32 %v2369, 4294901760
    %2371 = vmatpush.msra.mxu0 %v2370
    %v2372 = vand.u32 %v274, 4294901760
    %v2373 = vsub.f32 %v274, %v2372
    %v2374 = vand.u32 %v2373, 4294901760
    %2375 = vmatpush.msra.mxu0 %v2374
    %v2376 = vand.u32 %v273, 4294901760
    %v2377 = vsub.f32 %v273, %v2376
    %v2378 = vand.u32 %v2377, 4294901760
    %2379 = vmatpush.msra.mxu0 %v2378
    %v2380 = vand.u32 %v2076, 4294901760
    %2381 = vmatmul.f32.gmra.mxu0 %v2380
    %v2382 = vpop.f32.mrf.mxu0
    %v2383 = vadd.f32 %v2314, %v2382
    %2384 = vdwg.mxu0
    %v2385 = vand.u32 %v288, 4294901760
    %2386 = vmatpush.msra.mxu0 %v2385
    %v2387 = vand.u32 %v287, 4294901760
    %2388 = vmatpush.msra.mxu0 %v2387
    %v2389 = vand.u32 %v286, 4294901760
    %2390 = vmatpush.msra.mxu0 %v2389
    %v2391 = vand.u32 %v285, 4294901760
    %2392 = vmatpush.msra.mxu0 %v2391
    %v2393 = vand.u32 %v284, 4294901760
    %2394 = vmatpush.msra.mxu0 %v2393
    %v2395 = vand.u32 %v283, 4294901760
    %2396 = vmatpush.msra.mxu0 %v2395
    %v2397 = vand.u32 %v282, 4294901760
    %2398 = vmatpush.msra.mxu0 %v2397
    %v2399 = vand.u32 %v281, 4294901760
    %2400 = vmatpush.msra.mxu0 %v2399
    %v2401 = vand.u32 %v280, 4294901760
    %2402 = vmatpush.msra.mxu0 %v2401
    %v2403 = vand.u32 %v279, 4294901760
    %2404 = vmatpush.msra.mxu0 %v2403
    %v2405 = vand.u32 %v278, 4294901760
    %2406 = vmatpush.msra.mxu0 %v2405
    %v2407 = vand.u32 %v277, 4294901760
    %2408 = vmatpush.msra.mxu0 %v2407
    %v2409 = vand.u32 %v276, 4294901760
    %2410 = vmatpush.msra.mxu0 %v2409
    %v2411 = vand.u32 %v275, 4294901760
    %2412 = vmatpush.msra.mxu0 %v2411
    %v2413 = vand.u32 %v274, 4294901760
    %2414 = vmatpush.msra.mxu0 %v2413
    %v2415 = vand.u32 %v273, 4294901760
    %2416 = vmatpush.msra.mxu0 %v2415
    %v2417 = vand.u32 %v2076, 4294901760
    %2418 = vmatmul.f32.gmra.mxu0 %v2417
    %v2419 = vpop.f32.mrf.mxu0
    %v2420 = vadd.f32 %v2383, %v2419
    %2421 = vdwg.mxu0
    %v2422 = vand.u32 %v304, 4294901760
    %2423 = vmatpush.msra.mxu0 %v2422
    %v2424 = vand.u32 %v303, 4294901760
    %2425 = vmatpush.msra.mxu0 %v2424
    %v2426 = vand.u32 %v302, 4294901760
    %2427 = vmatpush.msra.mxu0 %v2426
    %v2428 = vand.u32 %v301, 4294901760
    %2429 = vmatpush.msra.mxu0 %v2428
    %v2430 = vand.u32 %v300, 4294901760
    %2431 = vmatpush.msra.mxu0 %v2430
    %v2432 = vand.u32 %v299, 4294901760
    %2433 = vmatpush.msra.mxu0 %v2432
    %v2434 = vand.u32 %v298, 4294901760
    %2435 = vmatpush.msra.mxu0 %v2434
    %v2436 = vand.u32 %v297, 4294901760
    %2437 = vmatpush.msra.mxu0 %v2436
    %v2438 = vand.u32 %v296, 4294901760
    %2439 = vmatpush.msra.mxu0 %v2438
    %v2440 = vand.u32 %v295, 4294901760
    %2441 = vmatpush.msra.mxu0 %v2440
    %v2442 = vand.u32 %v294, 4294901760
    %2443 = vmatpush.msra.mxu0 %v2442
    %v2444 = vand.u32 %v293, 4294901760
    %2445 = vmatpush.msra.mxu0 %v2444
    %v2446 = vand.u32 %v292, 4294901760
    %2447 = vmatpush.msra.mxu0 %v2446
    %v2448 = vand.u32 %v291, 4294901760
    %2449 = vmatpush.msra.mxu0 %v2448
    %v2450 = vand.u32 %v290, 4294901760
    %2451 = vmatpush.msra.mxu0 %v2450
    %v2452 = vand.u32 %v289, 4294901760
    %2453 = vmatpush.msra.mxu0 %v2452
    %v2454 = vand.u32 %v2077, 4294901760
    %v2455 = vsub.f32 %v2077, %v2454
    %v2456 = vand.u32 %v2455, 4294901760
    %v2457 = vsub.f32 %v2455, %v2456
    %v2458 = vand.u32 %v2457, 4294901760
    %2459 = vmatmul.f32.gmra.mxu0 %v2458
    %v2460 = vpop.f32.mrf.mxu0
    %v2461 = vadd.f32 %v2420, %v2460
    %2462 = vdwg.mxu0
    %v2463 = vand.u32 %v304, 4294901760
    %v2464 = vsub.f32 %v304, %v2463
    %v2465 = vand.u32 %v2464, 4294901760
    %v2466 = vsub.f32 %v2464, %v2465
    %v2467 = vand.u32 %v2466, 4294901760
    %2468 = vmatpush.msra.mxu0 %v2467
    %v2469 = vand.u32 %v303, 4294901760
    %v2470 = vsub.f32 %v303, %v2469
    %v2471 = vand.u32 %v2470, 4294901760
    %v2472 = vsub.f32 %v2470, %v2471
    %v2473 = vand.u32 %v2472, 4294901760
    %2474 = vmatpush.msra.mxu0 %v2473
    %v2475 = vand.u32 %v302, 4294901760
    %v2476 = vsub.f32 %v302, %v2475
    %v2477 = vand.u32 %v2476, 4294901760
    %v2478 = vsub.f32 %v2476, %v2477
    %v2479 = vand.u32 %v2478, 4294901760
    %2480 = vmatpush.msra.mxu0 %v2479
    %v2481 = vand.u32 %v301, 4294901760
    %v2482 = vsub.f32 %v301, %v2481
    %v2483 = vand.u32 %v2482, 4294901760
    %v2484 = vsub.f32 %v2482, %v2483
    %v2485 = vand.u32 %v2484, 4294901760
    %2486 = vmatpush.msra.mxu0 %v2485
    %v2487 = vand.u32 %v300, 4294901760
    %v2488 = vsub.f32 %v300, %v2487
    %v2489 = vand.u32 %v2488, 4294901760
    %v2490 = vsub.f32 %v2488, %v2489
    %v2491 = vand.u32 %v2490, 4294901760
    %2492 = vmatpush.msra.mxu0 %v2491
    %v2493 = vand.u32 %v299, 4294901760
    %v2494 = vsub.f32 %v299, %v2493
    %v2495 = vand.u32 %v2494, 4294901760
    %v2496 = vsub.f32 %v2494, %v2495
    %v2497 = vand.u32 %v2496, 4294901760
    %2498 = vmatpush.msra.mxu0 %v2497
    %v2499 = vand.u32 %v298, 4294901760
    %v2500 = vsub.f32 %v298, %v2499
    %v2501 = vand.u32 %v2500, 4294901760
    %v2502 = vsub.f32 %v2500, %v2501
    %v2503 = vand.u32 %v2502, 4294901760
    %2504 = vmatpush.msra.mxu0 %v2503
    %v2505 = vand.u32 %v297, 4294901760
    %v2506 = vsub.f32 %v297, %v2505
    %v2507 = vand.u32 %v2506, 4294901760
    %v2508 = vsub.f32 %v2506, %v2507
    %v2509 = vand.u32 %v2508, 4294901760
    %2510 = vmatpush.msra.mxu0 %v2509
    %v2511 = vand.u32 %v296, 4294901760
    %v2512 = vsub.f32 %v296, %v2511
    %v2513 = vand.u32 %v2512, 4294901760
    %v2514 = vsub.f32 %v2512, %v2513
    %v2515 = vand.u32 %v2514, 4294901760
    %2516 = vmatpush.msra.mxu0 %v2515
    %v2517 = vand.u32 %v295, 4294901760
    %v2518 = vsub.f32 %v295, %v2517
    %v2519 = vand.u32 %v2518, 4294901760
    %v2520 = vsub.f32 %v2518, %v2519
    %v2521 = vand.u32 %v2520, 4294901760
    %2522 = vmatpush.msra.mxu0 %v2521
    %v2523 = vand.u32 %v294, 4294901760
    %v2524 = vsub.f32 %v294, %v2523
    %v2525 = vand.u32 %v2524, 4294901760
    %v2526 = vsub.f32 %v2524, %v2525
    %v2527 = vand.u32 %v2526, 4294901760
    %2528 = vmatpush.msra.mxu0 %v2527
    %v2529 = vand.u32 %v293, 4294901760
    %v2530 = vsub.f32 %v293, %v2529
    %v2531 = vand.u32 %v2530, 4294901760
    %v2532 = vsub.f32 %v2530, %v2531
    %v2533 = vand.u32 %v2532, 4294901760
    %2534 = vmatpush.msra.mxu0 %v2533
    %v2535 = vand.u32 %v292, 4294901760
    %v2536 = vsub.f32 %v292, %v2535
    %v2537 = vand.u32 %v2536, 4294901760
    %v2538 = vsub.f32 %v2536, %v2537
    %v2539 = vand.u32 %v2538, 4294901760
    %2540 = vmatpush.msra.mxu0 %v2539
    %v2541 = vand.u32 %v291, 4294901760
    %v2542 = vsub.f32 %v291, %v2541
    %v2543 = vand.u32 %v2542, 4294901760
    %v2544 = vsub.f32 %v2542, %v2543
    %v2545 = vand.u32 %v2544, 4294901760
    %2546 = vmatpush.msra.mxu0 %v2545
    %v2547 = vand.u32 %v290, 4294901760
    %v2548 = vsub.f32 %v290, %v2547
    %v2549 = vand.u32 %v2548, 4294901760
    %v2550 = vsub.f32 %v2548, %v2549
    %v2551 = vand.u32 %v2550, 4294901760
    %2552 = vmatpush.msra.mxu0 %v2551
    %v2553 = vand.u32 %v289, 4294901760
    %v2554 = vsub.f32 %v289, %v2553
    %v2555 = vand.u32 %v2554, 4294901760
    %v2556 = vsub.f32 %v2554, %v2555
    %v2557 = vand.u32 %v2556, 4294901760
    %2558 = vmatpush.msra.mxu0 %v2557
    %v2559 = vand.u32 %v2077, 4294901760
    %2560 = vmatmul.f32.gmra.mxu0 %v2559
    %v2561 = vpop.f32.mrf.mxu0
    %v2562 = vadd.f32 %v2461, %v2561
    %2563 = vdwg.mxu0
    %v2564 = vand.u32 %v304, 4294901760
    %v2565 = vsub.f32 %v304, %v2564
    %2566 = vmatpush.msra.mxu0 %v2565
    %v2567 = vand.u32 %v303, 4294901760
    %v2568 = vsub.f32 %v303, %v2567
    %2569 = vmatpush.msra.mxu0 %v2568
    %v2570 = vand.u32 %v302, 4294901760
    %v2571 = vsub.f32 %v302, %v2570
    %2572 = vmatpush.msra.mxu0 %v2571
    %v2573 = vand.u32 %v301, 4294901760
    %v2574 = vsub.f32 %v301, %v2573
    %2575 = vmatpush.msra.mxu0 %v2574
    %v2576 = vand.u32 %v300, 4294901760
    %v2577 = vsub.f32 %v300, %v2576
    %2578 = vmatpush.msra.mxu0 %v2577
    %v2579 = vand.u32 %v299, 4294901760
    %v2580 = vsub.f32 %v299, %v2579
    %2581 = vmatpush.msra.mxu0 %v2580
    %v2582 = vand.u32 %v298, 4294901760
    %v2583 = vsub.f32 %v298, %v2582
    %2584 = vmatpush.msra.mxu0 %v2583
    %v2585 = vand.u32 %v297, 4294901760
    %v2586 = vsub.f32 %v297, %v2585
    %2587 = vmatpush.msra.mxu0 %v2586
    %v2588 = vand.u32 %v296, 4294901760
    %v2589 = vsub.f32 %v296, %v2588
    %2590 = vmatpush.msra.mxu0 %v2589
    %v2591 = vand.u32 %v295, 4294901760
    %v2592 = vsub.f32 %v295, %v2591
    %2593 = vmatpush.msra.mxu0 %v2592
    %v2594 = vand.u32 %v294, 4294901760
    %v2595 = vsub.f32 %v294, %v2594
    %2596 = vmatpush.msra.mxu0 %v2595
    %v2597 = vand.u32 %v293, 4294901760
    %v2598 = vsub.f32 %v293, %v2597
    %2599 = vmatpush.msra.mxu0 %v2598
    %v2600 = vand.u32 %v292, 4294901760
    %v2601 = vsub.f32 %v292, %v2600
    %2602 = vmatpush.msra.mxu0 %v2601
    %v2603 = vand.u32 %v291, 4294901760
    %v2604 = vsub.f32 %v291, %v2603
    %2605 = vmatpush.msra.mxu0 %v2604
    %v2606 = vand.u32 %v290, 4294901760
    %v2607 = vsub.f32 %v290, %v2606
    %2608 = vmatpush.msra.mxu0 %v2607
    %v2609 = vand.u32 %v289, 4294901760
    %v2610 = vsub.f32 %v289, %v2609
    %2611 = vmatpush.msra.mxu0 %v2610
    %v2612 = vand.u32 %v2077, 4294901760
    %v2613 = vsub.f32 %v2077, %v2612
    %2614 = vmatmul.f32.gmra.mxu0 %v2613
    %v2615 = vpop.f32.mrf.mxu0
    %v2616 = vadd.f32 %v2562, %v2615
    %2617 = vdwg.mxu0
    %v2618 = vand.u32 %v304, 4294901760
    %2619 = vmatpush.msra.mxu0 %v2618
    %v2620 = vand.u32 %v303, 4294901760
    %2621 = vmatpush.msra.mxu0 %v2620
    %v2622 = vand.u32 %v302, 4294901760
    %2623 = vmatpush.msra.mxu0 %v2622
    %v2624 = vand.u32 %v301, 4294901760
    %2625 = vmatpush.msra.mxu0 %v2624
    %v2626 = vand.u32 %v300, 4294901760
    %2627 = vmatpush.msra.mxu0 %v2626
    %v2628 = vand.u32 %v299, 4294901760
    %2629 = vmatpush.msra.mxu0 %v2628
    %v2630 = vand.u32 %v298, 4294901760
    %2631 = vmatpush.msra.mxu0 %v2630
    %v2632 = vand.u32 %v297, 4294901760
    %2633 = vmatpush.msra.mxu0 %v2632
    %v2634 = vand.u32 %v296, 4294901760
    %2635 = vmatpush.msra.mxu0 %v2634
    %v2636 = vand.u32 %v295, 4294901760
    %2637 = vmatpush.msra.mxu0 %v2636
    %v2638 = vand.u32 %v294, 4294901760
    %2639 = vmatpush.msra.mxu0 %v2638
    %v2640 = vand.u32 %v293, 4294901760
    %2641 = vmatpush.msra.mxu0 %v2640
    %v2642 = vand.u32 %v292, 4294901760
    %2643 = vmatpush.msra.mxu0 %v2642
    %v2644 = vand.u32 %v291, 4294901760
    %2645 = vmatpush.msra.mxu0 %v2644
    %v2646 = vand.u32 %v290, 4294901760
    %2647 = vmatpush.msra.mxu0 %v2646
    %v2648 = vand.u32 %v289, 4294901760
    %2649 = vmatpush.msra.mxu0 %v2648
    %v2650 = vand.u32 %v2077, 4294901760
    %v2651 = vsub.f32 %v2077, %v2650
    %v2652 = vand.u32 %v2651, 4294901760
    %2653 = vmatmul.f32.gmra.mxu0 %v2652
    %v2654 = vpop.f32.mrf.mxu0
    %v2655 = vadd.f32 %v2616, %v2654
    %2656 = vdwg.mxu0
    %v2657 = vand.u32 %v304, 4294901760
    %v2658 = vsub.f32 %v304, %v2657
    %v2659 = vand.u32 %v2658, 4294901760
    %2660 = vmatpush.msra.mxu0 %v2659
    %v2661 = vand.u32 %v303, 4294901760
    %v2662 = vsub.f32 %v303, %v2661
    %v2663 = vand.u32 %v2662, 4294901760
    %2664 = vmatpush.msra.mxu0 %v2663
    %v2665 = vand.u32 %v302, 4294901760
    %v2666 = vsub.f32 %v302, %v2665
    %v2667 = vand.u32 %v2666, 4294901760
    %2668 = vmatpush.msra.mxu0 %v2667
    %v2669 = vand.u32 %v301, 4294901760
    %v2670 = vsub.f32 %v301, %v2669
    %v2671 = vand.u32 %v2670, 4294901760
    %2672 = vmatpush.msra.mxu0 %v2671
    %v2673 = vand.u32 %v300, 4294901760
    %v2674 = vsub.f32 %v300, %v2673
    %v2675 = vand.u32 %v2674, 4294901760
    %2676 = vmatpush.msra.mxu0 %v2675
    %v2677 = vand.u32 %v299, 4294901760
    %v2678 = vsub.f32 %v299, %v2677
    %v2679 = vand.u32 %v2678, 4294901760
    %2680 = vmatpush.msra.mxu0 %v2679
    %v2681 = vand.u32 %v298, 4294901760
    %v2682 = vsub.f32 %v298, %v2681
    %v2683 = vand.u32 %v2682, 4294901760
    %2684 = vmatpush.msra.mxu0 %v2683
    %v2685 = vand.u32 %v297, 4294901760
    %v2686 = vsub.f32 %v297, %v2685
    %v2687 = vand.u32 %v2686, 4294901760
    %2688 = vmatpush.msra.mxu0 %v2687
    %v2689 = vand.u32 %v296, 4294901760
    %v2690 = vsub.f32 %v296, %v2689
    %v2691 = vand.u32 %v2690, 4294901760
    %2692 = vmatpush.msra.mxu0 %v2691
    %v2693 = vand.u32 %v295, 4294901760
    %v2694 = vsub.f32 %v295, %v2693
    %v2695 = vand.u32 %v2694, 4294901760
    %2696 = vmatpush.msra.mxu0 %v2695
    %v2697 = vand.u32 %v294, 4294901760
    %v2698 = vsub.f32 %v294, %v2697
    %v2699 = vand.u32 %v2698, 4294901760
    %2700 = vmatpush.msra.mxu0 %v2699
    %v2701 = vand.u32 %v293, 4294901760
    %v2702 = vsub.f32 %v293, %v2701
    %v2703 = vand.u32 %v2702, 4294901760
    %2704 = vmatpush.msra.mxu0 %v2703
    %v2705 = vand.u32 %v292, 4294901760
    %v2706 = vsub.f32 %v292, %v2705
    %v2707 = vand.u32 %v2706, 4294901760
    %2708 = vmatpush.msra.mxu0 %v2707
    %v2709 = vand.u32 %v291, 4294901760
    %v2710 = vsub.f32 %v291, %v2709
    %v2711 = vand.u32 %v2710, 4294901760
    %2712 = vmatpush.msra.mxu0 %v2711
    %v2713 = vand.u32 %v290, 4294901760
    %v2714 = vsub.f32 %v290, %v2713
    %v2715 = vand.u32 %v2714, 4294901760
    %2716 = vmatpush.msra.mxu0 %v2715
    %v2717 = vand.u32 %v289, 4294901760
    %v2718 = vsub.f32 %v289, %v2717
    %v2719 = vand.u32 %v2718, 4294901760
    %2720 = vmatpush.msra.mxu0 %v2719
    %v2721 = vand.u32 %v2077, 4294901760
    %2722 = vmatmul.f32.gmra.mxu0 %v2721
    %v2723 = vpop.f32.mrf.mxu0
    %v2724 = vadd.f32 %v2655, %v2723
    %2725 = vdwg.mxu0
    %v2726 = vand.u32 %v304, 4294901760
    %2727 = vmatpush.msra.mxu0 %v2726
    %v2728 = vand.u32 %v303, 4294901760
    %2729 = vmatpush.msra.mxu0 %v2728
    %v2730 = vand.u32 %v302, 4294901760
    %2731 = vmatpush.msra.mxu0 %v2730
    %v2732 = vand.u32 %v301, 4294901760
    %2733 = vmatpush.msra.mxu0 %v2732
    %v2734 = vand.u32 %v300, 4294901760
    %2735 = vmatpush.msra.mxu0 %v2734
    %v2736 = vand.u32 %v299, 4294901760
    %2737 = vmatpush.msra.mxu0 %v2736
    %v2738 = vand.u32 %v298, 4294901760
    %2739 = vmatpush.msra.mxu0 %v2738
    %v2740 = vand.u32 %v297, 4294901760
    %2741 = vmatpush.msra.mxu0 %v2740
    %v2742 = vand.u32 %v296, 4294901760
    %2743 = vmatpush.msra.mxu0 %v2742
    %v2744 = vand.u32 %v295, 4294901760
    %2745 = vmatpush.msra.mxu0 %v2744
    %v2746 = vand.u32 %v294, 4294901760
    %2747 = vmatpush.msra.mxu0 %v2746
    %v2748 = vand.u32 %v293, 4294901760
    %2749 = vmatpush.msra.mxu0 %v2748
    %v2750 = vand.u32 %v292, 4294901760
    %2751 = vmatpush.msra.mxu0 %v2750
    %v2752 = vand.u32 %v291, 4294901760
    %2753 = vmatpush.msra.mxu0 %v2752
    %v2754 = vand.u32 %v290, 4294901760
    %2755 = vmatpush.msra.mxu0 %v2754
    %v2756 = vand.u32 %v289, 4294901760
    %2757 = vmatpush.msra.mxu0 %v2756
    %v2758 = vand.u32 %v2077, 4294901760
    %2759 = vmatmul.f32.gmra.mxu0 %v2758
    %v2760 = vpop.f32.mrf.mxu0
    %v2761 = vadd.f32 %v2724, %v2760
    %2762 = vdwg.mxu0
    %2763 = vst [vmem:[#allocation19] sm:$0xff] %v2761
    %v2764 = vld [vmem:[#allocation7] sm:$0xff]
    %v2766 = vsel %vm310, %v2764, 0
    %2768 = vmatpush.msra.mxu0 0.0
    %2769 = vmatpush.msra.mxu0 0.0
    %2770 = vmatpush.msra.mxu0 0.0
    %2771 = vmatpush.msra.mxu0 0.0
    %2772 = vmatpush.msra.mxu0 0.0
    %2773 = vmatpush.msra.mxu0 0.0
    %2774 = vmatpush.msra.mxu0 0.0
    %2775 = vmatpush.msra.mxu0 0.0
    %2776 = vmatpush.msra.mxu0 0.0
    %2777 = vmatpush.msra.mxu0 0.0
    %2778 = vmatpush.msra.mxu0 0.0
    %2779 = vmatpush.msra.mxu0 0.0
    %2780 = vmatpush.msra.mxu0 0.0
    %2781 = vmatpush.msra.mxu0 0.0
    %2782 = vmatpush.msra.mxu0 0.0
    %v2783 = vand.u32 %v207, 4294901760
    %2784 = vmatpush.msra.mxu0 %v2783
    %v2785 = vand.u32 %v2766, 4294901760
    %v2786 = vsub.f32 %v2766, %v2785
    %v2787 = vand.u32 %v2786, 4294901760
    %v2788 = vsub.f32 %v2786, %v2787
    %v2789 = vand.u32 %v2788, 4294901760
    %2790 = vmatmul.f32.gmra.mxu0 %v2789
    %v2791 = vpop.f32.mrf.mxu0
    %v2792 = vadd.f32 %v308, %v2791
    %2793 = vdwg.mxu0
    %2794 = vmatpush.msra.mxu0 0.0
    %2795 = vmatpush.msra.mxu0 0.0
    %2796 = vmatpush.msra.mxu0 0.0
    %2797 = vmatpush.msra.mxu0 0.0
    %2798 = vmatpush.msra.mxu0 0.0
    %2799 = vmatpush.msra.mxu0 0.0
    %2800 = vmatpush.msra.mxu0 0.0
    %2801 = vmatpush.msra.mxu0 0.0
    %2802 = vmatpush.msra.mxu0 0.0
    %2803 = vmatpush.msra.mxu0 0.0
    %2804 = vmatpush.msra.mxu0 0.0
    %2805 = vmatpush.msra.mxu0 0.0
    %2806 = vmatpush.msra.mxu0 0.0
    %2807 = vmatpush.msra.mxu0 0.0
    %2808 = vmatpush.msra.mxu0 0.0
    %v2809 = vand.u32 %v207, 4294901760
    %v2810 = vsub.f32 %v207, %v2809
    %v2811 = vand.u32 %v2810, 4294901760
    %v2812 = vsub.f32 %v2810, %v2811
    %v2813 = vand.u32 %v2812, 4294901760
    %2814 = vmatpush.msra.mxu0 %v2813
    %v2815 = vand.u32 %v2766, 4294901760
    %2816 = vmatmul.f32.gmra.mxu0 %v2815
    %v2817 = vpop.f32.mrf.mxu0
    %v2818 = vadd.f32 %v2792, %v2817
    %2819 = vdwg.mxu0
    %2820 = vmatpush.msra.mxu0 0.0
    %2821 = vmatpush.msra.mxu0 0.0
    %2822 = vmatpush.msra.mxu0 0.0
    %2823 = vmatpush.msra.mxu0 0.0
    %2824 = vmatpush.msra.mxu0 0.0
    %2825 = vmatpush.msra.mxu0 0.0
    %2826 = vmatpush.msra.mxu0 0.0
    %2827 = vmatpush.msra.mxu0 0.0
    %2828 = vmatpush.msra.mxu0 0.0
    %2829 = vmatpush.msra.mxu0 0.0
    %2830 = vmatpush.msra.mxu0 0.0
    %2831 = vmatpush.msra.mxu0 0.0
    %2832 = vmatpush.msra.mxu0 0.0
    %2833 = vmatpush.msra.mxu0 0.0
    %2834 = vmatpush.msra.mxu0 0.0
    %v2835 = vand.u32 %v207, 4294901760
    %v2836 = vsub.f32 %v207, %v2835
    %2837 = vmatpush.msra.mxu0 %v2836
    %v2838 = vand.u32 %v2766, 4294901760
    %v2839 = vsub.f32 %v2766, %v2838
    %2840 = vmatmul.f32.gmra.mxu0 %v2839
    %v2841 = vpop.f32.mrf.mxu0
    %v2842 = vadd.f32 %v2818, %v2841
    %2843 = vdwg.mxu0
    %2844 = vmatpush.msra.mxu0 0.0
    %2845 = vmatpush.msra.mxu0 0.0
    %2846 = vmatpush.msra.mxu0 0.0
    %2847 = vmatpush.msra.mxu0 0.0
    %2848 = vmatpush.msra.mxu0 0.0
    %2849 = vmatpush.msra.mxu0 0.0
    %2850 = vmatpush.msra.mxu0 0.0
    %2851 = vmatpush.msra.mxu0 0.0
    %2852 = vmatpush.msra.mxu0 0.0
    %2853 = vmatpush.msra.mxu0 0.0
    %2854 = vmatpush.msra.mxu0 0.0
    %2855 = vmatpush.msra.mxu0 0.0
    %2856 = vmatpush.msra.mxu0 0.0
    %2857 = vmatpush.msra.mxu0 0.0
    %2858 = vmatpush.msra.mxu0 0.0
    %v2859 = vand.u32 %v207, 4294901760
    %2860 = vmatpush.msra.mxu0 %v2859
    %v2861 = vand.u32 %v2766, 4294901760
    %v2862 = vsub.f32 %v2766, %v2861
    %v2863 = vand.u32 %v2862, 4294901760
    %2864 = vmatmul.f32.gmra.mxu0 %v2863
    %v2865 = vpop.f32.mrf.mxu0
    %v2866 = vadd.f32 %v2842, %v2865
    %2867 = vdwg.mxu0
    %2868 = vmatpush.msra.mxu0 0.0
    %2869 = vmatpush.msra.mxu0 0.0
    %2870 = vmatpush.msra.mxu0 0.0
    %2871 = vmatpush.msra.mxu0 0.0
    %2872 = vmatpush.msra.mxu0 0.0
    %2873 = vmatpush.msra.mxu0 0.0
    %2874 = vmatpush.msra.mxu0 0.0
    %2875 = vmatpush.msra.mxu0 0.0
    %2876 = vmatpush.msra.mxu0 0.0
    %2877 = vmatpush.msra.mxu0 0.0
    %2878 = vmatpush.msra.mxu0 0.0
    %2879 = vmatpush.msra.mxu0 0.0
    %2880 = vmatpush.msra.mxu0 0.0
    %2881 = vmatpush.msra.mxu0 0.0
    %2882 = vmatpush.msra.mxu0 0.0
    %v2883 = vand.u32 %v207, 4294901760
    %v2884 = vsub.f32 %v207, %v2883
    %v2885 = vand.u32 %v2884, 4294901760
    %2886 = vmatpush.msra.mxu0 %v2885
    %v2887 = vand.u32 %v2766, 4294901760
    %2888 = vmatmul.f32.gmra.mxu0 %v2887
    %v2889 = vpop.f32.mrf.mxu0
    %v2890 = vadd.f32 %v2866, %v2889
    %2891 = vdwg.mxu0
    %2892 = vmatpush.msra.mxu0 0.0
    %2893 = vmatpush.msra.mxu0 0.0
    %2894 = vmatpush.msra.mxu0 0.0
    %2895 = vmatpush.msra.mxu0 0.0
    %2896 = vmatpush.msra.mxu0 0.0
    %2897 = vmatpush.msra.mxu0 0.0
    %2898 = vmatpush.msra.mxu0 0.0
    %2899 = vmatpush.msra.mxu0 0.0
    %2900 = vmatpush.msra.mxu0 0.0
    %2901 = vmatpush.msra.mxu0 0.0
    %2902 = vmatpush.msra.mxu0 0.0
    %2903 = vmatpush.msra.mxu0 0.0
    %2904 = vmatpush.msra.mxu0 0.0
    %2905 = vmatpush.msra.mxu0 0.0
    %2906 = vmatpush.msra.mxu0 0.0
    %v2907 = vand.u32 %v207, 4294901760
    %2908 = vmatpush.msra.mxu0 %v2907
    %v2909 = vand.u32 %v2766, 4294901760
    %2910 = vmatmul.f32.gmra.mxu0 %v2909
    %v2911 = vpop.f32.mrf.mxu0
    %v2912 = vadd.f32 %v2890, %v2911
    %2913 = vdwg.mxu0
    %v2914 = vmax.f32 %v2912, 0.0
    %v2915 = vsub.f32 0.0, %v2914
    %v2916 = vmul.f32 %v2915, 1.442695
    %v2917 = vpow.pop %v2916
    %v2918 = vadd.f32 %v2917, 1.0
    %v2919 = vrcp.pop %v2918
    %v2920 = vmul.f32 %v2918, %v2919
    %v2921 = vsub.f32 1.0, %v2920
    %v2922 = vmul.f32 %v2919, %v2921
    %v2923 = vadd.f32 %v2919, %v2922
    %vm2924 = vweird.f32 %v2918
    %vm2925 = vweird.f32 %v2919
    %vm2926 = vmor %vm2924, %vm2925
    %v2927 = vsel %vm2926, %v2919, %v2923
    %v2928 = vand.u32 2147483647, %v2918
    %vm2929 = vcmp.eq.f32.partialorder %v2928, 8.507059e+37
    %v2930 = vand.u32 %v2918, 2147483648
    %v2931 = vor.u32 1.1754944e-38, %v2930
    %v2932 = vsel %vm2929, %v2931, %v2927
    %v2933 = vmul.f32 1.0, %v2932
    %2934 = vmatpush.msra.mxu0 0.0
    %2935 = vmatpush.msra.mxu0 0.0
    %2936 = vmatpush.msra.mxu0 0.0
    %2937 = vmatpush.msra.mxu0 0.0
    %2938 = vmatpush.msra.mxu0 0.0
    %2939 = vmatpush.msra.mxu0 0.0
    %2940 = vmatpush.msra.mxu0 0.0
    %2941 = vmatpush.msra.mxu0 0.0
    %2942 = vmatpush.msra.mxu0 0.0
    %2943 = vmatpush.msra.mxu0 0.0
    %2944 = vmatpush.msra.mxu0 0.0
    %2945 = vmatpush.msra.mxu0 0.0
    %2946 = vmatpush.msra.mxu0 0.0
    %2947 = vmatpush.msra.mxu0 0.0
    %2948 = vmatpush.msra.mxu0 0.0
    %v2949 = vand.u32 %v209, 4294901760
    %2950 = vmatpush.msra.mxu0 %v2949
    %v2951 = vand.u32 %v2766, 4294901760
    %v2952 = vsub.f32 %v2766, %v2951
    %v2953 = vand.u32 %v2952, 4294901760
    %v2954 = vsub.f32 %v2952, %v2953
    %v2955 = vand.u32 %v2954, 4294901760
    %2956 = vmatmul.f32.gmra.mxu0 %v2955
    %v2957 = vpop.f32.mrf.mxu0
    %v2958 = vadd.f32 %v481, %v2957
    %2959 = vdwg.mxu0
    %2960 = vmatpush.msra.mxu0 0.0
    %2961 = vmatpush.msra.mxu0 0.0
    %2962 = vmatpush.msra.mxu0 0.0
    %2963 = vmatpush.msra.mxu0 0.0
    %2964 = vmatpush.msra.mxu0 0.0
    %2965 = vmatpush.msra.mxu0 0.0
    %2966 = vmatpush.msra.mxu0 0.0
    %2967 = vmatpush.msra.mxu0 0.0
    %2968 = vmatpush.msra.mxu0 0.0
    %2969 = vmatpush.msra.mxu0 0.0
    %2970 = vmatpush.msra.mxu0 0.0
    %2971 = vmatpush.msra.mxu0 0.0
    %2972 = vmatpush.msra.mxu0 0.0
    %2973 = vmatpush.msra.mxu0 0.0
    %2974 = vmatpush.msra.mxu0 0.0
    %v2975 = vand.u32 %v209, 4294901760
    %v2976 = vsub.f32 %v209, %v2975
    %v2977 = vand.u32 %v2976, 4294901760
    %v2978 = vsub.f32 %v2976, %v2977
    %v2979 = vand.u32 %v2978, 4294901760
    %2980 = vmatpush.msra.mxu0 %v2979
    %v2981 = vand.u32 %v2766, 4294901760
    %2982 = vmatmul.f32.gmra.mxu0 %v2981
    %v2983 = vpop.f32.mrf.mxu0
    %v2984 = vadd.f32 %v2958, %v2983
    %2985 = vdwg.mxu0
    %2986 = vmatpush.msra.mxu0 0.0
    %2987 = vmatpush.msra.mxu0 0.0
    %2988 = vmatpush.msra.mxu0 0.0
    %2989 = vmatpush.msra.mxu0 0.0
    %2990 = vmatpush.msra.mxu0 0.0
    %2991 = vmatpush.msra.mxu0 0.0
    %2992 = vmatpush.msra.mxu0 0.0
    %2993 = vmatpush.msra.mxu0 0.0
    %2994 = vmatpush.msra.mxu0 0.0
    %2995 = vmatpush.msra.mxu0 0.0
    %2996 = vmatpush.msra.mxu0 0.0
    %2997 = vmatpush.msra.mxu0 0.0
    %2998 = vmatpush.msra.mxu0 0.0
    %2999 = vmatpush.msra.mxu0 0.0
    %3000 = vmatpush.msra.mxu0 0.0
    %v3001 = vand.u32 %v209, 4294901760
    %v3002 = vsub.f32 %v209, %v3001
    %3003 = vmatpush.msra.mxu0 %v3002
    %v3004 = vand.u32 %v2766, 4294901760
    %v3005 = vsub.f32 %v2766, %v3004
    %3006 = vmatmul.f32.gmra.mxu0 %v3005
    %v3007 = vpop.f32.mrf.mxu0
    %v3008 = vadd.f32 %v2984, %v3007
    %3009 = vdwg.mxu0
    %3010 = vmatpush.msra.mxu0 0.0
    %3011 = vmatpush.msra.mxu0 0.0
    %3012 = vmatpush.msra.mxu0 0.0
    %3013 = vmatpush.msra.mxu0 0.0
    %3014 = vmatpush.msra.mxu0 0.0
    %3015 = vmatpush.msra.mxu0 0.0
    %3016 = vmatpush.msra.mxu0 0.0
    %3017 = vmatpush.msra.mxu0 0.0
    %3018 = vmatpush.msra.mxu0 0.0
    %3019 = vmatpush.msra.mxu0 0.0
    %3020 = vmatpush.msra.mxu0 0.0
    %3021 = vmatpush.msra.mxu0 0.0
    %3022 = vmatpush.msra.mxu0 0.0
    %3023 = vmatpush.msra.mxu0 0.0
    %3024 = vmatpush.msra.mxu0 0.0
    %v3025 = vand.u32 %v209, 4294901760
    %3026 = vmatpush.msra.mxu0 %v3025
    %v3027 = vand.u32 %v2766, 4294901760
    %v3028 = vsub.f32 %v2766, %v3027
    %v3029 = vand.u32 %v3028, 4294901760
    %3030 = vmatmul.f32.gmra.mxu0 %v3029
    %v3031 = vpop.f32.mrf.mxu0
    %v3032 = vadd.f32 %v3008, %v3031
    %3033 = vdwg.mxu0
    %3034 = vmatpush.msra.mxu0 0.0
    %3035 = vmatpush.msra.mxu0 0.0
    %3036 = vmatpush.msra.mxu0 0.0
    %3037 = vmatpush.msra.mxu0 0.0
    %3038 = vmatpush.msra.mxu0 0.0
    %3039 = vmatpush.msra.mxu0 0.0
    %3040 = vmatpush.msra.mxu0 0.0
    %3041 = vmatpush.msra.mxu0 0.0
    %3042 = vmatpush.msra.mxu0 0.0
    %3043 = vmatpush.msra.mxu0 0.0
    %3044 = vmatpush.msra.mxu0 0.0
    %3045 = vmatpush.msra.mxu0 0.0
    %3046 = vmatpush.msra.mxu0 0.0
    %3047 = vmatpush.msra.mxu0 0.0
    %3048 = vmatpush.msra.mxu0 0.0
    %v3049 = vand.u32 %v209, 4294901760
    %v3050 = vsub.f32 %v209, %v3049
    %v3051 = vand.u32 %v3050, 4294901760
    %3052 = vmatpush.msra.mxu0 %v3051
    %v3053 = vand.u32 %v2766, 4294901760
    %3054 = vmatmul.f32.gmra.mxu0 %v3053
    %v3055 = vpop.f32.mrf.mxu0
    %v3056 = vadd.f32 %v3032, %v3055
    %3057 = vdwg.mxu0
    %3058 = vmatpush.msra.mxu0 0.0
    %3059 = vmatpush.msra.mxu0 0.0
    %3060 = vmatpush.msra.mxu0 0.0
    %3061 = vmatpush.msra.mxu0 0.0
    %3062 = vmatpush.msra.mxu0 0.0
    %3063 = vmatpush.msra.mxu0 0.0
    %3064 = vmatpush.msra.mxu0 0.0
    %3065 = vmatpush.msra.mxu0 0.0
    %3066 = vmatpush.msra.mxu0 0.0
    %3067 = vmatpush.msra.mxu0 0.0
    %3068 = vmatpush.msra.mxu0 0.0
    %3069 = vmatpush.msra.mxu0 0.0
    %3070 = vmatpush.msra.mxu0 0.0
    %3071 = vmatpush.msra.mxu0 0.0
    %3072 = vmatpush.msra.mxu0 0.0
    %v3073 = vand.u32 %v209, 4294901760
    %3074 = vmatpush.msra.mxu0 %v3073
    %v3075 = vand.u32 %v2766, 4294901760
    %3076 = vmatmul.f32.gmra.mxu0 %v3075
    %v3077 = vpop.f32.mrf.mxu0
    %v3078 = vadd.f32 %v3056, %v3077
    %3079 = vdwg.mxu0
    %v3080 = vmax.f32 %v3078, 0.0
    %v3081 = vmul.f32 %v206, %v2933
    %v3082 = vadd.f32 %v3081, %v3080
    %v3084 = vsel %vm635, %v3082, 0
    %3086 = vmatpush.msra.mxu0 0.0
    %3087 = vmatpush.msra.mxu0 0.0
    %3088 = vmatpush.msra.mxu0 0.0
    %3089 = vmatpush.msra.mxu0 0.0
    %3090 = vmatpush.msra.mxu0 0.0
    %3091 = vmatpush.msra.mxu0 0.0
    %3092 = vmatpush.msra.mxu0 0.0
    %3093 = vmatpush.msra.mxu0 0.0
    %3094 = vmatpush.msra.mxu0 0.0
    %3095 = vmatpush.msra.mxu0 0.0
    %3096 = vmatpush.msra.mxu0 0.0
    %3097 = vmatpush.msra.mxu0 0.0
    %3098 = vmatpush.msra.mxu0 0.0
    %3099 = vmatpush.msra.mxu0 0.0
    %v3100 = vand.u32 %v212, 4294901760
    %3101 = vmatpush.msra.mxu0 %v3100
    %v3102 = vand.u32 %v211, 4294901760
    %3103 = vmatpush.msra.mxu0 %v3102
    %v3104 = vand.u32 %v3084, 4294901760
    %v3105 = vsub.f32 %v3084, %v3104
    %v3106 = vand.u32 %v3105, 4294901760
    %v3107 = vsub.f32 %v3105, %v3106
    %v3108 = vand.u32 %v3107, 4294901760
    %3109 = vmatmul.f32.gmra.mxu0 %v3108
    %v3110 = vpop.f32.mrf.mxu0
    %v3111 = vadd.f32 %v633, %v3110
    %3112 = vdwg.mxu0
    %3113 = vmatpush.msra.mxu0 0.0
    %3114 = vmatpush.msra.mxu0 0.0
    %3115 = vmatpush.msra.mxu0 0.0
    %3116 = vmatpush.msra.mxu0 0.0
    %3117 = vmatpush.msra.mxu0 0.0
    %3118 = vmatpush.msra.mxu0 0.0
    %3119 = vmatpush.msra.mxu0 0.0
    %3120 = vmatpush.msra.mxu0 0.0
    %3121 = vmatpush.msra.mxu0 0.0
    %3122 = vmatpush.msra.mxu0 0.0
    %3123 = vmatpush.msra.mxu0 0.0
    %3124 = vmatpush.msra.mxu0 0.0
    %3125 = vmatpush.msra.mxu0 0.0
    %3126 = vmatpush.msra.mxu0 0.0
    %v3127 = vand.u32 %v212, 4294901760
    %v3128 = vsub.f32 %v212, %v3127
    %v3129 = vand.u32 %v3128, 4294901760
    %v3130 = vsub.f32 %v3128, %v3129
    %v3131 = vand.u32 %v3130, 4294901760
    %3132 = vmatpush.msra.mxu0 %v3131
    %v3133 = vand.u32 %v211, 4294901760
    %v3134 = vsub.f32 %v211, %v3133
    %v3135 = vand.u32 %v3134, 4294901760
    %v3136 = vsub.f32 %v3134, %v3135
    %v3137 = vand.u32 %v3136, 4294901760
    %3138 = vmatpush.msra.mxu0 %v3137
    %v3139 = vand.u32 %v3084, 4294901760
    %3140 = vmatmul.f32.gmra.mxu0 %v3139
    %v3141 = vpop.f32.mrf.mxu0
    %v3142 = vadd.f32 %v3111, %v3141
    %3143 = vdwg.mxu0
    %3144 = vmatpush.msra.mxu0 0.0
    %3145 = vmatpush.msra.mxu0 0.0
    %3146 = vmatpush.msra.mxu0 0.0
    %3147 = vmatpush.msra.mxu0 0.0
    %3148 = vmatpush.msra.mxu0 0.0
    %3149 = vmatpush.msra.mxu0 0.0
    %3150 = vmatpush.msra.mxu0 0.0
    %3151 = vmatpush.msra.mxu0 0.0
    %3152 = vmatpush.msra.mxu0 0.0
    %3153 = vmatpush.msra.mxu0 0.0
    %3154 = vmatpush.msra.mxu0 0.0
    %3155 = vmatpush.msra.mxu0 0.0
    %3156 = vmatpush.msra.mxu0 0.0
    %3157 = vmatpush.msra.mxu0 0.0
    %v3158 = vand.u32 %v212, 4294901760
    %v3159 = vsub.f32 %v212, %v3158
    %3160 = vmatpush.msra.mxu0 %v3159
    %v3161 = vand.u32 %v211, 4294901760
    %v3162 = vsub.f32 %v211, %v3161
    %3163 = vmatpush.msra.mxu0 %v3162
    %v3164 = vand.u32 %v3084, 4294901760
    %v3165 = vsub.f32 %v3084, %v3164
    %3166 = vmatmul.f32.gmra.mxu0 %v3165
    %v3167 = vpop.f32.mrf.mxu0
    %v3168 = vadd.f32 %v3142, %v3167
    %3169 = vdwg.mxu0
    %3170 = vmatpush.msra.mxu0 0.0
    %3171 = vmatpush.msra.mxu0 0.0
    %3172 = vmatpush.msra.mxu0 0.0
    %3173 = vmatpush.msra.mxu0 0.0
    %3174 = vmatpush.msra.mxu0 0.0
    %3175 = vmatpush.msra.mxu0 0.0
    %3176 = vmatpush.msra.mxu0 0.0
    %3177 = vmatpush.msra.mxu0 0.0
    %3178 = vmatpush.msra.mxu0 0.0
    %3179 = vmatpush.msra.mxu0 0.0
    %3180 = vmatpush.msra.mxu0 0.0
    %3181 = vmatpush.msra.mxu0 0.0
    %3182 = vmatpush.msra.mxu0 0.0
    %3183 = vmatpush.msra.mxu0 0.0
    %v3184 = vand.u32 %v212, 4294901760
    %3185 = vmatpush.msra.mxu0 %v3184
    %v3186 = vand.u32 %v211, 4294901760
    %3187 = vmatpush.msra.mxu0 %v3186
    %v3188 = vand.u32 %v3084, 4294901760
    %v3189 = vsub.f32 %v3084, %v3188
    %v3190 = vand.u32 %v3189, 4294901760
    %3191 = vmatmul.f32.gmra.mxu0 %v3190
    %v3192 = vpop.f32.mrf.mxu0
    %v3193 = vadd.f32 %v3168, %v3192
    %3194 = vdwg.mxu0
    %3195 = vmatpush.msra.mxu0 0.0
    %3196 = vmatpush.msra.mxu0 0.0
    %3197 = vmatpush.msra.mxu0 0.0
    %3198 = vmatpush.msra.mxu0 0.0
    %3199 = vmatpush.msra.mxu0 0.0
    %3200 = vmatpush.msra.mxu0 0.0
    %3201 = vmatpush.msra.mxu0 0.0
    %3202 = vmatpush.msra.mxu0 0.0
    %3203 = vmatpush.msra.mxu0 0.0
    %3204 = vmatpush.msra.mxu0 0.0
    %3205 = vmatpush.msra.mxu0 0.0
    %3206 = vmatpush.msra.mxu0 0.0
    %3207 = vmatpush.msra.mxu0 0.0
    %3208 = vmatpush.msra.mxu0 0.0
    %v3209 = vand.u32 %v212, 4294901760
    %v3210 = vsub.f32 %v212, %v3209
    %v3211 = vand.u32 %v3210, 4294901760
    %3212 = vmatpush.msra.mxu0 %v3211
    %v3213 = vand.u32 %v211, 4294901760
    %v3214 = vsub.f32 %v211, %v3213
    %v3215 = vand.u32 %v3214, 4294901760
    %3216 = vmatpush.msra.mxu0 %v3215
    %v3217 = vand.u32 %v3084, 4294901760
    %3218 = vmatmul.f32.gmra.mxu0 %v3217
    %v3219 = vpop.f32.mrf.mxu0
    %v3220 = vadd.f32 %v3193, %v3219
    %3221 = vdwg.mxu0
    %3222 = vmatpush.msra.mxu0 0.0
    %3223 = vmatpush.msra.mxu0 0.0
    %3224 = vmatpush.msra.mxu0 0.0
    %3225 = vmatpush.msra.mxu0 0.0
    %3226 = vmatpush.msra.mxu0 0.0
    %3227 = vmatpush.msra.mxu0 0.0
    %3228 = vmatpush.msra.mxu0 0.0
    %3229 = vmatpush.msra.mxu0 0.0
    %3230 = vmatpush.msra.mxu0 0.0
    %3231 = vmatpush.msra.mxu0 0.0
    %3232 = vmatpush.msra.mxu0 0.0
    %3233 = vmatpush.msra.mxu0 0.0
    %3234 = vmatpush.msra.mxu0 0.0
    %3235 = vmatpush.msra.mxu0 0.0
    %v3236 = vand.u32 %v212, 4294901760
    %3237 = vmatpush.msra.mxu0 %v3236
    %v3238 = vand.u32 %v211, 4294901760
    %3239 = vmatpush.msra.mxu0 %v3238
    %v3240 = vand.u32 %v3084, 4294901760
    %3241 = vmatmul.f32.gmra.mxu0 %v3240
    %v3242 = vpop.f32.mrf.mxu0
    %v3243 = vadd.f32 %v3220, %v3242
    %3244 = vdwg.mxu0
    %v3245 = vmax.f32 %v3243, 0.0
    %v3247 = vsel %vm802, %v3245, 0
    %3249 = vmatpush.msra.mxu0 0.0
    %3250 = vmatpush.msra.mxu0 0.0
    %3251 = vmatpush.msra.mxu0 0.0
    %3252 = vmatpush.msra.mxu0 0.0
    %3253 = vmatpush.msra.mxu0 0.0
    %3254 = vmatpush.msra.mxu0 0.0
    %3255 = vmatpush.msra.mxu0 0.0
    %3256 = vmatpush.msra.mxu0 0.0
    %v3257 = vand.u32 %v221, 4294901760
    %3258 = vmatpush.msra.mxu0 %v3257
    %v3259 = vand.u32 %v220, 4294901760
    %3260 = vmatpush.msra.mxu0 %v3259
    %v3261 = vand.u32 %v219, 4294901760
    %3262 = vmatpush.msra.mxu0 %v3261
    %v3263 = vand.u32 %v218, 4294901760
    %3264 = vmatpush.msra.mxu0 %v3263
    %v3265 = vand.u32 %v217, 4294901760
    %3266 = vmatpush.msra.mxu0 %v3265
    %v3267 = vand.u32 %v216, 4294901760
    %3268 = vmatpush.msra.mxu0 %v3267
    %v3269 = vand.u32 %v215, 4294901760
    %3270 = vmatpush.msra.mxu0 %v3269
    %v3271 = vand.u32 %v214, 4294901760
    %3272 = vmatpush.msra.mxu0 %v3271
    %v3273 = vand.u32 %v3247, 4294901760
    %v3274 = vsub.f32 %v3247, %v3273
    %v3275 = vand.u32 %v3274, 4294901760
    %v3276 = vsub.f32 %v3274, %v3275
    %v3277 = vand.u32 %v3276, 4294901760
    %3278 = vmatmul.f32.gmra.mxu0 %v3277
    %v3279 = vpop.f32.mrf.mxu0
    %v3280 = vadd.f32 %v800, %v3279
    %3281 = vdwg.mxu0
    %3282 = vmatpush.msra.mxu0 0.0
    %3283 = vmatpush.msra.mxu0 0.0
    %3284 = vmatpush.msra.mxu0 0.0
    %3285 = vmatpush.msra.mxu0 0.0
    %3286 = vmatpush.msra.mxu0 0.0
    %3287 = vmatpush.msra.mxu0 0.0
    %3288 = vmatpush.msra.mxu0 0.0
    %3289 = vmatpush.msra.mxu0 0.0
    %v3290 = vand.u32 %v221, 4294901760
    %v3291 = vsub.f32 %v221, %v3290
    %v3292 = vand.u32 %v3291, 4294901760
    %v3293 = vsub.f32 %v3291, %v3292
    %v3294 = vand.u32 %v3293, 4294901760
    %3295 = vmatpush.msra.mxu0 %v3294
    %v3296 = vand.u32 %v220, 4294901760
    %v3297 = vsub.f32 %v220, %v3296
    %v3298 = vand.u32 %v3297, 4294901760
    %v3299 = vsub.f32 %v3297, %v3298
    %v3300 = vand.u32 %v3299, 4294901760
    %3301 = vmatpush.msra.mxu0 %v3300
    %v3302 = vand.u32 %v219, 4294901760
    %v3303 = vsub.f32 %v219, %v3302
    %v3304 = vand.u32 %v3303, 4294901760
    %v3305 = vsub.f32 %v3303, %v3304
    %v3306 = vand.u32 %v3305, 4294901760
    %3307 = vmatpush.msra.mxu0 %v3306
    %v3308 = vand.u32 %v218, 4294901760
    %v3309 = vsub.f32 %v218, %v3308
    %v3310 = vand.u32 %v3309, 4294901760
    %v3311 = vsub.f32 %v3309, %v3310
    %v3312 = vand.u32 %v3311, 4294901760
    %3313 = vmatpush.msra.mxu0 %v3312
    %v3314 = vand.u32 %v217, 4294901760
    %v3315 = vsub.f32 %v217, %v3314
    %v3316 = vand.u32 %v3315, 4294901760
    %v3317 = vsub.f32 %v3315, %v3316
    %v3318 = vand.u32 %v3317, 4294901760
    %3319 = vmatpush.msra.mxu0 %v3318
    %v3320 = vand.u32 %v216, 4294901760
    %v3321 = vsub.f32 %v216, %v3320
    %v3322 = vand.u32 %v3321, 4294901760
    %v3323 = vsub.f32 %v3321, %v3322
    %v3324 = vand.u32 %v3323, 4294901760
    %3325 = vmatpush.msra.mxu0 %v3324
    %v3326 = vand.u32 %v215, 4294901760
    %v3327 = vsub.f32 %v215, %v3326
    %v3328 = vand.u32 %v3327, 4294901760
    %v3329 = vsub.f32 %v3327, %v3328
    %v3330 = vand.u32 %v3329, 4294901760
    %3331 = vmatpush.msra.mxu0 %v3330
    %v3332 = vand.u32 %v214, 4294901760
    %v3333 = vsub.f32 %v214, %v3332
    %v3334 = vand.u32 %v3333, 4294901760
    %v3335 = vsub.f32 %v3333, %v3334
    %v3336 = vand.u32 %v3335, 4294901760
    %3337 = vmatpush.msra.mxu0 %v3336
    %v3338 = vand.u32 %v3247, 4294901760
    %3339 = vmatmul.f32.gmra.mxu0 %v3338
    %v3340 = vpop.f32.mrf.mxu0
    %v3341 = vadd.f32 %v3280, %v3340
    %3342 = vdwg.mxu0
    %3343 = vmatpush.msra.mxu0 0.0
    %3344 = vmatpush.msra.mxu0 0.0
    %3345 = vmatpush.msra.mxu0 0.0
    %3346 = vmatpush.msra.mxu0 0.0
    %3347 = vmatpush.msra.mxu0 0.0
    %3348 = vmatpush.msra.mxu0 0.0
    %3349 = vmatpush.msra.mxu0 0.0
    %3350 = vmatpush.msra.mxu0 0.0
    %v3351 = vand.u32 %v221, 4294901760
    %v3352 = vsub.f32 %v221, %v3351
    %3353 = vmatpush.msra.mxu0 %v3352
    %v3354 = vand.u32 %v220, 4294901760
    %v3355 = vsub.f32 %v220, %v3354
    %3356 = vmatpush.msra.mxu0 %v3355
    %v3357 = vand.u32 %v219, 4294901760
    %v3358 = vsub.f32 %v219, %v3357
    %3359 = vmatpush.msra.mxu0 %v3358
    %v3360 = vand.u32 %v218, 4294901760
    %v3361 = vsub.f32 %v218, %v3360
    %3362 = vmatpush.msra.mxu0 %v3361
    %v3363 = vand.u32 %v217, 4294901760
    %v3364 = vsub.f32 %v217, %v3363
    %3365 = vmatpush.msra.mxu0 %v3364
    %v3366 = vand.u32 %v216, 4294901760
    %v3367 = vsub.f32 %v216, %v3366
    %3368 = vmatpush.msra.mxu0 %v3367
    %v3369 = vand.u32 %v215, 4294901760
    %v3370 = vsub.f32 %v215, %v3369
    %3371 = vmatpush.msra.mxu0 %v3370
    %v3372 = vand.u32 %v214, 4294901760
    %v3373 = vsub.f32 %v214, %v3372
    %3374 = vmatpush.msra.mxu0 %v3373
    %v3375 = vand.u32 %v3247, 4294901760
    %v3376 = vsub.f32 %v3247, %v3375
    %3377 = vmatmul.f32.gmra.mxu0 %v3376
    %v3378 = vpop.f32.mrf.mxu0
    %v3379 = vadd.f32 %v3341, %v3378
    %3380 = vdwg.mxu0
    %3381 = vmatpush.msra.mxu0 0.0
    %3382 = vmatpush.msra.mxu0 0.0
    %3383 = vmatpush.msra.mxu0 0.0
    %3384 = vmatpush.msra.mxu0 0.0
    %3385 = vmatpush.msra.mxu0 0.0
    %3386 = vmatpush.msra.mxu0 0.0
    %3387 = vmatpush.msra.mxu0 0.0
    %3388 = vmatpush.msra.mxu0 0.0
    %v3389 = vand.u32 %v221, 4294901760
    %3390 = vmatpush.msra.mxu0 %v3389
    %v3391 = vand.u32 %v220, 4294901760
    %3392 = vmatpush.msra.mxu0 %v3391
    %v3393 = vand.u32 %v219, 4294901760
    %3394 = vmatpush.msra.mxu0 %v3393
    %v3395 = vand.u32 %v218, 4294901760
    %3396 = vmatpush.msra.mxu0 %v3395
    %v3397 = vand.u32 %v217, 4294901760
    %3398 = vmatpush.msra.mxu0 %v3397
    %v3399 = vand.u32 %v216, 4294901760
    %3400 = vmatpush.msra.mxu0 %v3399
    %v3401 = vand.u32 %v215, 4294901760
    %3402 = vmatpush.msra.mxu0 %v3401
    %v3403 = vand.u32 %v214, 4294901760
    %3404 = vmatpush.msra.mxu0 %v3403
    %v3405 = vand.u32 %v3247, 4294901760
    %v3406 = vsub.f32 %v3247, %v3405
    %v3407 = vand.u32 %v3406, 4294901760
    %3408 = vmatmul.f32.gmra.mxu0 %v3407
    %v3409 = vpop.f32.mrf.mxu0
    %v3410 = vadd.f32 %v3379, %v3409
    %3411 = vdwg.mxu0
    %3412 = vmatpush.msra.mxu0 0.0
    %3413 = vmatpush.msra.mxu0 0.0
    %3414 = vmatpush.msra.mxu0 0.0
    %3415 = vmatpush.msra.mxu0 0.0
    %3416 = vmatpush.msra.mxu0 0.0
    %3417 = vmatpush.msra.mxu0 0.0
    %3418 = vmatpush.msra.mxu0 0.0
    %3419 = vmatpush.msra.mxu0 0.0
    %v3420 = vand.u32 %v221, 4294901760
    %v3421 = vsub.f32 %v221, %v3420
    %v3422 = vand.u32 %v3421, 4294901760
    %3423 = vmatpush.msra.mxu0 %v3422
    %v3424 = vand.u32 %v220, 4294901760
    %v3425 = vsub.f32 %v220, %v3424
    %v3426 = vand.u32 %v3425, 4294901760
    %3427 = vmatpush.msra.mxu0 %v3426
    %v3428 = vand.u32 %v219, 4294901760
    %v3429 = vsub.f32 %v219, %v3428
    %v3430 = vand.u32 %v3429, 4294901760
    %3431 = vmatpush.msra.mxu0 %v3430
    %v3432 = vand.u32 %v218, 4294901760
    %v3433 = vsub.f32 %v218, %v3432
    %v3434 = vand.u32 %v3433, 4294901760
    %3435 = vmatpush.msra.mxu0 %v3434
    %v3436 = vand.u32 %v217, 4294901760
    %v3437 = vsub.f32 %v217, %v3436
    %v3438 = vand.u32 %v3437, 4294901760
    %3439 = vmatpush.msra.mxu0 %v3438
    %v3440 = vand.u32 %v216, 4294901760
    %v3441 = vsub.f32 %v216, %v3440
    %v3442 = vand.u32 %v3441, 4294901760
    %3443 = vmatpush.msra.mxu0 %v3442
    %v3444 = vand.u32 %v215, 4294901760
    %v3445 = vsub.f32 %v215, %v3444
    %v3446 = vand.u32 %v3445, 4294901760
    %3447 = vmatpush.msra.mxu0 %v3446
    %v3448 = vand.u32 %v214, 4294901760
    %v3449 = vsub.f32 %v214, %v3448
    %v3450 = vand.u32 %v3449, 4294901760
    %3451 = vmatpush.msra.mxu0 %v3450
    %v3452 = vand.u32 %v3247, 4294901760
    %3453 = vmatmul.f32.gmra.mxu0 %v3452
    %v3454 = vpop.f32.mrf.mxu0
    %v3455 = vadd.f32 %v3410, %v3454
    %3456 = vdwg.mxu0
    %3457 = vmatpush.msra.mxu0 0.0
    %3458 = vmatpush.msra.mxu0 0.0
    %3459 = vmatpush.msra.mxu0 0.0
    %3460 = vmatpush.msra.mxu0 0.0
    %3461 = vmatpush.msra.mxu0 0.0
    %3462 = vmatpush.msra.mxu0 0.0
    %3463 = vmatpush.msra.mxu0 0.0
    %3464 = vmatpush.msra.mxu0 0.0
    %v3465 = vand.u32 %v221, 4294901760
    %3466 = vmatpush.msra.mxu0 %v3465
    %v3467 = vand.u32 %v220, 4294901760
    %3468 = vmatpush.msra.mxu0 %v3467
    %v3469 = vand.u32 %v219, 4294901760
    %3470 = vmatpush.msra.mxu0 %v3469
    %v3471 = vand.u32 %v218, 4294901760
    %3472 = vmatpush.msra.mxu0 %v3471
    %v3473 = vand.u32 %v217, 4294901760
    %3474 = vmatpush.msra.mxu0 %v3473
    %v3475 = vand.u32 %v216, 4294901760
    %3476 = vmatpush.msra.mxu0 %v3475
    %v3477 = vand.u32 %v215, 4294901760
    %3478 = vmatpush.msra.mxu0 %v3477
    %v3479 = vand.u32 %v214, 4294901760
    %3480 = vmatpush.msra.mxu0 %v3479
    %v3481 = vand.u32 %v3247, 4294901760
    %3482 = vmatmul.f32.gmra.mxu0 %v3481
    %v3483 = vpop.f32.mrf.mxu0
    %v3484 = vadd.f32 %v3455, %v3483
    %3485 = vdwg.mxu0
    %v3486 = vmax.f32 %v3484, 0.0
    %v3487 = vand.u32 %v238, 4294901760
    %3488 = vmatpush.msra.mxu0 %v3487
    %v3489 = vand.u32 %v237, 4294901760
    %3490 = vmatpush.msra.mxu0 %v3489
    %v3491 = vand.u32 %v236, 4294901760
    %3492 = vmatpush.msra.mxu0 %v3491
    %v3493 = vand.u32 %v235, 4294901760
    %3494 = vmatpush.msra.mxu0 %v3493
    %v3495 = vand.u32 %v234, 4294901760
    %3496 = vmatpush.msra.mxu0 %v3495
    %v3497 = vand.u32 %v233, 4294901760
    %3498 = vmatpush.msra.mxu0 %v3497
    %v3499 = vand.u32 %v232, 4294901760
    %3500 = vmatpush.msra.mxu0 %v3499
    %v3501 = vand.u32 %v231, 4294901760
    %3502 = vmatpush.msra.mxu0 %v3501
    %v3503 = vand.u32 %v230, 4294901760
    %3504 = vmatpush.msra.mxu0 %v3503
    %v3505 = vand.u32 %v229, 4294901760
    %3506 = vmatpush.msra.mxu0 %v3505
    %v3507 = vand.u32 %v228, 4294901760
    %3508 = vmatpush.msra.mxu0 %v3507
    %v3509 = vand.u32 %v227, 4294901760
    %3510 = vmatpush.msra.mxu0 %v3509
    %v3511 = vand.u32 %v226, 4294901760
    %3512 = vmatpush.msra.mxu0 %v3511
    %v3513 = vand.u32 %v225, 4294901760
    %3514 = vmatpush.msra.mxu0 %v3513
    %v3515 = vand.u32 %v224, 4294901760
    %3516 = vmatpush.msra.mxu0 %v3515
    %v3517 = vand.u32 %v223, 4294901760
    %3518 = vmatpush.msra.mxu0 %v3517
    %v3519 = vand.u32 %v3486, 4294901760
    %v3520 = vsub.f32 %v3486, %v3519
    %v3521 = vand.u32 %v3520, 4294901760
    %v3522 = vsub.f32 %v3520, %v3521
    %v3523 = vand.u32 %v3522, 4294901760
    %3524 = vmatmul.f32.gmra.mxu0 %v3523
    %v3525 = vpop.f32.mrf.mxu0
    %v3526 = vadd.f32 %v1045, %v3525
    %3527 = vdwg.mxu0
    %v3528 = vand.u32 %v238, 4294901760
    %v3529 = vsub.f32 %v238, %v3528
    %v3530 = vand.u32 %v3529, 4294901760
    %v3531 = vsub.f32 %v3529, %v3530
    %v3532 = vand.u32 %v3531, 4294901760
    %3533 = vmatpush.msra.mxu0 %v3532
    %v3534 = vand.u32 %v237, 4294901760
    %v3535 = vsub.f32 %v237, %v3534
    %v3536 = vand.u32 %v3535, 4294901760
    %v3537 = vsub.f32 %v3535, %v3536
    %v3538 = vand.u32 %v3537, 4294901760
    %3539 = vmatpush.msra.mxu0 %v3538
    %v3540 = vand.u32 %v236, 4294901760
    %v3541 = vsub.f32 %v236, %v3540
    %v3542 = vand.u32 %v3541, 4294901760
    %v3543 = vsub.f32 %v3541, %v3542
    %v3544 = vand.u32 %v3543, 4294901760
    %3545 = vmatpush.msra.mxu0 %v3544
    %v3546 = vand.u32 %v235, 4294901760
    %v3547 = vsub.f32 %v235, %v3546
    %v3548 = vand.u32 %v3547, 4294901760
    %v3549 = vsub.f32 %v3547, %v3548
    %v3550 = vand.u32 %v3549, 4294901760
    %3551 = vmatpush.msra.mxu0 %v3550
    %v3552 = vand.u32 %v234, 4294901760
    %v3553 = vsub.f32 %v234, %v3552
    %v3554 = vand.u32 %v3553, 4294901760
    %v3555 = vsub.f32 %v3553, %v3554
    %v3556 = vand.u32 %v3555, 4294901760
    %3557 = vmatpush.msra.mxu0 %v3556
    %v3558 = vand.u32 %v233, 4294901760
    %v3559 = vsub.f32 %v233, %v3558
    %v3560 = vand.u32 %v3559, 4294901760
    %v3561 = vsub.f32 %v3559, %v3560
    %v3562 = vand.u32 %v3561, 4294901760
    %3563 = vmatpush.msra.mxu0 %v3562
    %v3564 = vand.u32 %v232, 4294901760
    %v3565 = vsub.f32 %v232, %v3564
    %v3566 = vand.u32 %v3565, 4294901760
    %v3567 = vsub.f32 %v3565, %v3566
    %v3568 = vand.u32 %v3567, 4294901760
    %3569 = vmatpush.msra.mxu0 %v3568
    %v3570 = vand.u32 %v231, 4294901760
    %v3571 = vsub.f32 %v231, %v3570
    %v3572 = vand.u32 %v3571, 4294901760
    %v3573 = vsub.f32 %v3571, %v3572
    %v3574 = vand.u32 %v3573, 4294901760
    %3575 = vmatpush.msra.mxu0 %v3574
    %v3576 = vand.u32 %v230, 4294901760
    %v3577 = vsub.f32 %v230, %v3576
    %v3578 = vand.u32 %v3577, 4294901760
    %v3579 = vsub.f32 %v3577, %v3578
    %v3580 = vand.u32 %v3579, 4294901760
    %3581 = vmatpush.msra.mxu0 %v3580
    %v3582 = vand.u32 %v229, 4294901760
    %v3583 = vsub.f32 %v229, %v3582
    %v3584 = vand.u32 %v3583, 4294901760
    %v3585 = vsub.f32 %v3583, %v3584
    %v3586 = vand.u32 %v3585, 4294901760
    %3587 = vmatpush.msra.mxu0 %v3586
    %v3588 = vand.u32 %v228, 4294901760
    %v3589 = vsub.f32 %v228, %v3588
    %v3590 = vand.u32 %v3589, 4294901760
    %v3591 = vsub.f32 %v3589, %v3590
    %v3592 = vand.u32 %v3591, 4294901760
    %3593 = vmatpush.msra.mxu0 %v3592
    %v3594 = vand.u32 %v227, 4294901760
    %v3595 = vsub.f32 %v227, %v3594
    %v3596 = vand.u32 %v3595, 4294901760
    %v3597 = vsub.f32 %v3595, %v3596
    %v3598 = vand.u32 %v3597, 4294901760
    %3599 = vmatpush.msra.mxu0 %v3598
    %v3600 = vand.u32 %v226, 4294901760
    %v3601 = vsub.f32 %v226, %v3600
    %v3602 = vand.u32 %v3601, 4294901760
    %v3603 = vsub.f32 %v3601, %v3602
    %v3604 = vand.u32 %v3603, 4294901760
    %3605 = vmatpush.msra.mxu0 %v3604
    %v3606 = vand.u32 %v225, 4294901760
    %v3607 = vsub.f32 %v225, %v3606
    %v3608 = vand.u32 %v3607, 4294901760
    %v3609 = vsub.f32 %v3607, %v3608
    %v3610 = vand.u32 %v3609, 4294901760
    %3611 = vmatpush.msra.mxu0 %v3610
    %v3612 = vand.u32 %v224, 4294901760
    %v3613 = vsub.f32 %v224, %v3612
    %v3614 = vand.u32 %v3613, 4294901760
    %v3615 = vsub.f32 %v3613, %v3614
    %v3616 = vand.u32 %v3615, 4294901760
    %3617 = vmatpush.msra.mxu0 %v3616
    %v3618 = vand.u32 %v223, 4294901760
    %v3619 = vsub.f32 %v223, %v3618
    %v3620 = vand.u32 %v3619, 4294901760
    %v3621 = vsub.f32 %v3619, %v3620
    %v3622 = vand.u32 %v3621, 4294901760
    %3623 = vmatpush.msra.mxu0 %v3622
    %v3624 = vand.u32 %v3486, 4294901760
    %3625 = vmatmul.f32.gmra.mxu0 %v3624
    %v3626 = vpop.f32.mrf.mxu0
    %v3627 = vadd.f32 %v3526, %v3626
    %3628 = vdwg.mxu0
    %v3629 = vand.u32 %v238, 4294901760
    %v3630 = vsub.f32 %v238, %v3629
    %3631 = vmatpush.msra.mxu0 %v3630
    %v3632 = vand.u32 %v237, 4294901760
    %v3633 = vsub.f32 %v237, %v3632
    %3634 = vmatpush.msra.mxu0 %v3633
    %v3635 = vand.u32 %v236, 4294901760
    %v3636 = vsub.f32 %v236, %v3635
    %3637 = vmatpush.msra.mxu0 %v3636
    %v3638 = vand.u32 %v235, 4294901760
    %v3639 = vsub.f32 %v235, %v3638
    %3640 = vmatpush.msra.mxu0 %v3639
    %v3641 = vand.u32 %v234, 4294901760
    %v3642 = vsub.f32 %v234, %v3641
    %3643 = vmatpush.msra.mxu0 %v3642
    %v3644 = vand.u32 %v233, 4294901760
    %v3645 = vsub.f32 %v233, %v3644
    %3646 = vmatpush.msra.mxu0 %v3645
    %v3647 = vand.u32 %v232, 4294901760
    %v3648 = vsub.f32 %v232, %v3647
    %3649 = vmatpush.msra.mxu0 %v3648
    %v3650 = vand.u32 %v231, 4294901760
    %v3651 = vsub.f32 %v231, %v3650
    %3652 = vmatpush.msra.mxu0 %v3651
    %v3653 = vand.u32 %v230, 4294901760
    %v3654 = vsub.f32 %v230, %v3653
    %3655 = vmatpush.msra.mxu0 %v3654
    %v3656 = vand.u32 %v229, 4294901760
    %v3657 = vsub.f32 %v229, %v3656
    %3658 = vmatpush.msra.mxu0 %v3657
    %v3659 = vand.u32 %v228, 4294901760
    %v3660 = vsub.f32 %v228, %v3659
    %3661 = vmatpush.msra.mxu0 %v3660
    %v3662 = vand.u32 %v227, 4294901760
    %v3663 = vsub.f32 %v227, %v3662
    %3664 = vmatpush.msra.mxu0 %v3663
    %v3665 = vand.u32 %v226, 4294901760
    %v3666 = vsub.f32 %v226, %v3665
    %3667 = vmatpush.msra.mxu0 %v3666
    %v3668 = vand.u32 %v225, 4294901760
    %v3669 = vsub.f32 %v225, %v3668
    %3670 = vmatpush.msra.mxu0 %v3669
    %v3671 = vand.u32 %v224, 4294901760
    %v3672 = vsub.f32 %v224, %v3671
    %3673 = vmatpush.msra.mxu0 %v3672
    %v3674 = vand.u32 %v223, 4294901760
    %v3675 = vsub.f32 %v223, %v3674
    %3676 = vmatpush.msra.mxu0 %v3675
    %v3677 = vand.u32 %v3486, 4294901760
    %v3678 = vsub.f32 %v3486, %v3677
    %3679 = vmatmul.f32.gmra.mxu0 %v3678
    %v3680 = vpop.f32.mrf.mxu0
    %v3681 = vadd.f32 %v3627, %v3680
    %3682 = vdwg.mxu0
    %v3683 = vand.u32 %v238, 4294901760
    %3684 = vmatpush.msra.mxu0 %v3683
    %v3685 = vand.u32 %v237, 4294901760
    %3686 = vmatpush.msra.mxu0 %v3685
    %v3687 = vand.u32 %v236, 4294901760
    %3688 = vmatpush.msra.mxu0 %v3687
    %v3689 = vand.u32 %v235, 4294901760
    %3690 = vmatpush.msra.mxu0 %v3689
    %v3691 = vand.u32 %v234, 4294901760
    %3692 = vmatpush.msra.mxu0 %v3691
    %v3693 = vand.u32 %v233, 4294901760
    %3694 = vmatpush.msra.mxu0 %v3693
    %v3695 = vand.u32 %v232, 4294901760
    %3696 = vmatpush.msra.mxu0 %v3695
    %v3697 = vand.u32 %v231, 4294901760
    %3698 = vmatpush.msra.mxu0 %v3697
    %v3699 = vand.u32 %v230, 4294901760
    %3700 = vmatpush.msra.mxu0 %v3699
    %v3701 = vand.u32 %v229, 4294901760
    %3702 = vmatpush.msra.mxu0 %v3701
    %v3703 = vand.u32 %v228, 4294901760
    %3704 = vmatpush.msra.mxu0 %v3703
    %v3705 = vand.u32 %v227, 4294901760
    %3706 = vmatpush.msra.mxu0 %v3705
    %v3707 = vand.u32 %v226, 4294901760
    %3708 = vmatpush.msra.mxu0 %v3707
    %v3709 = vand.u32 %v225, 4294901760
    %3710 = vmatpush.msra.mxu0 %v3709
    %v3711 = vand.u32 %v224, 4294901760
    %3712 = vmatpush.msra.mxu0 %v3711
    %v3713 = vand.u32 %v223, 4294901760
    %3714 = vmatpush.msra.mxu0 %v3713
    %v3715 = vand.u32 %v3486, 4294901760
    %v3716 = vsub.f32 %v3486, %v3715
    %v3717 = vand.u32 %v3716, 4294901760
    %3718 = vmatmul.f32.gmra.mxu0 %v3717
    %v3719 = vpop.f32.mrf.mxu0
    %v3720 = vadd.f32 %v3681, %v3719
    %3721 = vdwg.mxu0
    %v3722 = vand.u32 %v238, 4294901760
    %v3723 = vsub.f32 %v238, %v3722
    %v3724 = vand.u32 %v3723, 4294901760
    %3725 = vmatpush.msra.mxu0 %v3724
    %v3726 = vand.u32 %v237, 4294901760
    %v3727 = vsub.f32 %v237, %v3726
    %v3728 = vand.u32 %v3727, 4294901760
    %3729 = vmatpush.msra.mxu0 %v3728
    %v3730 = vand.u32 %v236, 4294901760
    %v3731 = vsub.f32 %v236, %v3730
    %v3732 = vand.u32 %v3731, 4294901760
    %3733 = vmatpush.msra.mxu0 %v3732
    %v3734 = vand.u32 %v235, 4294901760
    %v3735 = vsub.f32 %v235, %v3734
    %v3736 = vand.u32 %v3735, 4294901760
    %3737 = vmatpush.msra.mxu0 %v3736
    %v3738 = vand.u32 %v234, 4294901760
    %v3739 = vsub.f32 %v234, %v3738
    %v3740 = vand.u32 %v3739, 4294901760
    %3741 = vmatpush.msra.mxu0 %v3740
    %v3742 = vand.u32 %v233, 4294901760
    %v3743 = vsub.f32 %v233, %v3742
    %v3744 = vand.u32 %v3743, 4294901760
    %3745 = vmatpush.msra.mxu0 %v3744
    %v3746 = vand.u32 %v232, 4294901760
    %v3747 = vsub.f32 %v232, %v3746
    %v3748 = vand.u32 %v3747, 4294901760
    %3749 = vmatpush.msra.mxu0 %v3748
    %v3750 = vand.u32 %v231, 4294901760
    %v3751 = vsub.f32 %v231, %v3750
    %v3752 = vand.u32 %v3751, 4294901760
    %3753 = vmatpush.msra.mxu0 %v3752
    %v3754 = vand.u32 %v230, 4294901760
    %v3755 = vsub.f32 %v230, %v3754
    %v3756 = vand.u32 %v3755, 4294901760
    %3757 = vmatpush.msra.mxu0 %v3756
    %v3758 = vand.u32 %v229, 4294901760
    %v3759 = vsub.f32 %v229, %v3758
    %v3760 = vand.u32 %v3759, 4294901760
    %3761 = vmatpush.msra.mxu0 %v3760
    %v3762 = vand.u32 %v228, 4294901760
    %v3763 = vsub.f32 %v228, %v3762
    %v3764 = vand.u32 %v3763, 4294901760
    %3765 = vmatpush.msra.mxu0 %v3764
    %v3766 = vand.u32 %v227, 4294901760
    %v3767 = vsub.f32 %v227, %v3766
    %v3768 = vand.u32 %v3767, 4294901760
    %3769 = vmatpush.msra.mxu0 %v3768
    %v3770 = vand.u32 %v226, 4294901760
    %v3771 = vsub.f32 %v226, %v3770
    %v3772 = vand.u32 %v3771, 4294901760
    %3773 = vmatpush.msra.mxu0 %v3772
    %v3774 = vand.u32 %v225, 4294901760
    %v3775 = vsub.f32 %v225, %v3774
    %v3776 = vand.u32 %v3775, 4294901760
    %3777 = vmatpush.msra.mxu0 %v3776
    %v3778 = vand.u32 %v224, 4294901760
    %v3779 = vsub.f32 %v224, %v3778
    %v3780 = vand.u32 %v3779, 4294901760
    %3781 = vmatpush.msra.mxu0 %v3780
    %v3782 = vand.u32 %v223, 4294901760
    %v3783 = vsub.f32 %v223, %v3782
    %v3784 = vand.u32 %v3783, 4294901760
    %3785 = vmatpush.msra.mxu0 %v3784
    %v3786 = vand.u32 %v3486, 4294901760
    %3787 = vmatmul.f32.gmra.mxu0 %v3786
    %v3788 = vpop.f32.mrf.mxu0
    %v3789 = vadd.f32 %v3720, %v3788
    %3790 = vdwg.mxu0
    %v3791 = vand.u32 %v238, 4294901760
    %3792 = vmatpush.msra.mxu0 %v3791
    %v3793 = vand.u32 %v237, 4294901760
    %3794 = vmatpush.msra.mxu0 %v3793
    %v3795 = vand.u32 %v236, 4294901760
    %3796 = vmatpush.msra.mxu0 %v3795
    %v3797 = vand.u32 %v235, 4294901760
    %3798 = vmatpush.msra.mxu0 %v3797
    %v3799 = vand.u32 %v234, 4294901760
    %3800 = vmatpush.msra.mxu0 %v3799
    %v3801 = vand.u32 %v233, 4294901760
    %3802 = vmatpush.msra.mxu0 %v3801
    %v3803 = vand.u32 %v232, 4294901760
    %3804 = vmatpush.msra.mxu0 %v3803
    %v3805 = vand.u32 %v231, 4294901760
    %3806 = vmatpush.msra.mxu0 %v3805
    %v3807 = vand.u32 %v230, 4294901760
    %3808 = vmatpush.msra.mxu0 %v3807
    %v3809 = vand.u32 %v229, 4294901760
    %3810 = vmatpush.msra.mxu0 %v3809
    %v3811 = vand.u32 %v228, 4294901760
    %3812 = vmatpush.msra.mxu0 %v3811
    %v3813 = vand.u32 %v227, 4294901760
    %3814 = vmatpush.msra.mxu0 %v3813
    %v3815 = vand.u32 %v226, 4294901760
    %3816 = vmatpush.msra.mxu0 %v3815
    %v3817 = vand.u32 %v225, 4294901760
    %3818 = vmatpush.msra.mxu0 %v3817
    %v3819 = vand.u32 %v224, 4294901760
    %3820 = vmatpush.msra.mxu0 %v3819
    %v3821 = vand.u32 %v223, 4294901760
    %3822 = vmatpush.msra.mxu0 %v3821
    %v3823 = vand.u32 %v3486, 4294901760
    %3824 = vmatmul.f32.gmra.mxu0 %v3823
    %v3825 = vpop.f32.mrf.mxu0
    %v3826 = vadd.f32 %v3789, %v3825
    %3827 = vdwg.mxu0
    %v3828 = vmax.f32 %v3826, 0.0
    %v3829 = vand.u32 %v270, 4294901760
    %3830 = vmatpush.msra.mxu0 %v3829
    %v3831 = vand.u32 %v268, 4294901760
    %3832 = vmatpush.msra.mxu0 %v3831
    %v3833 = vand.u32 %v266, 4294901760
    %3834 = vmatpush.msra.mxu0 %v3833
    %v3835 = vand.u32 %v264, 4294901760
    %3836 = vmatpush.msra.mxu0 %v3835
    %v3837 = vand.u32 %v262, 4294901760
    %3838 = vmatpush.msra.mxu0 %v3837
    %v3839 = vand.u32 %v260, 4294901760
    %3840 = vmatpush.msra.mxu0 %v3839
    %v3841 = vand.u32 %v258, 4294901760
    %3842 = vmatpush.msra.mxu0 %v3841
    %v3843 = vand.u32 %v256, 4294901760
    %3844 = vmatpush.msra.mxu0 %v3843
    %v3845 = vand.u32 %v254, 4294901760
    %3846 = vmatpush.msra.mxu0 %v3845
    %v3847 = vand.u32 %v252, 4294901760
    %3848 = vmatpush.msra.mxu0 %v3847
    %v3849 = vand.u32 %v250, 4294901760
    %3850 = vmatpush.msra.mxu0 %v3849
    %v3851 = vand.u32 %v248, 4294901760
    %3852 = vmatpush.msra.mxu0 %v3851
    %v3853 = vand.u32 %v246, 4294901760
    %3854 = vmatpush.msra.mxu0 %v3853
    %v3855 = vand.u32 %v244, 4294901760
    %3856 = vmatpush.msra.mxu0 %v3855
    %v3857 = vand.u32 %v242, 4294901760
    %3858 = vmatpush.msra.mxu0 %v3857
    %v3859 = vand.u32 %v240, 4294901760
    %3860 = vmatpush.msra.mxu0 %v3859
    %v3861 = vand.u32 %v3828, 4294901760
    %v3862 = vsub.f32 %v3828, %v3861
    %v3863 = vand.u32 %v3862, 4294901760
    %v3864 = vsub.f32 %v3862, %v3863
    %v3865 = vand.u32 %v3864, 4294901760
    %3866 = vmatmul.f32.gmra.mxu0 %v3865
    %v3867 = vpop.f32.mrf.mxu0
    %v3868 = vadd.f32 %v1390, %v3867
    %3869 = vdwg.mxu0
    %v3870 = vand.u32 %v270, 4294901760
    %v3871 = vsub.f32 %v270, %v3870
    %v3872 = vand.u32 %v3871, 4294901760
    %v3873 = vsub.f32 %v3871, %v3872
    %v3874 = vand.u32 %v3873, 4294901760
    %3875 = vmatpush.msra.mxu0 %v3874
    %v3876 = vand.u32 %v268, 4294901760
    %v3877 = vsub.f32 %v268, %v3876
    %v3878 = vand.u32 %v3877, 4294901760
    %v3879 = vsub.f32 %v3877, %v3878
    %v3880 = vand.u32 %v3879, 4294901760
    %3881 = vmatpush.msra.mxu0 %v3880
    %v3882 = vand.u32 %v266, 4294901760
    %v3883 = vsub.f32 %v266, %v3882
    %v3884 = vand.u32 %v3883, 4294901760
    %v3885 = vsub.f32 %v3883, %v3884
    %v3886 = vand.u32 %v3885, 4294901760
    %3887 = vmatpush.msra.mxu0 %v3886
    %v3888 = vand.u32 %v264, 4294901760
    %v3889 = vsub.f32 %v264, %v3888
    %v3890 = vand.u32 %v3889, 4294901760
    %v3891 = vsub.f32 %v3889, %v3890
    %v3892 = vand.u32 %v3891, 4294901760
    %3893 = vmatpush.msra.mxu0 %v3892
    %v3894 = vand.u32 %v262, 4294901760
    %v3895 = vsub.f32 %v262, %v3894
    %v3896 = vand.u32 %v3895, 4294901760
    %v3897 = vsub.f32 %v3895, %v3896
    %v3898 = vand.u32 %v3897, 4294901760
    %3899 = vmatpush.msra.mxu0 %v3898
    %v3900 = vand.u32 %v260, 4294901760
    %v3901 = vsub.f32 %v260, %v3900
    %v3902 = vand.u32 %v3901, 4294901760
    %v3903 = vsub.f32 %v3901, %v3902
    %v3904 = vand.u32 %v3903, 4294901760
    %3905 = vmatpush.msra.mxu0 %v3904
    %v3906 = vand.u32 %v258, 4294901760
    %v3907 = vsub.f32 %v258, %v3906
    %v3908 = vand.u32 %v3907, 4294901760
    %v3909 = vsub.f32 %v3907, %v3908
    %v3910 = vand.u32 %v3909, 4294901760
    %3911 = vmatpush.msra.mxu0 %v3910
    %v3912 = vand.u32 %v256, 4294901760
    %v3913 = vsub.f32 %v256, %v3912
    %v3914 = vand.u32 %v3913, 4294901760
    %v3915 = vsub.f32 %v3913, %v3914
    %v3916 = vand.u32 %v3915, 4294901760
    %3917 = vmatpush.msra.mxu0 %v3916
    %v3918 = vand.u32 %v254, 4294901760
    %v3919 = vsub.f32 %v254, %v3918
    %v3920 = vand.u32 %v3919, 4294901760
    %v3921 = vsub.f32 %v3919, %v3920
    %v3922 = vand.u32 %v3921, 4294901760
    %3923 = vmatpush.msra.mxu0 %v3922
    %v3924 = vand.u32 %v252, 4294901760
    %v3925 = vsub.f32 %v252, %v3924
    %v3926 = vand.u32 %v3925, 4294901760
    %v3927 = vsub.f32 %v3925, %v3926
    %v3928 = vand.u32 %v3927, 4294901760
    %3929 = vmatpush.msra.mxu0 %v3928
    %v3930 = vand.u32 %v250, 4294901760
    %v3931 = vsub.f32 %v250, %v3930
    %v3932 = vand.u32 %v3931, 4294901760
    %v3933 = vsub.f32 %v3931, %v3932
    %v3934 = vand.u32 %v3933, 4294901760
    %3935 = vmatpush.msra.mxu0 %v3934
    %v3936 = vand.u32 %v248, 4294901760
    %v3937 = vsub.f32 %v248, %v3936
    %v3938 = vand.u32 %v3937, 4294901760
    %v3939 = vsub.f32 %v3937, %v3938
    %v3940 = vand.u32 %v3939, 4294901760
    %3941 = vmatpush.msra.mxu0 %v3940
    %v3942 = vand.u32 %v246, 4294901760
    %v3943 = vsub.f32 %v246, %v3942
    %v3944 = vand.u32 %v3943, 4294901760
    %v3945 = vsub.f32 %v3943, %v3944
    %v3946 = vand.u32 %v3945, 4294901760
    %3947 = vmatpush.msra.mxu0 %v3946
    %v3948 = vand.u32 %v244, 4294901760
    %v3949 = vsub.f32 %v244, %v3948
    %v3950 = vand.u32 %v3949, 4294901760
    %v3951 = vsub.f32 %v3949, %v3950
    %v3952 = vand.u32 %v3951, 4294901760
    %3953 = vmatpush.msra.mxu0 %v3952
    %v3954 = vand.u32 %v242, 4294901760
    %v3955 = vsub.f32 %v242, %v3954
    %v3956 = vand.u32 %v3955, 4294901760
    %v3957 = vsub.f32 %v3955, %v3956
    %v3958 = vand.u32 %v3957, 4294901760
    %3959 = vmatpush.msra.mxu0 %v3958
    %v3960 = vand.u32 %v240, 4294901760
    %v3961 = vsub.f32 %v240, %v3960
    %v3962 = vand.u32 %v3961, 4294901760
    %v3963 = vsub.f32 %v3961, %v3962
    %v3964 = vand.u32 %v3963, 4294901760
    %3965 = vmatpush.msra.mxu0 %v3964
    %v3966 = vand.u32 %v3828, 4294901760
    %3967 = vmatmul.f32.gmra.mxu0 %v3966
    %v3968 = vpop.f32.mrf.mxu0
    %v3969 = vadd.f32 %v3868, %v3968
    %3970 = vdwg.mxu0
    %v3971 = vand.u32 %v270, 4294901760
    %v3972 = vsub.f32 %v270, %v3971
    %3973 = vmatpush.msra.mxu0 %v3972
    %v3974 = vand.u32 %v268, 4294901760
    %v3975 = vsub.f32 %v268, %v3974
    %3976 = vmatpush.msra.mxu0 %v3975
    %v3977 = vand.u32 %v266, 4294901760
    %v3978 = vsub.f32 %v266, %v3977
    %3979 = vmatpush.msra.mxu0 %v3978
    %v3980 = vand.u32 %v264, 4294901760
    %v3981 = vsub.f32 %v264, %v3980
    %3982 = vmatpush.msra.mxu0 %v3981
    %v3983 = vand.u32 %v262, 4294901760
    %v3984 = vsub.f32 %v262, %v3983
    %3985 = vmatpush.msra.mxu0 %v3984
    %v3986 = vand.u32 %v260, 4294901760
    %v3987 = vsub.f32 %v260, %v3986
    %3988 = vmatpush.msra.mxu0 %v3987
    %v3989 = vand.u32 %v258, 4294901760
    %v3990 = vsub.f32 %v258, %v3989
    %3991 = vmatpush.msra.mxu0 %v3990
    %v3992 = vand.u32 %v256, 4294901760
    %v3993 = vsub.f32 %v256, %v3992
    %3994 = vmatpush.msra.mxu0 %v3993
    %v3995 = vand.u32 %v254, 4294901760
    %v3996 = vsub.f32 %v254, %v3995
    %3997 = vmatpush.msra.mxu0 %v3996
    %v3998 = vand.u32 %v252, 4294901760
    %v3999 = vsub.f32 %v252, %v3998
    %4000 = vmatpush.msra.mxu0 %v3999
    %v4001 = vand.u32 %v250, 4294901760
    %v4002 = vsub.f32 %v250, %v4001
    %4003 = vmatpush.msra.mxu0 %v4002
    %v4004 = vand.u32 %v248, 4294901760
    %v4005 = vsub.f32 %v248, %v4004
    %4006 = vmatpush.msra.mxu0 %v4005
    %v4007 = vand.u32 %v246, 4294901760
    %v4008 = vsub.f32 %v246, %v4007
    %4009 = vmatpush.msra.mxu0 %v4008
    %v4010 = vand.u32 %v244, 4294901760
    %v4011 = vsub.f32 %v244, %v4010
    %4012 = vmatpush.msra.mxu0 %v4011
    %v4013 = vand.u32 %v242, 4294901760
    %v4014 = vsub.f32 %v242, %v4013
    %4015 = vmatpush.msra.mxu0 %v4014
    %v4016 = vand.u32 %v240, 4294901760
    %v4017 = vsub.f32 %v240, %v4016
    %4018 = vmatpush.msra.mxu0 %v4017
    %v4019 = vand.u32 %v3828, 4294901760
    %v4020 = vsub.f32 %v3828, %v4019
    %4021 = vmatmul.f32.gmra.mxu0 %v4020
    %v4022 = vpop.f32.mrf.mxu0
    %v4023 = vadd.f32 %v3969, %v4022
    %4024 = vdwg.mxu0
    %v4025 = vand.u32 %v270, 4294901760
    %4026 = vmatpush.msra.mxu0 %v4025
    %v4027 = vand.u32 %v268, 4294901760
    %4028 = vmatpush.msra.mxu0 %v4027
    %v4029 = vand.u32 %v266, 4294901760
    %4030 = vmatpush.msra.mxu0 %v4029
    %v4031 = vand.u32 %v264, 4294901760
    %4032 = vmatpush.msra.mxu0 %v4031
    %v4033 = vand.u32 %v262, 4294901760
    %4034 = vmatpush.msra.mxu0 %v4033
    %v4035 = vand.u32 %v260, 4294901760
    %4036 = vmatpush.msra.mxu0 %v4035
    %v4037 = vand.u32 %v258, 4294901760
    %4038 = vmatpush.msra.mxu0 %v4037
    %v4039 = vand.u32 %v256, 4294901760
    %4040 = vmatpush.msra.mxu0 %v4039
    %v4041 = vand.u32 %v254, 4294901760
    %4042 = vmatpush.msra.mxu0 %v4041
    %v4043 = vand.u32 %v252, 4294901760
    %4044 = vmatpush.msra.mxu0 %v4043
    %v4045 = vand.u32 %v250, 4294901760
    %4046 = vmatpush.msra.mxu0 %v4045
    %v4047 = vand.u32 %v248, 4294901760
    %4048 = vmatpush.msra.mxu0 %v4047
    %v4049 = vand.u32 %v246, 4294901760
    %4050 = vmatpush.msra.mxu0 %v4049
    %v4051 = vand.u32 %v244, 4294901760
    %4052 = vmatpush.msra.mxu0 %v4051
    %v4053 = vand.u32 %v242, 4294901760
    %4054 = vmatpush.msra.mxu0 %v4053
    %v4055 = vand.u32 %v240, 4294901760
    %4056 = vmatpush.msra.mxu0 %v4055
    %v4057 = vand.u32 %v3828, 4294901760
    %v4058 = vsub.f32 %v3828, %v4057
    %v4059 = vand.u32 %v4058, 4294901760
    %4060 = vmatmul.f32.gmra.mxu0 %v4059
    %v4061 = vpop.f32.mrf.mxu0
    %v4062 = vadd.f32 %v4023, %v4061
    %4063 = vdwg.mxu0
    %v4064 = vand.u32 %v270, 4294901760
    %v4065 = vsub.f32 %v270, %v4064
    %v4066 = vand.u32 %v4065, 4294901760
    %4067 = vmatpush.msra.mxu0 %v4066
    %v4068 = vand.u32 %v268, 4294901760
    %v4069 = vsub.f32 %v268, %v4068
    %v4070 = vand.u32 %v4069, 4294901760
    %4071 = vmatpush.msra.mxu0 %v4070
    %v4072 = vand.u32 %v266, 4294901760
    %v4073 = vsub.f32 %v266, %v4072
    %v4074 = vand.u32 %v4073, 4294901760
    %4075 = vmatpush.msra.mxu0 %v4074
    %v4076 = vand.u32 %v264, 4294901760
    %v4077 = vsub.f32 %v264, %v4076
    %v4078 = vand.u32 %v4077, 4294901760
    %4079 = vmatpush.msra.mxu0 %v4078
    %v4080 = vand.u32 %v262, 4294901760
    %v4081 = vsub.f32 %v262, %v4080
    %v4082 = vand.u32 %v4081, 4294901760
    %4083 = vmatpush.msra.mxu0 %v4082
    %v4084 = vand.u32 %v260, 4294901760
    %v4085 = vsub.f32 %v260, %v4084
    %v4086 = vand.u32 %v4085, 4294901760
    %4087 = vmatpush.msra.mxu0 %v4086
    %v4088 = vand.u32 %v258, 4294901760
    %v4089 = vsub.f32 %v258, %v4088
    %v4090 = vand.u32 %v4089, 4294901760
    %4091 = vmatpush.msra.mxu0 %v4090
    %v4092 = vand.u32 %v256, 4294901760
    %v4093 = vsub.f32 %v256, %v4092
    %v4094 = vand.u32 %v4093, 4294901760
    %4095 = vmatpush.msra.mxu0 %v4094
    %v4096 = vand.u32 %v254, 4294901760
    %v4097 = vsub.f32 %v254, %v4096
    %v4098 = vand.u32 %v4097, 4294901760
    %4099 = vmatpush.msra.mxu0 %v4098
    %v4100 = vand.u32 %v252, 4294901760
    %v4101 = vsub.f32 %v252, %v4100
    %v4102 = vand.u32 %v4101, 4294901760
    %4103 = vmatpush.msra.mxu0 %v4102
    %v4104 = vand.u32 %v250, 4294901760
    %v4105 = vsub.f32 %v250, %v4104
    %v4106 = vand.u32 %v4105, 4294901760
    %4107 = vmatpush.msra.mxu0 %v4106
    %v4108 = vand.u32 %v248, 4294901760
    %v4109 = vsub.f32 %v248, %v4108
    %v4110 = vand.u32 %v4109, 4294901760
    %4111 = vmatpush.msra.mxu0 %v4110
    %v4112 = vand.u32 %v246, 4294901760
    %v4113 = vsub.f32 %v246, %v4112
    %v4114 = vand.u32 %v4113, 4294901760
    %4115 = vmatpush.msra.mxu0 %v4114
    %v4116 = vand.u32 %v244, 4294901760
    %v4117 = vsub.f32 %v244, %v4116
    %v4118 = vand.u32 %v4117, 4294901760
    %4119 = vmatpush.msra.mxu0 %v4118
    %v4120 = vand.u32 %v242, 4294901760
    %v4121 = vsub.f32 %v242, %v4120
    %v4122 = vand.u32 %v4121, 4294901760
    %4123 = vmatpush.msra.mxu0 %v4122
    %v4124 = vand.u32 %v240, 4294901760
    %v4125 = vsub.f32 %v240, %v4124
    %v4126 = vand.u32 %v4125, 4294901760
    %4127 = vmatpush.msra.mxu0 %v4126
    %v4128 = vand.u32 %v3828, 4294901760
    %4129 = vmatmul.f32.gmra.mxu0 %v4128
    %v4130 = vpop.f32.mrf.mxu0
    %v4131 = vadd.f32 %v4062, %v4130
    %4132 = vdwg.mxu0
    %v4133 = vand.u32 %v270, 4294901760
    %4134 = vmatpush.msra.mxu0 %v4133
    %v4135 = vand.u32 %v268, 4294901760
    %4136 = vmatpush.msra.mxu0 %v4135
    %v4137 = vand.u32 %v266, 4294901760
    %4138 = vmatpush.msra.mxu0 %v4137
    %v4139 = vand.u32 %v264, 4294901760
    %4140 = vmatpush.msra.mxu0 %v4139
    %v4141 = vand.u32 %v262, 4294901760
    %4142 = vmatpush.msra.mxu0 %v4141
    %v4143 = vand.u32 %v260, 4294901760
    %4144 = vmatpush.msra.mxu0 %v4143
    %v4145 = vand.u32 %v258, 4294901760
    %4146 = vmatpush.msra.mxu0 %v4145
    %v4147 = vand.u32 %v256, 4294901760
    %4148 = vmatpush.msra.mxu0 %v4147
    %v4149 = vand.u32 %v254, 4294901760
    %4150 = vmatpush.msra.mxu0 %v4149
    %v4151 = vand.u32 %v252, 4294901760
    %4152 = vmatpush.msra.mxu0 %v4151
    %v4153 = vand.u32 %v250, 4294901760
    %4154 = vmatpush.msra.mxu0 %v4153
    %v4155 = vand.u32 %v248, 4294901760
    %4156 = vmatpush.msra.mxu0 %v4155
    %v4157 = vand.u32 %v246, 4294901760
    %4158 = vmatpush.msra.mxu0 %v4157
    %v4159 = vand.u32 %v244, 4294901760
    %4160 = vmatpush.msra.mxu0 %v4159
    %v4161 = vand.u32 %v242, 4294901760
    %4162 = vmatpush.msra.mxu0 %v4161
    %v4163 = vand.u32 %v240, 4294901760
    %4164 = vmatpush.msra.mxu0 %v4163
    %v4165 = vand.u32 %v3828, 4294901760
    %4166 = vmatmul.f32.gmra.mxu0 %v4165
    %v4167 = vpop.f32.mrf.mxu0
    %v4168 = vadd.f32 %v4131, %v4167
    %4169 = vdwg.mxu0
    %v4170 = vand.u32 %v271, 4294901760
    %4171 = vmatpush.msra.mxu0 %v4170
    %v4172 = vand.u32 %v269, 4294901760
    %4173 = vmatpush.msra.mxu0 %v4172
    %v4174 = vand.u32 %v267, 4294901760
    %4175 = vmatpush.msra.mxu0 %v4174
    %v4176 = vand.u32 %v265, 4294901760
    %4177 = vmatpush.msra.mxu0 %v4176
    %v4178 = vand.u32 %v263, 4294901760
    %4179 = vmatpush.msra.mxu0 %v4178
    %v4180 = vand.u32 %v261, 4294901760
    %4181 = vmatpush.msra.mxu0 %v4180
    %v4182 = vand.u32 %v259, 4294901760
    %4183 = vmatpush.msra.mxu0 %v4182
    %v4184 = vand.u32 %v257, 4294901760
    %4185 = vmatpush.msra.mxu0 %v4184
    %v4186 = vand.u32 %v255, 4294901760
    %4187 = vmatpush.msra.mxu0 %v4186
    %v4188 = vand.u32 %v253, 4294901760
    %4189 = vmatpush.msra.mxu0 %v4188
    %v4190 = vand.u32 %v251, 4294901760
    %4191 = vmatpush.msra.mxu0 %v4190
    %v4192 = vand.u32 %v249, 4294901760
    %4193 = vmatpush.msra.mxu0 %v4192
    %v4194 = vand.u32 %v247, 4294901760
    %4195 = vmatpush.msra.mxu0 %v4194
    %v4196 = vand.u32 %v245, 4294901760
    %4197 = vmatpush.msra.mxu0 %v4196
    %v4198 = vand.u32 %v243, 4294901760
    %4199 = vmatpush.msra.mxu0 %v4198
    %v4200 = vand.u32 %v241, 4294901760
    %4201 = vmatpush.msra.mxu0 %v4200
    %v4202 = vand.u32 %v3828, 4294901760
    %v4203 = vsub.f32 %v3828, %v4202
    %v4204 = vand.u32 %v4203, 4294901760
    %v4205 = vsub.f32 %v4203, %v4204
    %v4206 = vand.u32 %v4205, 4294901760
    %4207 = vmatmul.f32.gmra.mxu0 %v4206
    %v4208 = vpop.f32.mrf.mxu0
    %v4209 = vadd.f32 %v1391, %v4208
    %4210 = vdwg.mxu0
    %v4211 = vand.u32 %v271, 4294901760
    %v4212 = vsub.f32 %v271, %v4211
    %v4213 = vand.u32 %v4212, 4294901760
    %v4214 = vsub.f32 %v4212, %v4213
    %v4215 = vand.u32 %v4214, 4294901760
    %4216 = vmatpush.msra.mxu0 %v4215
    %v4217 = vand.u32 %v269, 4294901760
    %v4218 = vsub.f32 %v269, %v4217
    %v4219 = vand.u32 %v4218, 4294901760
    %v4220 = vsub.f32 %v4218, %v4219
    %v4221 = vand.u32 %v4220, 4294901760
    %4222 = vmatpush.msra.mxu0 %v4221
    %v4223 = vand.u32 %v267, 4294901760
    %v4224 = vsub.f32 %v267, %v4223
    %v4225 = vand.u32 %v4224, 4294901760
    %v4226 = vsub.f32 %v4224, %v4225
    %v4227 = vand.u32 %v4226, 4294901760
    %4228 = vmatpush.msra.mxu0 %v4227
    %v4229 = vand.u32 %v265, 4294901760
    %v4230 = vsub.f32 %v265, %v4229
    %v4231 = vand.u32 %v4230, 4294901760
    %v4232 = vsub.f32 %v4230, %v4231
    %v4233 = vand.u32 %v4232, 4294901760
    %4234 = vmatpush.msra.mxu0 %v4233
    %v4235 = vand.u32 %v263, 4294901760
    %v4236 = vsub.f32 %v263, %v4235
    %v4237 = vand.u32 %v4236, 4294901760
    %v4238 = vsub.f32 %v4236, %v4237
    %v4239 = vand.u32 %v4238, 4294901760
    %4240 = vmatpush.msra.mxu0 %v4239
    %v4241 = vand.u32 %v261, 4294901760
    %v4242 = vsub.f32 %v261, %v4241
    %v4243 = vand.u32 %v4242, 4294901760
    %v4244 = vsub.f32 %v4242, %v4243
    %v4245 = vand.u32 %v4244, 4294901760
    %4246 = vmatpush.msra.mxu0 %v4245
    %v4247 = vand.u32 %v259, 4294901760
    %v4248 = vsub.f32 %v259, %v4247
    %v4249 = vand.u32 %v4248, 4294901760
    %v4250 = vsub.f32 %v4248, %v4249
    %v4251 = vand.u32 %v4250, 4294901760
    %4252 = vmatpush.msra.mxu0 %v4251
    %v4253 = vand.u32 %v257, 4294901760
    %v4254 = vsub.f32 %v257, %v4253
    %v4255 = vand.u32 %v4254, 4294901760
    %v4256 = vsub.f32 %v4254, %v4255
    %v4257 = vand.u32 %v4256, 4294901760
    %4258 = vmatpush.msra.mxu0 %v4257
    %v4259 = vand.u32 %v255, 4294901760
    %v4260 = vsub.f32 %v255, %v4259
    %v4261 = vand.u32 %v4260, 4294901760
    %v4262 = vsub.f32 %v4260, %v4261
    %v4263 = vand.u32 %v4262, 4294901760
    %4264 = vmatpush.msra.mxu0 %v4263
    %v4265 = vand.u32 %v253, 4294901760
    %v4266 = vsub.f32 %v253, %v4265
    %v4267 = vand.u32 %v4266, 4294901760
    %v4268 = vsub.f32 %v4266, %v4267
    %v4269 = vand.u32 %v4268, 4294901760
    %4270 = vmatpush.msra.mxu0 %v4269
    %v4271 = vand.u32 %v251, 4294901760
    %v4272 = vsub.f32 %v251, %v4271
    %v4273 = vand.u32 %v4272, 4294901760
    %v4274 = vsub.f32 %v4272, %v4273
    %v4275 = vand.u32 %v4274, 4294901760
    %4276 = vmatpush.msra.mxu0 %v4275
    %v4277 = vand.u32 %v249, 4294901760
    %v4278 = vsub.f32 %v249, %v4277
    %v4279 = vand.u32 %v4278, 4294901760
    %v4280 = vsub.f32 %v4278, %v4279
    %v4281 = vand.u32 %v4280, 4294901760
    %4282 = vmatpush.msra.mxu0 %v4281
    %v4283 = vand.u32 %v247, 4294901760
    %v4284 = vsub.f32 %v247, %v4283
    %v4285 = vand.u32 %v4284, 4294901760
    %v4286 = vsub.f32 %v4284, %v4285
    %v4287 = vand.u32 %v4286, 4294901760
    %4288 = vmatpush.msra.mxu0 %v4287
    %v4289 = vand.u32 %v245, 4294901760
    %v4290 = vsub.f32 %v245, %v4289
    %v4291 = vand.u32 %v4290, 4294901760
    %v4292 = vsub.f32 %v4290, %v4291
    %v4293 = vand.u32 %v4292, 4294901760
    %4294 = vmatpush.msra.mxu0 %v4293
    %v4295 = vand.u32 %v243, 4294901760
    %v4296 = vsub.f32 %v243, %v4295
    %v4297 = vand.u32 %v4296, 4294901760
    %v4298 = vsub.f32 %v4296, %v4297
    %v4299 = vand.u32 %v4298, 4294901760
    %4300 = vmatpush.msra.mxu0 %v4299
    %v4301 = vand.u32 %v241, 4294901760
    %v4302 = vsub.f32 %v241, %v4301
    %v4303 = vand.u32 %v4302, 4294901760
    %v4304 = vsub.f32 %v4302, %v4303
    %v4305 = vand.u32 %v4304, 4294901760
    %4306 = vmatpush.msra.mxu0 %v4305
    %v4307 = vand.u32 %v3828, 4294901760
    %4308 = vmatmul.f32.gmra.mxu0 %v4307
    %v4309 = vpop.f32.mrf.mxu0
    %v4310 = vadd.f32 %v4209, %v4309
    %4311 = vdwg.mxu0
    %v4312 = vand.u32 %v271, 4294901760
    %v4313 = vsub.f32 %v271, %v4312
    %4314 = vmatpush.msra.mxu0 %v4313
    %v4315 = vand.u32 %v269, 4294901760
    %v4316 = vsub.f32 %v269, %v4315
    %4317 = vmatpush.msra.mxu0 %v4316
    %v4318 = vand.u32 %v267, 4294901760
    %v4319 = vsub.f32 %v267, %v4318
    %4320 = vmatpush.msra.mxu0 %v4319
    %v4321 = vand.u32 %v265, 4294901760
    %v4322 = vsub.f32 %v265, %v4321
    %4323 = vmatpush.msra.mxu0 %v4322
    %v4324 = vand.u32 %v263, 4294901760
    %v4325 = vsub.f32 %v263, %v4324
    %4326 = vmatpush.msra.mxu0 %v4325
    %v4327 = vand.u32 %v261, 4294901760
    %v4328 = vsub.f32 %v261, %v4327
    %4329 = vmatpush.msra.mxu0 %v4328
    %v4330 = vand.u32 %v259, 4294901760
    %v4331 = vsub.f32 %v259, %v4330
    %4332 = vmatpush.msra.mxu0 %v4331
    %v4333 = vand.u32 %v257, 4294901760
    %v4334 = vsub.f32 %v257, %v4333
    %4335 = vmatpush.msra.mxu0 %v4334
    %v4336 = vand.u32 %v255, 4294901760
    %v4337 = vsub.f32 %v255, %v4336
    %4338 = vmatpush.msra.mxu0 %v4337
    %v4339 = vand.u32 %v253, 4294901760
    %v4340 = vsub.f32 %v253, %v4339
    %4341 = vmatpush.msra.mxu0 %v4340
    %v4342 = vand.u32 %v251, 4294901760
    %v4343 = vsub.f32 %v251, %v4342
    %4344 = vmatpush.msra.mxu0 %v4343
    %v4345 = vand.u32 %v249, 4294901760
    %v4346 = vsub.f32 %v249, %v4345
    %4347 = vmatpush.msra.mxu0 %v4346
    %v4348 = vand.u32 %v247, 4294901760
    %v4349 = vsub.f32 %v247, %v4348
    %4350 = vmatpush.msra.mxu0 %v4349
    %v4351 = vand.u32 %v245, 4294901760
    %v4352 = vsub.f32 %v245, %v4351
    %4353 = vmatpush.msra.mxu0 %v4352
    %v4354 = vand.u32 %v243, 4294901760
    %v4355 = vsub.f32 %v243, %v4354
    %4356 = vmatpush.msra.mxu0 %v4355
    %v4357 = vand.u32 %v241, 4294901760
    %v4358 = vsub.f32 %v241, %v4357
    %4359 = vmatpush.msra.mxu0 %v4358
    %v4360 = vand.u32 %v3828, 4294901760
    %v4361 = vsub.f32 %v3828, %v4360
    %4362 = vmatmul.f32.gmra.mxu0 %v4361
    %v4363 = vpop.f32.mrf.mxu0
    %v4364 = vadd.f32 %v4310, %v4363
    %4365 = vdwg.mxu0
    %v4366 = vand.u32 %v271, 4294901760
    %4367 = vmatpush.msra.mxu0 %v4366
    %v4368 = vand.u32 %v269, 4294901760
    %4369 = vmatpush.msra.mxu0 %v4368
    %v4370 = vand.u32 %v267, 4294901760
    %4371 = vmatpush.msra.mxu0 %v4370
    %v4372 = vand.u32 %v265, 4294901760
    %4373 = vmatpush.msra.mxu0 %v4372
    %v4374 = vand.u32 %v263, 4294901760
    %4375 = vmatpush.msra.mxu0 %v4374
    %v4376 = vand.u32 %v261, 4294901760
    %4377 = vmatpush.msra.mxu0 %v4376
    %v4378 = vand.u32 %v259, 4294901760
    %4379 = vmatpush.msra.mxu0 %v4378
    %v4380 = vand.u32 %v257, 4294901760
    %4381 = vmatpush.msra.mxu0 %v4380
    %v4382 = vand.u32 %v255, 4294901760
    %4383 = vmatpush.msra.mxu0 %v4382
    %v4384 = vand.u32 %v253, 4294901760
    %4385 = vmatpush.msra.mxu0 %v4384
    %v4386 = vand.u32 %v251, 4294901760
    %4387 = vmatpush.msra.mxu0 %v4386
    %v4388 = vand.u32 %v249, 4294901760
    %4389 = vmatpush.msra.mxu0 %v4388
    %v4390 = vand.u32 %v247, 4294901760
    %4391 = vmatpush.msra.mxu0 %v4390
    %v4392 = vand.u32 %v245, 4294901760
    %4393 = vmatpush.msra.mxu0 %v4392
    %v4394 = vand.u32 %v243, 4294901760
    %4395 = vmatpush.msra.mxu0 %v4394
    %v4396 = vand.u32 %v241, 4294901760
    %4397 = vmatpush.msra.mxu0 %v4396
    %v4398 = vand.u32 %v3828, 4294901760
    %v4399 = vsub.f32 %v3828, %v4398
    %v4400 = vand.u32 %v4399, 4294901760
    %4401 = vmatmul.f32.gmra.mxu0 %v4400
    %v4402 = vpop.f32.mrf.mxu0
    %v4403 = vadd.f32 %v4364, %v4402
    %4404 = vdwg.mxu0
    %v4405 = vand.u32 %v271, 4294901760
    %v4406 = vsub.f32 %v271, %v4405
    %v4407 = vand.u32 %v4406, 4294901760
    %4408 = vmatpush.msra.mxu0 %v4407
    %v4409 = vand.u32 %v269, 4294901760
    %v4410 = vsub.f32 %v269, %v4409
    %v4411 = vand.u32 %v4410, 4294901760
    %4412 = vmatpush.msra.mxu0 %v4411
    %v4413 = vand.u32 %v267, 4294901760
    %v4414 = vsub.f32 %v267, %v4413
    %v4415 = vand.u32 %v4414, 4294901760
    %4416 = vmatpush.msra.mxu0 %v4415
    %v4417 = vand.u32 %v265, 4294901760
    %v4418 = vsub.f32 %v265, %v4417
    %v4419 = vand.u32 %v4418, 4294901760
    %4420 = vmatpush.msra.mxu0 %v4419
    %v4421 = vand.u32 %v263, 4294901760
    %v4422 = vsub.f32 %v263, %v4421
    %v4423 = vand.u32 %v4422, 4294901760
    %4424 = vmatpush.msra.mxu0 %v4423
    %v4425 = vand.u32 %v261, 4294901760
    %v4426 = vsub.f32 %v261, %v4425
    %v4427 = vand.u32 %v4426, 4294901760
    %4428 = vmatpush.msra.mxu0 %v4427
    %v4429 = vand.u32 %v259, 4294901760
    %v4430 = vsub.f32 %v259, %v4429
    %v4431 = vand.u32 %v4430, 4294901760
    %4432 = vmatpush.msra.mxu0 %v4431
    %v4433 = vand.u32 %v257, 4294901760
    %v4434 = vsub.f32 %v257, %v4433
    %v4435 = vand.u32 %v4434, 4294901760
    %4436 = vmatpush.msra.mxu0 %v4435
    %v4437 = vand.u32 %v255, 4294901760
    %v4438 = vsub.f32 %v255, %v4437
    %v4439 = vand.u32 %v4438, 4294901760
    %4440 = vmatpush.msra.mxu0 %v4439
    %v4441 = vand.u32 %v253, 4294901760
    %v4442 = vsub.f32 %v253, %v4441
    %v4443 = vand.u32 %v4442, 4294901760
    %4444 = vmatpush.msra.mxu0 %v4443
    %v4445 = vand.u32 %v251, 4294901760
    %v4446 = vsub.f32 %v251, %v4445
    %v4447 = vand.u32 %v4446, 4294901760
    %4448 = vmatpush.msra.mxu0 %v4447
    %v4449 = vand.u32 %v249, 4294901760
    %v4450 = vsub.f32 %v249, %v4449
    %v4451 = vand.u32 %v4450, 4294901760
    %4452 = vmatpush.msra.mxu0 %v4451
    %v4453 = vand.u32 %v247, 4294901760
    %v4454 = vsub.f32 %v247, %v4453
    %v4455 = vand.u32 %v4454, 4294901760
    %4456 = vmatpush.msra.mxu0 %v4455
    %v4457 = vand.u32 %v245, 4294901760
    %v4458 = vsub.f32 %v245, %v4457
    %v4459 = vand.u32 %v4458, 4294901760
    %4460 = vmatpush.msra.mxu0 %v4459
    %v4461 = vand.u32 %v243, 4294901760
    %v4462 = vsub.f32 %v243, %v4461
    %v4463 = vand.u32 %v4462, 4294901760
    %4464 = vmatpush.msra.mxu0 %v4463
    %v4465 = vand.u32 %v241, 4294901760
    %v4466 = vsub.f32 %v241, %v4465
    %v4467 = vand.u32 %v4466, 4294901760
    %4468 = vmatpush.msra.mxu0 %v4467
    %v4469 = vand.u32 %v3828, 4294901760
    %4470 = vmatmul.f32.gmra.mxu0 %v4469
    %v4471 = vpop.f32.mrf.mxu0
    %v4472 = vadd.f32 %v4403, %v4471
    %4473 = vdwg.mxu0
    %v4474 = vand.u32 %v271, 4294901760
    %4475 = vmatpush.msra.mxu0 %v4474
    %v4476 = vand.u32 %v269, 4294901760
    %4477 = vmatpush.msra.mxu0 %v4476
    %v4478 = vand.u32 %v267, 4294901760
    %4479 = vmatpush.msra.mxu0 %v4478
    %v4480 = vand.u32 %v265, 4294901760
    %4481 = vmatpush.msra.mxu0 %v4480
    %v4482 = vand.u32 %v263, 4294901760
    %4483 = vmatpush.msra.mxu0 %v4482
    %v4484 = vand.u32 %v261, 4294901760
    %4485 = vmatpush.msra.mxu0 %v4484
    %v4486 = vand.u32 %v259, 4294901760
    %4487 = vmatpush.msra.mxu0 %v4486
    %v4488 = vand.u32 %v257, 4294901760
    %4489 = vmatpush.msra.mxu0 %v4488
    %v4490 = vand.u32 %v255, 4294901760
    %4491 = vmatpush.msra.mxu0 %v4490
    %v4492 = vand.u32 %v253, 4294901760
    %4493 = vmatpush.msra.mxu0 %v4492
    %v4494 = vand.u32 %v251, 4294901760
    %4495 = vmatpush.msra.mxu0 %v4494
    %v4496 = vand.u32 %v249, 4294901760
    %4497 = vmatpush.msra.mxu0 %v4496
    %v4498 = vand.u32 %v247, 4294901760
    %4499 = vmatpush.msra.mxu0 %v4498
    %v4500 = vand.u32 %v245, 4294901760
    %4501 = vmatpush.msra.mxu0 %v4500
    %v4502 = vand.u32 %v243, 4294901760
    %4503 = vmatpush.msra.mxu0 %v4502
    %v4504 = vand.u32 %v241, 4294901760
    %4505 = vmatpush.msra.mxu0 %v4504
    %v4506 = vand.u32 %v3828, 4294901760
    %4507 = vmatmul.f32.gmra.mxu0 %v4506
    %v4508 = vpop.f32.mrf.mxu0
    %v4509 = vadd.f32 %v4472, %v4508
    %4510 = vdwg.mxu0
    %v4511 = vmax.f32 %v4168, 0.0
    %v4512 = vmax.f32 %v4509, 0.0
    %v4513 = vand.u32 %v288, 4294901760
    %4514 = vmatpush.msra.mxu0 %v4513
    %v4515 = vand.u32 %v287, 4294901760
    %4516 = vmatpush.msra.mxu0 %v4515
    %v4517 = vand.u32 %v286, 4294901760
    %4518 = vmatpush.msra.mxu0 %v4517
    %v4519 = vand.u32 %v285, 4294901760
    %4520 = vmatpush.msra.mxu0 %v4519
    %v4521 = vand.u32 %v284, 4294901760
    %4522 = vmatpush.msra.mxu0 %v4521
    %v4523 = vand.u32 %v283, 4294901760
    %4524 = vmatpush.msra.mxu0 %v4523
    %v4525 = vand.u32 %v282, 4294901760
    %4526 = vmatpush.msra.mxu0 %v4525
    %v4527 = vand.u32 %v281, 4294901760
    %4528 = vmatpush.msra.mxu0 %v4527
    %v4529 = vand.u32 %v280, 4294901760
    %4530 = vmatpush.msra.mxu0 %v4529
    %v4531 = vand.u32 %v279, 4294901760
    %4532 = vmatpush.msra.mxu0 %v4531
    %v4533 = vand.u32 %v278, 4294901760
    %4534 = vmatpush.msra.mxu0 %v4533
    %v4535 = vand.u32 %v277, 4294901760
    %4536 = vmatpush.msra.mxu0 %v4535
    %v4537 = vand.u32 %v276, 4294901760
    %4538 = vmatpush.msra.mxu0 %v4537
    %v4539 = vand.u32 %v275, 4294901760
    %4540 = vmatpush.msra.mxu0 %v4539
    %v4541 = vand.u32 %v274, 4294901760
    %4542 = vmatpush.msra.mxu0 %v4541
    %v4543 = vand.u32 %v273, 4294901760
    %4544 = vmatpush.msra.mxu0 %v4543
    %v4545 = vand.u32 %v4511, 4294901760
    %v4546 = vsub.f32 %v4511, %v4545
    %v4547 = vand.u32 %v4546, 4294901760
    %v4548 = vsub.f32 %v4546, %v4547
    %v4549 = vand.u32 %v4548, 4294901760
    %4550 = vmatmul.f32.gmra.mxu0 %v4549
    %v4551 = vpop.f32.mrf.mxu0
    %v4552 = vadd.f32 %v2079, %v4551
    %4553 = vdwg.mxu0
    %v4554 = vand.u32 %v288, 4294901760
    %v4555 = vsub.f32 %v288, %v4554
    %v4556 = vand.u32 %v4555, 4294901760
    %v4557 = vsub.f32 %v4555, %v4556
    %v4558 = vand.u32 %v4557, 4294901760
    %4559 = vmatpush.msra.mxu0 %v4558
    %v4560 = vand.u32 %v287, 4294901760
    %v4561 = vsub.f32 %v287, %v4560
    %v4562 = vand.u32 %v4561, 4294901760
    %v4563 = vsub.f32 %v4561, %v4562
    %v4564 = vand.u32 %v4563, 4294901760
    %4565 = vmatpush.msra.mxu0 %v4564
    %v4566 = vand.u32 %v286, 4294901760
    %v4567 = vsub.f32 %v286, %v4566
    %v4568 = vand.u32 %v4567, 4294901760
    %v4569 = vsub.f32 %v4567, %v4568
    %v4570 = vand.u32 %v4569, 4294901760
    %4571 = vmatpush.msra.mxu0 %v4570
    %v4572 = vand.u32 %v285, 4294901760
    %v4573 = vsub.f32 %v285, %v4572
    %v4574 = vand.u32 %v4573, 4294901760
    %v4575 = vsub.f32 %v4573, %v4574
    %v4576 = vand.u32 %v4575, 4294901760
    %4577 = vmatpush.msra.mxu0 %v4576
    %v4578 = vand.u32 %v284, 4294901760
    %v4579 = vsub.f32 %v284, %v4578
    %v4580 = vand.u32 %v4579, 4294901760
    %v4581 = vsub.f32 %v4579, %v4580
    %v4582 = vand.u32 %v4581, 4294901760
    %4583 = vmatpush.msra.mxu0 %v4582
    %v4584 = vand.u32 %v283, 4294901760
    %v4585 = vsub.f32 %v283, %v4584
    %v4586 = vand.u32 %v4585, 4294901760
    %v4587 = vsub.f32 %v4585, %v4586
    %v4588 = vand.u32 %v4587, 4294901760
    %4589 = vmatpush.msra.mxu0 %v4588
    %v4590 = vand.u32 %v282, 4294901760
    %v4591 = vsub.f32 %v282, %v4590
    %v4592 = vand.u32 %v4591, 4294901760
    %v4593 = vsub.f32 %v4591, %v4592
    %v4594 = vand.u32 %v4593, 4294901760
    %4595 = vmatpush.msra.mxu0 %v4594
    %v4596 = vand.u32 %v281, 4294901760
    %v4597 = vsub.f32 %v281, %v4596
    %v4598 = vand.u32 %v4597, 4294901760
    %v4599 = vsub.f32 %v4597, %v4598
    %v4600 = vand.u32 %v4599, 4294901760
    %4601 = vmatpush.msra.mxu0 %v4600
    %v4602 = vand.u32 %v280, 4294901760
    %v4603 = vsub.f32 %v280, %v4602
    %v4604 = vand.u32 %v4603, 4294901760
    %v4605 = vsub.f32 %v4603, %v4604
    %v4606 = vand.u32 %v4605, 4294901760
    %4607 = vmatpush.msra.mxu0 %v4606
    %v4608 = vand.u32 %v279, 4294901760
    %v4609 = vsub.f32 %v279, %v4608
    %v4610 = vand.u32 %v4609, 4294901760
    %v4611 = vsub.f32 %v4609, %v4610
    %v4612 = vand.u32 %v4611, 4294901760
    %4613 = vmatpush.msra.mxu0 %v4612
    %v4614 = vand.u32 %v278, 4294901760
    %v4615 = vsub.f32 %v278, %v4614
    %v4616 = vand.u32 %v4615, 4294901760
    %v4617 = vsub.f32 %v4615, %v4616
    %v4618 = vand.u32 %v4617, 4294901760
    %4619 = vmatpush.msra.mxu0 %v4618
    %v4620 = vand.u32 %v277, 4294901760
    %v4621 = vsub.f32 %v277, %v4620
    %v4622 = vand.u32 %v4621, 4294901760
    %v4623 = vsub.f32 %v4621, %v4622
    %v4624 = vand.u32 %v4623, 4294901760
    %4625 = vmatpush.msra.mxu0 %v4624
    %v4626 = vand.u32 %v276, 4294901760
    %v4627 = vsub.f32 %v276, %v4626
    %v4628 = vand.u32 %v4627, 4294901760
    %v4629 = vsub.f32 %v4627, %v4628
    %v4630 = vand.u32 %v4629, 4294901760
    %4631 = vmatpush.msra.mxu0 %v4630
    %v4632 = vand.u32 %v275, 4294901760
    %v4633 = vsub.f32 %v275, %v4632
    %v4634 = vand.u32 %v4633, 4294901760
    %v4635 = vsub.f32 %v4633, %v4634
    %v4636 = vand.u32 %v4635, 4294901760
    %4637 = vmatpush.msra.mxu0 %v4636
    %v4638 = vand.u32 %v274, 4294901760
    %v4639 = vsub.f32 %v274, %v4638
    %v4640 = vand.u32 %v4639, 4294901760
    %v4641 = vsub.f32 %v4639, %v4640
    %v4642 = vand.u32 %v4641, 4294901760
    %4643 = vmatpush.msra.mxu0 %v4642
    %v4644 = vand.u32 %v273, 4294901760
    %v4645 = vsub.f32 %v273, %v4644
    %v4646 = vand.u32 %v4645, 4294901760
    %v4647 = vsub.f32 %v4645, %v4646
    %v4648 = vand.u32 %v4647, 4294901760
    %4649 = vmatpush.msra.mxu0 %v4648
    %v4650 = vand.u32 %v4511, 4294901760
    %4651 = vmatmul.f32.gmra.mxu0 %v4650
    %v4652 = vpop.f32.mrf.mxu0
    %v4653 = vadd.f32 %v4552, %v4652
    %4654 = vdwg.mxu0
    %v4655 = vand.u32 %v288, 4294901760
    %v4656 = vsub.f32 %v288, %v4655
    %4657 = vmatpush.msra.mxu0 %v4656
    %v4658 = vand.u32 %v287, 4294901760
    %v4659 = vsub.f32 %v287, %v4658
    %4660 = vmatpush.msra.mxu0 %v4659
    %v4661 = vand.u32 %v286, 4294901760
    %v4662 = vsub.f32 %v286, %v4661
    %4663 = vmatpush.msra.mxu0 %v4662
    %v4664 = vand.u32 %v285, 4294901760
    %v4665 = vsub.f32 %v285, %v4664
    %4666 = vmatpush.msra.mxu0 %v4665
    %v4667 = vand.u32 %v284, 4294901760
    %v4668 = vsub.f32 %v284, %v4667
    %4669 = vmatpush.msra.mxu0 %v4668
    %v4670 = vand.u32 %v283, 4294901760
    %v4671 = vsub.f32 %v283, %v4670
    %4672 = vmatpush.msra.mxu0 %v4671
    %v4673 = vand.u32 %v282, 4294901760
    %v4674 = vsub.f32 %v282, %v4673
    %4675 = vmatpush.msra.mxu0 %v4674
    %v4676 = vand.u32 %v281, 4294901760
    %v4677 = vsub.f32 %v281, %v4676
    %4678 = vmatpush.msra.mxu0 %v4677
    %v4679 = vand.u32 %v280, 4294901760
    %v4680 = vsub.f32 %v280, %v4679
    %4681 = vmatpush.msra.mxu0 %v4680
    %v4682 = vand.u32 %v279, 4294901760
    %v4683 = vsub.f32 %v279, %v4682
    %4684 = vmatpush.msra.mxu0 %v4683
    %v4685 = vand.u32 %v278, 4294901760
    %v4686 = vsub.f32 %v278, %v4685
    %4687 = vmatpush.msra.mxu0 %v4686
    %v4688 = vand.u32 %v277, 4294901760
    %v4689 = vsub.f32 %v277, %v4688
    %4690 = vmatpush.msra.mxu0 %v4689
    %v4691 = vand.u32 %v276, 4294901760
    %v4692 = vsub.f32 %v276, %v4691
    %4693 = vmatpush.msra.mxu0 %v4692
    %v4694 = vand.u32 %v275, 4294901760
    %v4695 = vsub.f32 %v275, %v4694
    %4696 = vmatpush.msra.mxu0 %v4695
    %v4697 = vand.u32 %v274, 4294901760
    %v4698 = vsub.f32 %v274, %v4697
    %4699 = vmatpush.msra.mxu0 %v4698
    %v4700 = vand.u32 %v273, 4294901760
    %v4701 = vsub.f32 %v273, %v4700
    %4702 = vmatpush.msra.mxu0 %v4701
    %v4703 = vand.u32 %v4511, 4294901760
    %v4704 = vsub.f32 %v4511, %v4703
    %4705 = vmatmul.f32.gmra.mxu0 %v4704
    %v4706 = vpop.f32.mrf.mxu0
    %v4707 = vadd.f32 %v4653, %v4706
    %4708 = vdwg.mxu0
    %v4709 = vand.u32 %v288, 4294901760
    %4710 = vmatpush.msra.mxu0 %v4709
    %v4711 = vand.u32 %v287, 4294901760
    %4712 = vmatpush.msra.mxu0 %v4711
    %v4713 = vand.u32 %v286, 4294901760
    %4714 = vmatpush.msra.mxu0 %v4713
    %v4715 = vand.u32 %v285, 4294901760
    %4716 = vmatpush.msra.mxu0 %v4715
    %v4717 = vand.u32 %v284, 4294901760
    %4718 = vmatpush.msra.mxu0 %v4717
    %v4719 = vand.u32 %v283, 4294901760
    %4720 = vmatpush.msra.mxu0 %v4719
    %v4721 = vand.u32 %v282, 4294901760
    %4722 = vmatpush.msra.mxu0 %v4721
    %v4723 = vand.u32 %v281, 4294901760
    %4724 = vmatpush.msra.mxu0 %v4723
    %v4725 = vand.u32 %v280, 4294901760
    %4726 = vmatpush.msra.mxu0 %v4725
    %v4727 = vand.u32 %v279, 4294901760
    %4728 = vmatpush.msra.mxu0 %v4727
    %v4729 = vand.u32 %v278, 4294901760
    %4730 = vmatpush.msra.mxu0 %v4729
    %v4731 = vand.u32 %v277, 4294901760
    %4732 = vmatpush.msra.mxu0 %v4731
    %v4733 = vand.u32 %v276, 4294901760
    %4734 = vmatpush.msra.mxu0 %v4733
    %v4735 = vand.u32 %v275, 4294901760
    %4736 = vmatpush.msra.mxu0 %v4735
    %v4737 = vand.u32 %v274, 4294901760
    %4738 = vmatpush.msra.mxu0 %v4737
    %v4739 = vand.u32 %v273, 4294901760
    %4740 = vmatpush.msra.mxu0 %v4739
    %v4741 = vand.u32 %v4511, 4294901760
    %v4742 = vsub.f32 %v4511, %v4741
    %v4743 = vand.u32 %v4742, 4294901760
    %4744 = vmatmul.f32.gmra.mxu0 %v4743
    %v4745 = vpop.f32.mrf.mxu0
    %v4746 = vadd.f32 %v4707, %v4745
    %4747 = vdwg.mxu0
    %v4748 = vand.u32 %v288, 4294901760
    %v4749 = vsub.f32 %v288, %v4748
    %v4750 = vand.u32 %v4749, 4294901760
    %4751 = vmatpush.msra.mxu0 %v4750
    %v4752 = vand.u32 %v287, 4294901760
    %v4753 = vsub.f32 %v287, %v4752
    %v4754 = vand.u32 %v4753, 4294901760
    %4755 = vmatpush.msra.mxu0 %v4754
    %v4756 = vand.u32 %v286, 4294901760
    %v4757 = vsub.f32 %v286, %v4756
    %v4758 = vand.u32 %v4757, 4294901760
    %4759 = vmatpush.msra.mxu0 %v4758
    %v4760 = vand.u32 %v285, 4294901760
    %v4761 = vsub.f32 %v285, %v4760
    %v4762 = vand.u32 %v4761, 4294901760
    %4763 = vmatpush.msra.mxu0 %v4762
    %v4764 = vand.u32 %v284, 4294901760
    %v4765 = vsub.f32 %v284, %v4764
    %v4766 = vand.u32 %v4765, 4294901760
    %4767 = vmatpush.msra.mxu0 %v4766
    %v4768 = vand.u32 %v283, 4294901760
    %v4769 = vsub.f32 %v283, %v4768
    %v4770 = vand.u32 %v4769, 4294901760
    %4771 = vmatpush.msra.mxu0 %v4770
    %v4772 = vand.u32 %v282, 4294901760
    %v4773 = vsub.f32 %v282, %v4772
    %v4774 = vand.u32 %v4773, 4294901760
    %4775 = vmatpush.msra.mxu0 %v4774
    %v4776 = vand.u32 %v281, 4294901760
    %v4777 = vsub.f32 %v281, %v4776
    %v4778 = vand.u32 %v4777, 4294901760
    %4779 = vmatpush.msra.mxu0 %v4778
    %v4780 = vand.u32 %v280, 4294901760
    %v4781 = vsub.f32 %v280, %v4780
    %v4782 = vand.u32 %v4781, 4294901760
    %4783 = vmatpush.msra.mxu0 %v4782
    %v4784 = vand.u32 %v279, 4294901760
    %v4785 = vsub.f32 %v279, %v4784
    %v4786 = vand.u32 %v4785, 4294901760
    %4787 = vmatpush.msra.mxu0 %v4786
    %v4788 = vand.u32 %v278, 4294901760
    %v4789 = vsub.f32 %v278, %v4788
    %v4790 = vand.u32 %v4789, 4294901760
    %4791 = vmatpush.msra.mxu0 %v4790
    %v4792 = vand.u32 %v277, 4294901760
    %v4793 = vsub.f32 %v277, %v4792
    %v4794 = vand.u32 %v4793, 4294901760
    %4795 = vmatpush.msra.mxu0 %v4794
    %v4796 = vand.u32 %v276, 4294901760
    %v4797 = vsub.f32 %v276, %v4796
    %v4798 = vand.u32 %v4797, 4294901760
    %4799 = vmatpush.msra.mxu0 %v4798
    %v4800 = vand.u32 %v275, 4294901760
    %v4801 = vsub.f32 %v275, %v4800
    %v4802 = vand.u32 %v4801, 4294901760
    %4803 = vmatpush.msra.mxu0 %v4802
    %v4804 = vand.u32 %v274, 4294901760
    %v4805 = vsub.f32 %v274, %v4804
    %v4806 = vand.u32 %v4805, 4294901760
    %4807 = vmatpush.msra.mxu0 %v4806
    %v4808 = vand.u32 %v273, 4294901760
    %v4809 = vsub.f32 %v273, %v4808
    %v4810 = vand.u32 %v4809, 4294901760
    %4811 = vmatpush.msra.mxu0 %v4810
    %v4812 = vand.u32 %v4511, 4294901760
    %4813 = vmatmul.f32.gmra.mxu0 %v4812
    %v4814 = vpop.f32.mrf.mxu0
    %v4815 = vadd.f32 %v4746, %v4814
    %4816 = vdwg.mxu0
    %v4817 = vand.u32 %v288, 4294901760
    %4818 = vmatpush.msra.mxu0 %v4817
    %v4819 = vand.u32 %v287, 4294901760
    %4820 = vmatpush.msra.mxu0 %v4819
    %v4821 = vand.u32 %v286, 4294901760
    %4822 = vmatpush.msra.mxu0 %v4821
    %v4823 = vand.u32 %v285, 4294901760
    %4824 = vmatpush.msra.mxu0 %v4823
    %v4825 = vand.u32 %v284, 4294901760
    %4826 = vmatpush.msra.mxu0 %v4825
    %v4827 = vand.u32 %v283, 4294901760
    %4828 = vmatpush.msra.mxu0 %v4827
    %v4829 = vand.u32 %v282, 4294901760
    %4830 = vmatpush.msra.mxu0 %v4829
    %v4831 = vand.u32 %v281, 4294901760
    %4832 = vmatpush.msra.mxu0 %v4831
    %v4833 = vand.u32 %v280, 4294901760
    %4834 = vmatpush.msra.mxu0 %v4833
    %v4835 = vand.u32 %v279, 4294901760
    %4836 = vmatpush.msra.mxu0 %v4835
    %v4837 = vand.u32 %v278, 4294901760
    %4838 = vmatpush.msra.mxu0 %v4837
    %v4839 = vand.u32 %v277, 4294901760
    %4840 = vmatpush.msra.mxu0 %v4839
    %v4841 = vand.u32 %v276, 4294901760
    %4842 = vmatpush.msra.mxu0 %v4841
    %v4843 = vand.u32 %v275, 4294901760
    %4844 = vmatpush.msra.mxu0 %v4843
    %v4845 = vand.u32 %v274, 4294901760
    %4846 = vmatpush.msra.mxu0 %v4845
    %v4847 = vand.u32 %v273, 4294901760
    %4848 = vmatpush.msra.mxu0 %v4847
    %v4849 = vand.u32 %v4511, 4294901760
    %4850 = vmatmul.f32.gmra.mxu0 %v4849
    %v4851 = vpop.f32.mrf.mxu0
    %v4852 = vadd.f32 %v4815, %v4851
    %4853 = vdwg.mxu0
    %v4854 = vand.u32 %v304, 4294901760
    %4855 = vmatpush.msra.mxu0 %v4854
    %v4856 = vand.u32 %v303, 4294901760
    %4857 = vmatpush.msra.mxu0 %v4856
    %v4858 = vand.u32 %v302, 4294901760
    %4859 = vmatpush.msra.mxu0 %v4858
    %v4860 = vand.u32 %v301, 4294901760
    %4861 = vmatpush.msra.mxu0 %v4860
    %v4862 = vand.u32 %v300, 4294901760
    %4863 = vmatpush.msra.mxu0 %v4862
    %v4864 = vand.u32 %v299, 4294901760
    %4865 = vmatpush.msra.mxu0 %v4864
    %v4866 = vand.u32 %v298, 4294901760
    %4867 = vmatpush.msra.mxu0 %v4866
    %v4868 = vand.u32 %v297, 4294901760
    %4869 = vmatpush.msra.mxu0 %v4868
    %v4870 = vand.u32 %v296, 4294901760
    %4871 = vmatpush.msra.mxu0 %v4870
    %v4872 = vand.u32 %v295, 4294901760
    %4873 = vmatpush.msra.mxu0 %v4872
    %v4874 = vand.u32 %v294, 4294901760
    %4875 = vmatpush.msra.mxu0 %v4874
    %v4876 = vand.u32 %v293, 4294901760
    %4877 = vmatpush.msra.mxu0 %v4876
    %v4878 = vand.u32 %v292, 4294901760
    %4879 = vmatpush.msra.mxu0 %v4878
    %v4880 = vand.u32 %v291, 4294901760
    %4881 = vmatpush.msra.mxu0 %v4880
    %v4882 = vand.u32 %v290, 4294901760
    %4883 = vmatpush.msra.mxu0 %v4882
    %v4884 = vand.u32 %v289, 4294901760
    %4885 = vmatpush.msra.mxu0 %v4884
    %v4886 = vand.u32 %v4512, 4294901760
    %v4887 = vsub.f32 %v4512, %v4886
    %v4888 = vand.u32 %v4887, 4294901760
    %v4889 = vsub.f32 %v4887, %v4888
    %v4890 = vand.u32 %v4889, 4294901760
    %4891 = vmatmul.f32.gmra.mxu0 %v4890
    %v4892 = vpop.f32.mrf.mxu0
    %v4893 = vadd.f32 %v4852, %v4892
    %4894 = vdwg.mxu0
    %v4895 = vand.u32 %v304, 4294901760
    %v4896 = vsub.f32 %v304, %v4895
    %v4897 = vand.u32 %v4896, 4294901760
    %v4898 = vsub.f32 %v4896, %v4897
    %v4899 = vand.u32 %v4898, 4294901760
    %4900 = vmatpush.msra.mxu0 %v4899
    %v4901 = vand.u32 %v303, 4294901760
    %v4902 = vsub.f32 %v303, %v4901
    %v4903 = vand.u32 %v4902, 4294901760
    %v4904 = vsub.f32 %v4902, %v4903
    %v4905 = vand.u32 %v4904, 4294901760
    %4906 = vmatpush.msra.mxu0 %v4905
    %v4907 = vand.u32 %v302, 4294901760
    %v4908 = vsub.f32 %v302, %v4907
    %v4909 = vand.u32 %v4908, 4294901760
    %v4910 = vsub.f32 %v4908, %v4909
    %v4911 = vand.u32 %v4910, 4294901760
    %4912 = vmatpush.msra.mxu0 %v4911
    %v4913 = vand.u32 %v301, 4294901760
    %v4914 = vsub.f32 %v301, %v4913
    %v4915 = vand.u32 %v4914, 4294901760
    %v4916 = vsub.f32 %v4914, %v4915
    %v4917 = vand.u32 %v4916, 4294901760
    %4918 = vmatpush.msra.mxu0 %v4917
    %v4919 = vand.u32 %v300, 4294901760
    %v4920 = vsub.f32 %v300, %v4919
    %v4921 = vand.u32 %v4920, 4294901760
    %v4922 = vsub.f32 %v4920, %v4921
    %v4923 = vand.u32 %v4922, 4294901760
    %4924 = vmatpush.msra.mxu0 %v4923
    %v4925 = vand.u32 %v299, 4294901760
    %v4926 = vsub.f32 %v299, %v4925
    %v4927 = vand.u32 %v4926, 4294901760
    %v4928 = vsub.f32 %v4926, %v4927
    %v4929 = vand.u32 %v4928, 4294901760
    %4930 = vmatpush.msra.mxu0 %v4929
    %v4931 = vand.u32 %v298, 4294901760
    %v4932 = vsub.f32 %v298, %v4931
    %v4933 = vand.u32 %v4932, 4294901760
    %v4934 = vsub.f32 %v4932, %v4933
    %v4935 = vand.u32 %v4934, 4294901760
    %4936 = vmatpush.msra.mxu0 %v4935
    %v4937 = vand.u32 %v297, 4294901760
    %v4938 = vsub.f32 %v297, %v4937
    %v4939 = vand.u32 %v4938, 4294901760
    %v4940 = vsub.f32 %v4938, %v4939
    %v4941 = vand.u32 %v4940, 4294901760
    %4942 = vmatpush.msra.mxu0 %v4941
    %v4943 = vand.u32 %v296, 4294901760
    %v4944 = vsub.f32 %v296, %v4943
    %v4945 = vand.u32 %v4944, 4294901760
    %v4946 = vsub.f32 %v4944, %v4945
    %v4947 = vand.u32 %v4946, 4294901760
    %4948 = vmatpush.msra.mxu0 %v4947
    %v4949 = vand.u32 %v295, 4294901760
    %v4950 = vsub.f32 %v295, %v4949
    %v4951 = vand.u32 %v4950, 4294901760
    %v4952 = vsub.f32 %v4950, %v4951
    %v4953 = vand.u32 %v4952, 4294901760
    %4954 = vmatpush.msra.mxu0 %v4953
    %v4955 = vand.u32 %v294, 4294901760
    %v4956 = vsub.f32 %v294, %v4955
    %v4957 = vand.u32 %v4956, 4294901760
    %v4958 = vsub.f32 %v4956, %v4957
    %v4959 = vand.u32 %v4958, 4294901760
    %4960 = vmatpush.msra.mxu0 %v4959
    %v4961 = vand.u32 %v293, 4294901760
    %v4962 = vsub.f32 %v293, %v4961
    %v4963 = vand.u32 %v4962, 4294901760
    %v4964 = vsub.f32 %v4962, %v4963
    %v4965 = vand.u32 %v4964, 4294901760
    %4966 = vmatpush.msra.mxu0 %v4965
    %v4967 = vand.u32 %v292, 4294901760
    %v4968 = vsub.f32 %v292, %v4967
    %v4969 = vand.u32 %v4968, 4294901760
    %v4970 = vsub.f32 %v4968, %v4969
    %v4971 = vand.u32 %v4970, 4294901760
    %4972 = vmatpush.msra.mxu0 %v4971
    %v4973 = vand.u32 %v291, 4294901760
    %v4974 = vsub.f32 %v291, %v4973
    %v4975 = vand.u32 %v4974, 4294901760
    %v4976 = vsub.f32 %v4974, %v4975
    %v4977 = vand.u32 %v4976, 4294901760
    %4978 = vmatpush.msra.mxu0 %v4977
    %v4979 = vand.u32 %v290, 4294901760
    %v4980 = vsub.f32 %v290, %v4979
    %v4981 = vand.u32 %v4980, 4294901760
    %v4982 = vsub.f32 %v4980, %v4981
    %v4983 = vand.u32 %v4982, 4294901760
    %4984 = vmatpush.msra.mxu0 %v4983
    %v4985 = vand.u32 %v289, 4294901760
    %v4986 = vsub.f32 %v289, %v4985
    %v4987 = vand.u32 %v4986, 4294901760
    %v4988 = vsub.f32 %v4986, %v4987
    %v4989 = vand.u32 %v4988, 4294901760
    %4990 = vmatpush.msra.mxu0 %v4989
    %v4991 = vand.u32 %v4512, 4294901760
    %4992 = vmatmul.f32.gmra.mxu0 %v4991
    %v4993 = vpop.f32.mrf.mxu0
    %v4994 = vadd.f32 %v4893, %v4993
    %4995 = vdwg.mxu0
    %v4996 = vand.u32 %v304, 4294901760
    %v4997 = vsub.f32 %v304, %v4996
    %4998 = vmatpush.msra.mxu0 %v4997
    %v4999 = vand.u32 %v303, 4294901760
    %v5000 = vsub.f32 %v303, %v4999
    %5001 = vmatpush.msra.mxu0 %v5000
    %v5002 = vand.u32 %v302, 4294901760
    %v5003 = vsub.f32 %v302, %v5002
    %5004 = vmatpush.msra.mxu0 %v5003
    %v5005 = vand.u32 %v301, 4294901760
    %v5006 = vsub.f32 %v301, %v5005
    %5007 = vmatpush.msra.mxu0 %v5006
    %v5008 = vand.u32 %v300, 4294901760
    %v5009 = vsub.f32 %v300, %v5008
    %5010 = vmatpush.msra.mxu0 %v5009
    %v5011 = vand.u32 %v299, 4294901760
    %v5012 = vsub.f32 %v299, %v5011
    %5013 = vmatpush.msra.mxu0 %v5012
    %v5014 = vand.u32 %v298, 4294901760
    %v5015 = vsub.f32 %v298, %v5014
    %5016 = vmatpush.msra.mxu0 %v5015
    %v5017 = vand.u32 %v297, 4294901760
    %v5018 = vsub.f32 %v297, %v5017
    %5019 = vmatpush.msra.mxu0 %v5018
    %v5020 = vand.u32 %v296, 4294901760
    %v5021 = vsub.f32 %v296, %v5020
    %5022 = vmatpush.msra.mxu0 %v5021
    %v5023 = vand.u32 %v295, 4294901760
    %v5024 = vsub.f32 %v295, %v5023
    %5025 = vmatpush.msra.mxu0 %v5024
    %v5026 = vand.u32 %v294, 4294901760
    %v5027 = vsub.f32 %v294, %v5026
    %5028 = vmatpush.msra.mxu0 %v5027
    %v5029 = vand.u32 %v293, 4294901760
    %v5030 = vsub.f32 %v293, %v5029
    %5031 = vmatpush.msra.mxu0 %v5030
    %v5032 = vand.u32 %v292, 4294901760
    %v5033 = vsub.f32 %v292, %v5032
    %5034 = vmatpush.msra.mxu0 %v5033
    %v5035 = vand.u32 %v291, 4294901760
    %v5036 = vsub.f32 %v291, %v5035
    %5037 = vmatpush.msra.mxu0 %v5036
    %v5038 = vand.u32 %v290, 4294901760
    %v5039 = vsub.f32 %v290, %v5038
    %5040 = vmatpush.msra.mxu0 %v5039
    %v5041 = vand.u32 %v289, 4294901760
    %v5042 = vsub.f32 %v289, %v5041
    %5043 = vmatpush.msra.mxu0 %v5042
    %v5044 = vand.u32 %v4512, 4294901760
    %v5045 = vsub.f32 %v4512, %v5044
    %5046 = vmatmul.f32.gmra.mxu0 %v5045
    %v5047 = vpop.f32.mrf.mxu0
    %v5048 = vadd.f32 %v4994, %v5047
    %5049 = vdwg.mxu0
    %v5050 = vand.u32 %v304, 4294901760
    %5051 = vmatpush.msra.mxu0 %v5050
    %v5052 = vand.u32 %v303, 4294901760
    %5053 = vmatpush.msra.mxu0 %v5052
    %v5054 = vand.u32 %v302, 4294901760
    %5055 = vmatpush.msra.mxu0 %v5054
    %v5056 = vand.u32 %v301, 4294901760
    %5057 = vmatpush.msra.mxu0 %v5056
    %v5058 = vand.u32 %v300, 4294901760
    %5059 = vmatpush.msra.mxu0 %v5058
    %v5060 = vand.u32 %v299, 4294901760
    %5061 = vmatpush.msra.mxu0 %v5060
    %v5062 = vand.u32 %v298, 4294901760
    %5063 = vmatpush.msra.mxu0 %v5062
    %v5064 = vand.u32 %v297, 4294901760
    %5065 = vmatpush.msra.mxu0 %v5064
    %v5066 = vand.u32 %v296, 4294901760
    %5067 = vmatpush.msra.mxu0 %v5066
    %v5068 = vand.u32 %v295, 4294901760
    %5069 = vmatpush.msra.mxu0 %v5068
    %v5070 = vand.u32 %v294, 4294901760
    %5071 = vmatpush.msra.mxu0 %v5070
    %v5072 = vand.u32 %v293, 4294901760
    %5073 = vmatpush.msra.mxu0 %v5072
    %v5074 = vand.u32 %v292, 4294901760
    %5075 = vmatpush.msra.mxu0 %v5074
    %v5076 = vand.u32 %v291, 4294901760
    %5077 = vmatpush.msra.mxu0 %v5076
    %v5078 = vand.u32 %v290, 4294901760
    %5079 = vmatpush.msra.mxu0 %v5078
    %v5080 = vand.u32 %v289, 4294901760
    %5081 = vmatpush.msra.mxu0 %v5080
    %v5082 = vand.u32 %v4512, 4294901760
    %v5083 = vsub.f32 %v4512, %v5082
    %v5084 = vand.u32 %v5083, 4294901760
    %5085 = vmatmul.f32.gmra.mxu0 %v5084
    %v5086 = vpop.f32.mrf.mxu0
    %v5087 = vadd.f32 %v5048, %v5086
    %5088 = vdwg.mxu0
    %v5089 = vand.u32 %v304, 4294901760
    %v5090 = vsub.f32 %v304, %v5089
    %v5091 = vand.u32 %v5090, 4294901760
    %5092 = vmatpush.msra.mxu0 %v5091
    %v5093 = vand.u32 %v303, 4294901760
    %v5094 = vsub.f32 %v303, %v5093
    %v5095 = vand.u32 %v5094, 4294901760
    %5096 = vmatpush.msra.mxu0 %v5095
    %v5097 = vand.u32 %v302, 4294901760
    %v5098 = vsub.f32 %v302, %v5097
    %v5099 = vand.u32 %v5098, 4294901760
    %5100 = vmatpush.msra.mxu0 %v5099
    %v5101 = vand.u32 %v301, 4294901760
    %v5102 = vsub.f32 %v301, %v5101
    %v5103 = vand.u32 %v5102, 4294901760
    %5104 = vmatpush.msra.mxu0 %v5103
    %v5105 = vand.u32 %v300, 4294901760
    %v5106 = vsub.f32 %v300, %v5105
    %v5107 = vand.u32 %v5106, 4294901760
    %5108 = vmatpush.msra.mxu0 %v5107
    %v5109 = vand.u32 %v299, 4294901760
    %v5110 = vsub.f32 %v299, %v5109
    %v5111 = vand.u32 %v5110, 4294901760
    %5112 = vmatpush.msra.mxu0 %v5111
    %v5113 = vand.u32 %v298, 4294901760
    %v5114 = vsub.f32 %v298, %v5113
    %v5115 = vand.u32 %v5114, 4294901760
    %5116 = vmatpush.msra.mxu0 %v5115
    %v5117 = vand.u32 %v297, 4294901760
    %v5118 = vsub.f32 %v297, %v5117
    %v5119 = vand.u32 %v5118, 4294901760
    %5120 = vmatpush.msra.mxu0 %v5119
    %v5121 = vand.u32 %v296, 4294901760
    %v5122 = vsub.f32 %v296, %v5121
    %v5123 = vand.u32 %v5122, 4294901760
    %5124 = vmatpush.msra.mxu0 %v5123
    %v5125 = vand.u32 %v295, 4294901760
    %v5126 = vsub.f32 %v295, %v5125
    %v5127 = vand.u32 %v5126, 4294901760
    %5128 = vmatpush.msra.mxu0 %v5127
    %v5129 = vand.u32 %v294, 4294901760
    %v5130 = vsub.f32 %v294, %v5129
    %v5131 = vand.u32 %v5130, 4294901760
    %5132 = vmatpush.msra.mxu0 %v5131
    %v5133 = vand.u32 %v293, 4294901760
    %v5134 = vsub.f32 %v293, %v5133
    %v5135 = vand.u32 %v5134, 4294901760
    %5136 = vmatpush.msra.mxu0 %v5135
    %v5137 = vand.u32 %v292, 4294901760
    %v5138 = vsub.f32 %v292, %v5137
    %v5139 = vand.u32 %v5138, 4294901760
    %5140 = vmatpush.msra.mxu0 %v5139
    %v5141 = vand.u32 %v291, 4294901760
    %v5142 = vsub.f32 %v291, %v5141
    %v5143 = vand.u32 %v5142, 4294901760
    %5144 = vmatpush.msra.mxu0 %v5143
    %v5145 = vand.u32 %v290, 4294901760
    %v5146 = vsub.f32 %v290, %v5145
    %v5147 = vand.u32 %v5146, 4294901760
    %5148 = vmatpush.msra.mxu0 %v5147
    %v5149 = vand.u32 %v289, 4294901760
    %v5150 = vsub.f32 %v289, %v5149
    %v5151 = vand.u32 %v5150, 4294901760
    %5152 = vmatpush.msra.mxu0 %v5151
    %v5153 = vand.u32 %v4512, 4294901760
    %5154 = vmatmul.f32.gmra.mxu0 %v5153
    %v5155 = vpop.f32.mrf.mxu0
    %v5156 = vadd.f32 %v5087, %v5155
    %5157 = vdwg.mxu0
    %v5158 = vand.u32 %v304, 4294901760
    %5159 = vmatpush.msra.mxu0 %v5158
    %v5160 = vand.u32 %v303, 4294901760
    %5161 = vmatpush.msra.mxu0 %v5160
    %v5162 = vand.u32 %v302, 4294901760
    %5163 = vmatpush.msra.mxu0 %v5162
    %v5164 = vand.u32 %v301, 4294901760
    %5165 = vmatpush.msra.mxu0 %v5164
    %v5166 = vand.u32 %v300, 4294901760
    %5167 = vmatpush.msra.mxu0 %v5166
    %v5168 = vand.u32 %v299, 4294901760
    %5169 = vmatpush.msra.mxu0 %v5168
    %v5170 = vand.u32 %v298, 4294901760
    %5171 = vmatpush.msra.mxu0 %v5170
    %v5172 = vand.u32 %v297, 4294901760
    %5173 = vmatpush.msra.mxu0 %v5172
    %v5174 = vand.u32 %v296, 4294901760
    %5175 = vmatpush.msra.mxu0 %v5174
    %v5176 = vand.u32 %v295, 4294901760
    %5177 = vmatpush.msra.mxu0 %v5176
    %v5178 = vand.u32 %v294, 4294901760
    %5179 = vmatpush.msra.mxu0 %v5178
    %v5180 = vand.u32 %v293, 4294901760
    %5181 = vmatpush.msra.mxu0 %v5180
    %v5182 = vand.u32 %v292, 4294901760
    %5183 = vmatpush.msra.mxu0 %v5182
    %v5184 = vand.u32 %v291, 4294901760
    %5185 = vmatpush.msra.mxu0 %v5184
    %v5186 = vand.u32 %v290, 4294901760
    %5187 = vmatpush.msra.mxu0 %v5186
    %v5188 = vand.u32 %v289, 4294901760
    %5189 = vmatpush.msra.mxu0 %v5188
    %v5190 = vand.u32 %v4512, 4294901760
    %5191 = vmatmul.f32.gmra.mxu0 %v5190
    %v5192 = vpop.f32.mrf.mxu0
    %v5193 = vadd.f32 %v5156, %v5192
    %5194 = vdwg.mxu0
    %5195 = vst [vmem:[#allocation20] sm:$0xff] %v5193
    // Predicated region
    $region110: #{tpu_custom_call.1} parent=1 // pred_check
      _
    $region111: #{tpu_custom_call.1} parent=1 // pred_check_branch
      %5197 = sbr.rel (0) target = $region113
    $region112: #{tpu_custom_call.1} parent=1 // pred_region
      %5199 = vsyncadd [#allocation4], 0
      %s5201 = sshll.u32 [#allocation19], 4
      %s5202 = int_to_ptr.vmem [resolvable:$true] %s5201
      %s5203 = sshll.u32 %s17, 4
      %s5204 = int_to_ptr.hbm [resolvable:$true] %s5203
      %5206 = dma.vmem_to_hbm [thread:$0]  %s5202, 128, %s5204, [#allocation4]
    $region113: #{tpu_custom_call.1} parent=1 // pred_fallthru
      _
    // Predicated region
    $region114: #{tpu_custom_call.1} parent=1 // pred_check
      _
    $region115: #{tpu_custom_call.1} parent=1 // pred_check_branch
      %5208 = sbr.rel (0) target = $region117
    $region116: #{tpu_custom_call.1} parent=1 // pred_region
      %5210 = vsyncadd [#allocation21], 0
      %s5212 = sshll.u32 [#allocation20], 4
      %s5213 = int_to_ptr.vmem [resolvable:$true] %s5212
      %s5214 = sshll.u32 %s18, 4
      %s5215 = int_to_ptr.hbm [resolvable:$true] %s5214
      %5217 = dma.vmem_to_hbm [thread:$0]  %s5213, 128, %s5215, [#allocation21]
    $region117: #{tpu_custom_call.1} parent=1 // pred_fallthru
      _
    // Predicated region
    $region118: #{tpu_custom_call.1} parent=1 // pred_check
      _
    $region119: #{tpu_custom_call.1} parent=1 // pred_check_branch
      %5219 = sbr.rel (0) target = $region121
    $region120: #{tpu_custom_call.1} parent=1 // pred_region
      %5221 = dma.done [#allocation4], 128
    $region121: #{tpu_custom_call.1} parent=1 // pred_fallthru
      _
    // Predicated region
    $region122: #{tpu_custom_call.1} parent=1 // pred_check
      _
    $region123: #{tpu_custom_call.1} parent=1 // pred_check_branch
      %5223 = sbr.rel (0) target = $region125
    $region124: #{tpu_custom_call.1} parent=1 // pred_region
      %5225 = dma.done [#allocation21], 128
    $region125: #{tpu_custom_call.1} parent=1 // pred_fallthru
      _
    %5226 = vsyncpa [#allocation3], 1
    %5227 = vsyncpa [#allocation6], 1
    %5228 = vsyncpa [#allocation9], 1
    %5229 = vsyncpa [#allocation12], 1
    %5230 = vsyncpa [#allocation15], 1
    %5231 = vsyncpa [#allocation18], 1
    %5232 = vsyncpa [#allocation4], 1
    %5233 = vsyncpa [#allocation21], 1

</llo_original>
